<compile_context>
chip_gen: v7x
topology: tpu7x:2x2x1
jax: 0.10.0
libtpu: 0.0.40
codegen_flags: <defaults>
</compile_context>

<pallas_src>
import math

import jax
import jax.numpy as jnp
from jax import lax
from jax.experimental import pallas as pl
from jax.experimental.pallas import tpu as pltpu


def _round_up(x, m):
    return (x + m - 1) // m * m


def make_lablock_kernel(n_inputs, Bt, H, W, Cin, Cout, G, Cp1, Cp2, eps=1e-5):
    HW = H * W
    gs = Cout // G
    Cpmax = max(Cp1, Cp2)
    halo = W + 1                                    # flat (1 row + 1 col) halo
    PW = HW + 2 * halo
    inv_sqrt2 = 1.0 / math.sqrt(2.0)
    inv_n = 1.0 / float(gs * HW)
    offs = [(ky - 1) * W + (kx - 1) + halo          # lane offset of tap k in pad_ref
            for ky in range(3) for kx in range(3)]
    unmasked = (1, 4, 7)                            # dx == 0 taps: halo covers rows

    def kernel(*args):
        x_refs = args[:n_inputs]
        (mask_ref, w1_ref, b1_ref, g1_ref, be1_ref,
         w2_ref, b2_ref, g2_ref, be2_ref, p_ref) = args[n_inputs:n_inputs + 10]
        o_ref = args[n_inputs + 10]
        pad_ref, slab1_ref, slab2_ref, yc_ref = args[n_inputs + 11:]

        # ---- per-grid-step constants (hoisted out of all per-sample loops) --
        masks = mask_ref[...]                        # (9, HW)
        mask_rows = [masks[k:k + 1, :] for k in range(9)]
        w1m, w2m = w1_ref[...], w2_ref[...]
        b1, ga1, be1 = b1_ref[...], g1_ref[...], be1_ref[...]
        b2, ga2, be2 = b2_ref[...], g2_ref[...], be2_ref[...]
        P = p_ref[...]                               # (Cout, Cout) group projection

        # ---- zero only the flat halo borders (interiors are overwritten) ----
        zh = jnp.zeros((Cpmax, halo), jnp.float32)
        pad_ref[:, 0:halo] = zh
        pad_ref[:, halo + HW:PW] = zh

        def fill_slab(x, C, Cp, slab_ref, col):
            # x: (C, HW) value for one sample.  Writes 9 lane-shifted windows
            # as sublane-aligned Cp-row blocks into slab columns [col, col+HW).
            pad_ref[0:C, halo:halo + HW] = x
            for k in range(9):
                t = pad_ref[0:Cp, offs[k]:offs[k] + HW]
                if k not in unmasked:                # only dx != 0 taps need masking
                    t = t * mask_rows[k]
                slab_ref[k * Cp:(k + 1) * Cp, col:col + HW] = t

        def group_norm(y, gamma, beta):
            # Reduce-then-project: lane reductions first (XLU), then a tiny
            # (Cout,Cout)@(Cout,1) projection for the per-group statistics.
            s = jnp.sum(y, axis=1, keepdims=True)                    # (Cout, 1)
            sq = jnp.sum(y * y, axis=1, keepdims=True)               # (Cout, 1)
            mean = jnp.dot(P, s, preferred_element_type=jnp.float32) * inv_n
            msq = jnp.dot(P, sq, preferred_element_type=jnp.float32) * inv_n
            var = msq - mean * mean
            inv = lax.rsqrt(var + eps)
            return (y - mean) * (inv * gamma) + beta

        # ---- phase 1: GELU(sum(inputs)) for all Bt samples, fill conv1 slab -
        if Cp1 > Cin:                                # zero the padded channel rows
            pad_ref[Cin:Cp1, :] = jnp.zeros((Cp1 - Cin, PW), jnp.float32)
        xsum = x_refs[0][...].astype(jnp.float32)
        for r in x_refs[1:]:
            xsum = xsum + r[...].astype(jnp.float32)
        g_all = 0.5 * xsum * (1.0 + lax.erf(xsum * inv_sqrt2))       # exact GELU
        for b in range(Bt):
            fill_slab(g_all[b], Cin, Cp1, slab1_ref, b * HW)

        # ---- conv1 (W_1): single batched im2col matmul over all Bt samples --
        yc_ref[...] = jnp.dot(w1m, slab1_ref[...],
                              preferred_element_type=jnp.float32) + b1

        # ---- phase 2: per-sample GroupNorm, fill conv2 slab ------------------
        if Cp2 > Cout:
            pad_ref[Cout:Cp2, :] = jnp.zeros((Cp2 - Cout, PW), jnp.float32)
        for b in range(Bt):
            y1 = group_norm(yc_ref[:, b * HW:(b + 1) * HW], ga1, be1)
            fill_slab(y1, Cout, Cp2, slab2_ref, b * HW)

        # ---- conv2 (psi): single batched im2col matmul -----------------------
        yc_ref[...] = jnp.dot(w2m, slab2_ref[...],
                              preferred_element_type=jnp.float32) + b2

        # ---- phase 3: per-sample GroupNorm + sigmoid, lane-dense store -------
        for b in range(Bt):
            z = group_norm(yc_ref[:, b * HW:(b + 1) * HW], ga2, be2)
            o_ref[b] = jax.nn.sigmoid(z).astype(o_ref.dtype)

    return kernel


def _pick_batch_tile(N, per_sample_bytes, fixed_bytes, budget_bytes, cap, min_steps):
    """Largest batch tile fitting the VMEM budget, preferring >= min_steps grid steps."""
    feasible = [b for b in range(1, min(N, cap) + 1)
                if N % b == 0 and fixed_bytes + b * per_sample_bytes <= budget_bytes]
    if not feasible:
        return 1
    preferred = [b for b in feasible if (N // b) >= min_steps]
    return max(preferred) if preferred else max(feasible)


def lablock_forward(inputs_nchw, params):
    """inputs_nchw: list of (N, Cin, H, W) arrays. Returns psi: (N, Cout, H, W)."""
    w1, b1, g1, be1, w2, b2, g2, be2 = params
    n_inputs = len(inputs_nchw)
    N, Cin, H, W = inputs_nchw[0].shape
    Cout = w1.shape[-1]
    G = Cout // 4                      # GroupNorm(output_channels // 4, output_channels)
    gs = Cout // G
    HW = H * W
    halo = W + 1
    Cp1 = _round_up(Cin, 8)            # sublane-aligned tap blocks (unmasked slab stores)
    Cp2 = _round_up(Cout, 8)
    Cpmax = max(Cp1, Cp2)

    # NCHW already has H*W on the minor (lane) axis: flatten only (free reshape).
    xs = [x.reshape(N, Cin, HW) for x in inputs_nchw]

    # Conv weights in single-matmul (im2col) form, channel-padded to Cp per tap.
    w1t = jnp.transpose(w1.reshape(9, Cin, Cout), (2, 0, 1)).astype(jnp.float32)
    w1m = jnp.pad(w1t, ((0, 0), (0, 0), (0, Cp1 - Cin))).reshape(Cout, 9 * Cp1)
    w2t = jnp.transpose(w2.reshape(9, Cout, Cout), (2, 0, 1)).astype(jnp.float32)
    w2m = jnp.pad(w2t, ((0, 0), (0, 0), (0, Cp2 - Cout))).reshape(Cout, 9 * Cp2)
    b1c, g1c, be1c = (v.reshape(Cout, 1).astype(jnp.float32) for v in (b1, g1, be1))
    b2c, g2c, be2c = (v.reshape(Cout, 1).astype(jnp.float32) for v in (b2, g2, be2))

    # Group-membership projection (used only on (Cout,1) reduced statistics).
    cidx = jnp.arange(Cout)
    P = (cidx[:, None] // gs == cidx[None, :] // gs).astype(jnp.float32)

    # Per-tap validity masks over the flattened H*W axis (zero out-of-image taps).
    hh = jnp.arange(H)[:, None]
    ww = jnp.arange(W)[None, :]
    rows = []
    for ky in range(3):
        for kx in range(3):
            dy, dx = ky - 1, kx - 1
            valid = ((hh + dy >= 0) & (hh + dy < H) &
                     (ww + dx >= 0) & (ww + dx < W))
            rows.append(valid.reshape(1, HW))
    mask = jnp.concatenate(rows, axis=0).astype(jnp.float32)          # (9, HW)

    # ---- batch-tile / VMEM budgeting (generation-aware) ----------------------
    kind = jax.devices()[0].device_kind.lower()
    is_v7 = "v7" in kind
    budget_bytes = (20 << 20) if is_v7 else (48 << 20)   # leave headroom on v7x
    vmem_limit = (32 << 20) if is_v7 else (64 << 20)
    min_steps = 2 if is_v7 else 1                        # 2 TCs on v7x, 1 otherwise

    B = 4
    fixed_bytes = B * (Cpmax * (HW + 2 * halo)
                       + 2 * (9 * HW + Cout * (9 * Cp1 + 9 * Cp2 + Cout + 8)))
    per_sample_bytes = B * HW * (2 * n_inputs * Cin      # input blocks (double-buffered)
                                 + 2 * Cout              # output block (double-buffered)
                                 + 9 * Cp1 + 9 * Cp2     # im2col slabs
                                 + Cout)                 # conv-output scratch
    Bt = _pick_batch_tile(N, per_sample_bytes, fixed_bytes, budget_bytes,
                          cap=32, min_steps=min_steps)

    kernel = make_lablock_kernel(n_inputs, Bt, H, W, Cin, Cout, G, Cp1, Cp2)

    x_spec = pl.BlockSpec((Bt, Cin, HW), lambda i: (i, 0, 0))

    def bcast(shape):
        return pl.BlockSpec(shape, lambda i: (0,) * len(shape))

    out = pl.pallas_call(
        kernel,
        out_shape=jax.ShapeDtypeStruct((N, Cout, HW), jnp.float32),
        grid=(N // Bt,),
        in_specs=[x_spec] * n_inputs + [
            bcast((9, HW)),                                         # tap masks
            bcast((Cout, 9 * Cp1)), bcast((Cout, 1)),               # w1, b1
            bcast((Cout, 1)), bcast((Cout, 1)),                     # gamma1, beta1
            bcast((Cout, 9 * Cp2)), bcast((Cout, 1)),               # w2, b2
            bcast((Cout, 1)), bcast((Cout, 1)),                     # gamma2, beta2
            bcast((Cout, Cout)),                                    # group projection
        ],
        out_specs=pl.BlockSpec((Bt, Cout, HW), lambda i: (i, 0, 0)),
        scratch_shapes=[
            pltpu.VMEM((Cpmax, HW + 2 * halo), jnp.float32),        # flat zero-halo buf
            pltpu.VMEM((9 * Cp1, Bt * HW), jnp.float32),            # im2col slab conv1
            pltpu.VMEM((9 * Cp2, Bt * HW), jnp.float32),            # im2col slab conv2
            pltpu.VMEM((Cout, Bt * HW), jnp.float32),               # conv output buffer
        ],
        compiler_params=pltpu.CompilerParams(
            dimension_semantics=("parallel",),
            vmem_limit_bytes=vmem_limit,
        ),
    )(*xs, mask, w1m, b1c, g1c, be1c, w2m, b2c, g2c, be2c, P)

    return out.reshape(N, Cout, H, W)


# ------------------------ plain-JAX reference (for checking) ------------------
def _gn_ref(x, G, gamma, beta, eps=1e-5):
    N, C, H, W = x.shape
    xr = x.reshape(N, G, -1)
    mean = xr.mean(axis=2, keepdims=True)
    var = xr.var(axis=2, keepdims=True)
    xn = ((xr - mean) / jnp.sqrt(var + eps)).reshape(N, C, H, W)
    return xn * gamma[None, :, None, None] + beta[None, :, None, None]


def ref_lablock(inputs_nchw, params):
    w1, b1, g1, be1, w2, b2, g2, be2 = params
    Cin = w1.shape[1]
    Cout = w1.shape[-1]
    G = Cout // 4
    s = inputs_nchw[0]
    for x in inputs_nchw[1:]:
        s = s + x
    s = 0.5 * s * (1.0 + lax.erf(s / math.sqrt(2.0)))
    w1_oihw = jnp.transpose(w1.reshape(3, 3, Cin, Cout), (3, 2, 0, 1))
    y = lax.conv_general_dilated(s, w1_oihw, (1, 1), ((1, 1), (1, 1)),
                                 dimension_numbers=("NCHW", "OIHW", "NCHW"))
    y = _gn_ref(y + b1[None, :, None, None], G, g1, be1)
    w2_oihw = jnp.transpose(w2.reshape(3, 3, Cout, Cout), (3, 2, 0, 1))
    z = lax.conv_general_dilated(y, w2_oihw, (1, 1), ((1, 1), (1, 1)),
                                 dimension_numbers=("NCHW", "OIHW", "NCHW"))
    z = _gn_ref(z + b2[None, :, None, None], G, g2, be2)
    return jax.nn.sigmoid(z)


if __name__ == "__main__":
    key = jax.random.PRNGKey(0)
    N, Cin, Cout, H, W = 2, 4, 8, 16, 16
    ks = jax.random.split(key, 6)

    # The module's forward sums a list of inputs; use two here.
    x1 = jax.random.normal(ks[0], (N, Cin, H, W), jnp.float32)
    x2 = jax.random.normal(ks[1], (N, Cin, H, W), jnp.float32)

    # Deterministic synthetic parameters (GroupNorm affine uses PyTorch defaults).
    w1 = 0.1 * jax.random.normal(ks[2], (9, Cin, Cout), jnp.float32)   # 3x3 conv, HWIO flat
    b1 = 0.1 * jax.random.normal(ks[3], (Cout,), jnp.float32)
    g1 = jnp.ones((Cout,), jnp.float32)
    be1 = jnp.zeros((Cout,), jnp.float32)
    w2 = 0.1 * jax.random.normal(ks[4], (9, Cout, Cout), jnp.float32)
    b2 = 0.1 * jax.random.normal(ks[5], (Cout,), jnp.float32)
    g2 = jnp.ones((Cout,), jnp.float32)
    be2 = jnp.zeros((Cout,), jnp.float32)
    params = (w1, b1, g1, be1, w2, b2, g2, be2)

    out = lablock_forward([x1, x2], params)
    out = jax.block_until_ready(out)

    ref = ref_lablock([x1, x2], params)
    max_err = float(jnp.max(jnp.abs(out - ref)))
    assert jnp.allclose(out, ref, atol=1e-4, rtol=1e-4), f"max_err={max_err}"

    print("KERNEL_OK")
</pallas_src>

<mosaic_0001>
module attributes {stable_mosaic.version = 11 : i64} {
  func.func @kernel(%arg0: i32, %arg1: memref<2x4x256xf32, #tpu.memory_space<vmem>>, %arg2: memref<2x4x256xf32, #tpu.memory_space<vmem>>, %arg3: memref<9x256xf32, #tpu.memory_space<vmem>>, %arg4: memref<8x72xf32, #tpu.memory_space<vmem>>, %arg5: memref<8x1xf32, #tpu.memory_space<vmem>>, %arg6: memref<8x1xf32, #tpu.memory_space<vmem>>, %arg7: memref<8x1xf32, #tpu.memory_space<vmem>>, %arg8: memref<8x72xf32, #tpu.memory_space<vmem>>, %arg9: memref<8x1xf32, #tpu.memory_space<vmem>>, %arg10: memref<8x1xf32, #tpu.memory_space<vmem>>, %arg11: memref<8x1xf32, #tpu.memory_space<vmem>>, %arg12: memref<8x8xf32, #tpu.memory_space<vmem>>, %arg13: memref<2x8x256xf32, #tpu.memory_space<vmem>>, %arg14: memref<8x290xf32, #tpu.memory_space<vmem>>, %arg15: memref<72x512xf32, #tpu.memory_space<vmem>>, %arg16: memref<72x512xf32, #tpu.memory_space<vmem>>, %arg17: memref<8x512xf32, #tpu.memory_space<vmem>>) attributes {dimension_semantics = [#tpu.dimension_semantics<parallel>], iteration_bounds = array<i64: 1>, scalar_prefetch = 0 : i64, scratch_operands = 4 : i64, tpu.core_type = #tpu.core_type<tc>, window_params = [{transform_indices = @transform_0, window_bounds = array<i64: 2, 4, 256>}, {transform_indices = @transform_1, window_bounds = array<i64: 2, 4, 256>}, {pipeline_mode = #tpu.pipeline_mode<synchronous>, transform_indices = @transform_2, window_bounds = array<i64: 9, 256>}, {pipeline_mode = #tpu.pipeline_mode<synchronous>, transform_indices = @transform_3, window_bounds = array<i64: 8, 72>}, {pipeline_mode = #tpu.pipeline_mode<synchronous>, transform_indices = @transform_4, window_bounds = array<i64: 8, 1>}, {pipeline_mode = #tpu.pipeline_mode<synchronous>, transform_indices = @transform_5, window_bounds = array<i64: 8, 1>}, {pipeline_mode = #tpu.pipeline_mode<synchronous>, transform_indices = @transform_6, window_bounds = array<i64: 8, 1>}, {pipeline_mode = #tpu.pipeline_mode<synchronous>, transform_indices = @transform_7, window_bounds = array<i64: 8, 72>}, {pipeline_mode = #tpu.pipeline_mode<synchronous>, transform_indices = @transform_8, window_bounds = array<i64: 8, 1>}, {pipeline_mode = #tpu.pipeline_mode<synchronous>, transform_indices = @transform_9, window_bounds = array<i64: 8, 1>}, {pipeline_mode = #tpu.pipeline_mode<synchronous>, transform_indices = @transform_10, window_bounds = array<i64: 8, 1>}, {pipeline_mode = #tpu.pipeline_mode<synchronous>, transform_indices = @transform_11, window_bounds = array<i64: 8, 8>}, {transform_indices = @transform_12, window_bounds = array<i64: 2, 8, 256>}]} {
    %c0 = arith.constant 0 : index
    %c0_0 = arith.constant 0 : index
    %0 = vector.load %arg3[%c0, %c0_0] : memref<9x256xf32, #tpu.memory_space<vmem>>, vector<9x256xf32>
    %1 = vector.extract_strided_slice %0 {offsets = [0, 0], sizes = [1, 256], strides = [1, 1]} : vector<9x256xf32> to vector<1x256xf32>
    %2 = vector.extract_strided_slice %0 {offsets = [2, 0], sizes = [1, 256], strides = [1, 1]} : vector<9x256xf32> to vector<1x256xf32>
    %3 = vector.extract_strided_slice %0 {offsets = [3, 0], sizes = [1, 256], strides = [1, 1]} : vector<9x256xf32> to vector<1x256xf32>
    %4 = vector.extract_strided_slice %0 {offsets = [5, 0], sizes = [1, 256], strides = [1, 1]} : vector<9x256xf32> to vector<1x256xf32>
    %5 = vector.extract_strided_slice %0 {offsets = [6, 0], sizes = [1, 256], strides = [1, 1]} : vector<9x256xf32> to vector<1x256xf32>
    %6 = vector.extract_strided_slice %0 {offsets = [8, 0], sizes = [1, 256], strides = [1, 1]} : vector<9x256xf32> to vector<1x256xf32>
    %c0_1 = arith.constant 0 : index
    %c0_2 = arith.constant 0 : index
    %7 = vector.load %arg4[%c0_1, %c0_2] : memref<8x72xf32, #tpu.memory_space<vmem>>, vector<8x72xf32>
    %c0_3 = arith.constant 0 : index
    %c0_4 = arith.constant 0 : index
    %8 = vector.load %arg8[%c0_3, %c0_4] : memref<8x72xf32, #tpu.memory_space<vmem>>, vector<8x72xf32>
    %c0_5 = arith.constant 0 : index
    %c0_6 = arith.constant 0 : index
    %9 = vector.load %arg5[%c0_5, %c0_6] : memref<8x1xf32, #tpu.memory_space<vmem>>, vector<8x1xf32>
    %c0_7 = arith.constant 0 : index
    %c0_8 = arith.constant 0 : index
    %10 = vector.load %arg6[%c0_7, %c0_8] : memref<8x1xf32, #tpu.memory_space<vmem>>, vector<8x1xf32>
    %c0_9 = arith.constant 0 : index
    %c0_10 = arith.constant 0 : index
    %11 = vector.load %arg7[%c0_9, %c0_10] : memref<8x1xf32, #tpu.memory_space<vmem>>, vector<8x1xf32>
    %c0_11 = arith.constant 0 : index
    %c0_12 = arith.constant 0 : index
    %12 = vector.load %arg9[%c0_11, %c0_12] : memref<8x1xf32, #tpu.memory_space<vmem>>, vector<8x1xf32>
    %c0_13 = arith.constant 0 : index
    %c0_14 = arith.constant 0 : index
    %13 = vector.load %arg10[%c0_13, %c0_14] : memref<8x1xf32, #tpu.memory_space<vmem>>, vector<8x1xf32>
    %c0_15 = arith.constant 0 : index
    %c0_16 = arith.constant 0 : index
    %14 = vector.load %arg11[%c0_15, %c0_16] : memref<8x1xf32, #tpu.memory_space<vmem>>, vector<8x1xf32>
    %c0_17 = arith.constant 0 : index
    %c0_18 = arith.constant 0 : index
    %15 = vector.load %arg12[%c0_17, %c0_18] : memref<8x8xf32, #tpu.memory_space<vmem>>, vector<8x8xf32>
    %cst = arith.constant 0.000000e+00 : f32
    %16 = vector.broadcast %cst : f32 to vector<8x17xf32>
    %c0_19 = arith.constant 0 : index
    %c0_20 = arith.constant 0 : index
    %17 = vector.load %arg14[%c0_19, %c0_20] : memref<8x290xf32, #tpu.memory_space<vmem>>, vector<8x17xf32>
    tpu.vector_store %arg14[%c0_19, %c0_20], %16 {strides = array<i32>} : memref<8x290xf32, #tpu.memory_space<vmem>>, vector<8x17xf32>,
    %c0_21 = arith.constant 0 : index
    %c273 = arith.constant 273 : index
    %18 = vector.load %arg14[%c0_21, %c273] : memref<8x290xf32, #tpu.memory_space<vmem>>, vector<8x17xf32>
    tpu.vector_store %arg14[%c0_21, %c273], %16 {strides = array<i32>} : memref<8x290xf32, #tpu.memory_space<vmem>>, vector<8x17xf32>,
    %cst_22 = arith.constant 0.000000e+00 : f32
    %19 = vector.broadcast %cst_22 : f32 to vector<4x290xf32>
    %c4 = arith.constant 4 : index
    %c0_23 = arith.constant 0 : index
    %20 = vector.load %arg14[%c4, %c0_23] : memref<8x290xf32, #tpu.memory_space<vmem>>, vector<4x290xf32>
    tpu.vector_store %arg14[%c4, %c0_23], %19 {strides = array<i32>} : memref<8x290xf32, #tpu.memory_space<vmem>>, vector<4x290xf32>,
    %c0_24 = arith.constant 0 : index
    %c0_25 = arith.constant 0 : index
    %c0_26 = arith.constant 0 : index
    %21 = vector.load %arg1[%c0_24, %c0_25, %c0_26] : memref<2x4x256xf32, #tpu.memory_space<vmem>>, vector<2x4x256xf32>
    %c0_27 = arith.constant 0 : index
    %c0_28 = arith.constant 0 : index
    %c0_29 = arith.constant 0 : index
    %22 = vector.load %arg2[%c0_27, %c0_28, %c0_29] : memref<2x4x256xf32, #tpu.memory_space<vmem>>, vector<2x4x256xf32>
    %23 = arith.addf %21, %22 : vector<2x4x256xf32>
    %cst_30 = arith.constant 5.000000e-01 : f32
    %24 = vector.broadcast %cst_30 : f32 to vector<2x4x256xf32>
    %25 = arith.mulf %24, %23 : vector<2x4x256xf32>
    %cst_31 = arith.constant 0.707106769 : f32
    %26 = vector.broadcast %cst_31 : f32 to vector<2x4x256xf32>
    %27 = arith.mulf %23, %26 : vector<2x4x256xf32>
    %28 = math.erf %27 : vector<2x4x256xf32>
    %cst_32 = arith.constant 1.000000e+00 : f32
    %29 = vector.broadcast %cst_32 : f32 to vector<2x4x256xf32>
    %30 = arith.addf %29, %28 : vector<2x4x256xf32>
    %31 = arith.mulf %25, %30 : vector<2x4x256xf32>
    %32 = vector.extract_strided_slice %31 {offsets = [0, 0, 0], sizes = [1, 4, 256], strides = [1, 1, 1]} : vector<2x4x256xf32> to vector<1x4x256xf32>
    %33 = vector.shape_cast %32 : vector<1x4x256xf32> to vector<4x256xf32>
    %c0_33 = arith.constant 0 : index
    %c17 = arith.constant 17 : index
    %34 = vector.load %arg14[%c0_33, %c17] : memref<8x290xf32, #tpu.memory_space<vmem>>, vector<4x256xf32>
    tpu.vector_store %arg14[%c0_33, %c17], %33 {strides = array<i32>} : memref<8x290xf32, #tpu.memory_space<vmem>>, vector<4x256xf32>,
    %c0_34 = arith.constant 0 : index
    %c0_35 = arith.constant 0 : index
    %35 = vector.load %arg14[%c0_34, %c0_35] : memref<8x290xf32, #tpu.memory_space<vmem>>, vector<8x256xf32>
    %36 = vector.broadcast %1 : vector<1x256xf32> to vector<8x256xf32>
    %37 = arith.mulf %35, %36 : vector<8x256xf32>
    %c0_36 = arith.constant 0 : index
    %c0_37 = arith.constant 0 : index
    %38 = vector.load %arg15[%c0_36, %c0_37] : memref<72x512xf32, #tpu.memory_space<vmem>>, vector<8x256xf32>
    tpu.vector_store %arg15[%c0_36, %c0_37], %37 {strides = array<i32>} : memref<72x512xf32, #tpu.memory_space<vmem>>, vector<8x256xf32>,
    %c0_38 = arith.constant 0 : index
    %c1 = arith.constant 1 : index
    %39 = vector.load %arg14[%c0_38, %c1] : memref<8x290xf32, #tpu.memory_space<vmem>>, vector<8x256xf32>
    %c8 = arith.constant 8 : index
    %c0_39 = arith.constant 0 : index
    %40 = vector.load %arg15[%c8, %c0_39] : memref<72x512xf32, #tpu.memory_space<vmem>>, vector<8x256xf32>
    tpu.vector_store %arg15[%c8, %c0_39], %39 {strides = array<i32>} : memref<72x512xf32, #tpu.memory_space<vmem>>, vector<8x256xf32>,
    %c0_40 = arith.constant 0 : index
    %c2 = arith.constant 2 : index
    %41 = vector.load %arg14[%c0_40, %c2] : memref<8x290xf32, #tpu.memory_space<vmem>>, vector<8x256xf32>
    %42 = vector.broadcast %2 : vector<1x256xf32> to vector<8x256xf32>
    %43 = arith.mulf %41, %42 : vector<8x256xf32>
    %c16 = arith.constant 16 : index
    %c0_41 = arith.constant 0 : index
    %44 = vector.load %arg15[%c16, %c0_41] : memref<72x512xf32, #tpu.memory_space<vmem>>, vector<8x256xf32>
    tpu.vector_store %arg15[%c16, %c0_41], %43 {strides = array<i32>} : memref<72x512xf32, #tpu.memory_space<vmem>>, vector<8x256xf32>,
    %c0_42 = arith.constant 0 : index
    %c16_43 = arith.constant 16 : index
    %45 = vector.load %arg14[%c0_42, %c16_43] : memref<8x290xf32, #tpu.memory_space<vmem>>, vector<8x256xf32>
    %46 = vector.broadcast %3 : vector<1x256xf32> to vector<8x256xf32>
    %47 = arith.mulf %45, %46 : vector<8x256xf32>
    %c24 = arith.constant 24 : index
    %c0_44 = arith.constant 0 : index
    %48 = vector.load %arg15[%c24, %c0_44] : memref<72x512xf32, #tpu.memory_space<vmem>>, vector<8x256xf32>
    tpu.vector_store %arg15[%c24, %c0_44], %47 {strides = array<i32>} : memref<72x512xf32, #tpu.memory_space<vmem>>, vector<8x256xf32>,
    %c0_45 = arith.constant 0 : index
    %c17_46 = arith.constant 17 : index
    %49 = vector.load %arg14[%c0_45, %c17_46] : memref<8x290xf32, #tpu.memory_space<vmem>>, vector<8x256xf32>
    %c32 = arith.constant 32 : index
    %c0_47 = arith.constant 0 : index
    %50 = vector.load %arg15[%c32, %c0_47] : memref<72x512xf32, #tpu.memory_space<vmem>>, vector<8x256xf32>
    tpu.vector_store %arg15[%c32, %c0_47], %49 {strides = array<i32>} : memref<72x512xf32, #tpu.memory_space<vmem>>, vector<8x256xf32>,
    %c0_48 = arith.constant 0 : index
    %c18 = arith.constant 18 : index
    %51 = vector.load %arg14[%c0_48, %c18] : memref<8x290xf32, #tpu.memory_space<vmem>>, vector<8x256xf32>
    %52 = vector.broadcast %4 : vector<1x256xf32> to vector<8x256xf32>
    %53 = arith.mulf %51, %52 : vector<8x256xf32>
    %c40 = arith.constant 40 : index
    %c0_49 = arith.constant 0 : index
    %54 = vector.load %arg15[%c40, %c0_49] : memref<72x512xf32, #tpu.memory_space<vmem>>, vector<8x256xf32>
    tpu.vector_store %arg15[%c40, %c0_49], %53 {strides = array<i32>} : memref<72x512xf32, #tpu.memory_space<vmem>>, vector<8x256xf32>,
    %c0_50 = arith.constant 0 : index
    %c32_51 = arith.constant 32 : index
    %55 = vector.load %arg14[%c0_50, %c32_51] : memref<8x290xf32, #tpu.memory_space<vmem>>, vector<8x256xf32>
    %56 = vector.broadcast %5 : vector<1x256xf32> to vector<8x256xf32>
    %57 = arith.mulf %55, %56 : vector<8x256xf32>
    %c48 = arith.constant 48 : index
    %c0_52 = arith.constant 0 : index
    %58 = vector.load %arg15[%c48, %c0_52] : memref<72x512xf32, #tpu.memory_space<vmem>>, vector<8x256xf32>
    tpu.vector_store %arg15[%c48, %c0_52], %57 {strides = array<i32>} : memref<72x512xf32, #tpu.memory_space<vmem>>, vector<8x256xf32>,
    %c0_53 = arith.constant 0 : index
    %c33 = arith.constant 33 : index
    %59 = vector.load %arg14[%c0_53, %c33] : memref<8x290xf32, #tpu.memory_space<vmem>>, vector<8x256xf32>
    %c56 = arith.constant 56 : index
    %c0_54 = arith.constant 0 : index
    %60 = vector.load %arg15[%c56, %c0_54] : memref<72x512xf32, #tpu.memory_space<vmem>>, vector<8x256xf32>
    tpu.vector_store %arg15[%c56, %c0_54], %59 {strides = array<i32>} : memref<72x512xf32, #tpu.memory_space<vmem>>, vector<8x256xf32>,
    %c0_55 = arith.constant 0 : index
    %c34 = arith.constant 34 : index
    %61 = vector.load %arg14[%c0_55, %c34] : memref<8x290xf32, #tpu.memory_space<vmem>>, vector<8x256xf32>
    %62 = vector.broadcast %6 : vector<1x256xf32> to vector<8x256xf32>
    %63 = arith.mulf %61, %62 : vector<8x256xf32>
    %c64 = arith.constant 64 : index
    %c0_56 = arith.constant 0 : index
    %64 = vector.load %arg15[%c64, %c0_56] : memref<72x512xf32, #tpu.memory_space<vmem>>, vector<8x256xf32>
    tpu.vector_store %arg15[%c64, %c0_56], %63 {strides = array<i32>} : memref<72x512xf32, #tpu.memory_space<vmem>>, vector<8x256xf32>,
    %65 = vector.extract_strided_slice %31 {offsets = [1, 0, 0], sizes = [1, 4, 256], strides = [1, 1, 1]} : vector<2x4x256xf32> to vector<1x4x256xf32>
    %66 = vector.shape_cast %65 : vector<1x4x256xf32> to vector<4x256xf32>
    %c0_57 = arith.constant 0 : index
    %c17_58 = arith.constant 17 : index
    %67 = vector.load %arg14[%c0_57, %c17_58] : memref<8x290xf32, #tpu.memory_space<vmem>>, vector<4x256xf32>
    tpu.vector_store %arg14[%c0_57, %c17_58], %66 {strides = array<i32>} : memref<8x290xf32, #tpu.memory_space<vmem>>, vector<4x256xf32>,
    %c0_59 = arith.constant 0 : index
    %c0_60 = arith.constant 0 : index
    %68 = vector.load %arg14[%c0_59, %c0_60] : memref<8x290xf32, #tpu.memory_space<vmem>>, vector<8x256xf32>
    %69 = vector.broadcast %1 : vector<1x256xf32> to vector<8x256xf32>
    %70 = arith.mulf %68, %69 : vector<8x256xf32>
    %c0_61 = arith.constant 0 : index
    %c256 = arith.constant 256 : index
    %71 = vector.load %arg15[%c0_61, %c256] : memref<72x512xf32, #tpu.memory_space<vmem>>, vector<8x256xf32>
    tpu.vector_store %arg15[%c0_61, %c256], %70 {strides = array<i32>} : memref<72x512xf32, #tpu.memory_space<vmem>>, vector<8x256xf32>,
    %c0_62 = arith.constant 0 : index
    %c1_63 = arith.constant 1 : index
    %72 = vector.load %arg14[%c0_62, %c1_63] : memref<8x290xf32, #tpu.memory_space<vmem>>, vector<8x256xf32>
    %c8_64 = arith.constant 8 : index
    %c256_65 = arith.constant 256 : index
    %73 = vector.load %arg15[%c8_64, %c256_65] : memref<72x512xf32, #tpu.memory_space<vmem>>, vector<8x256xf32>
    tpu.vector_store %arg15[%c8_64, %c256_65], %72 {strides = array<i32>} : memref<72x512xf32, #tpu.memory_space<vmem>>, vector<8x256xf32>,
    %c0_66 = arith.constant 0 : index
    %c2_67 = arith.constant 2 : index
    %74 = vector.load %arg14[%c0_66, %c2_67] : memref<8x290xf32, #tpu.memory_space<vmem>>, vector<8x256xf32>
    %75 = vector.broadcast %2 : vector<1x256xf32> to vector<8x256xf32>
    %76 = arith.mulf %74, %75 : vector<8x256xf32>
    %c16_68 = arith.constant 16 : index
    %c256_69 = arith.constant 256 : index
    %77 = vector.load %arg15[%c16_68, %c256_69] : memref<72x512xf32, #tpu.memory_space<vmem>>, vector<8x256xf32>
    tpu.vector_store %arg15[%c16_68, %c256_69], %76 {strides = array<i32>} : memref<72x512xf32, #tpu.memory_space<vmem>>, vector<8x256xf32>,
    %c0_70 = arith.constant 0 : index
    %c16_71 = arith.constant 16 : index
    %78 = vector.load %arg14[%c0_70, %c16_71] : memref<8x290xf32, #tpu.memory_space<vmem>>, vector<8x256xf32>
    %79 = vector.broadcast %3 : vector<1x256xf32> to vector<8x256xf32>
    %80 = arith.mulf %78, %79 : vector<8x256xf32>
    %c24_72 = arith.constant 24 : index
    %c256_73 = arith.constant 256 : index
    %81 = vector.load %arg15[%c24_72, %c256_73] : memref<72x512xf32, #tpu.memory_space<vmem>>, vector<8x256xf32>
    tpu.vector_store %arg15[%c24_72, %c256_73], %80 {strides = array<i32>} : memref<72x512xf32, #tpu.memory_space<vmem>>, vector<8x256xf32>,
    %c0_74 = arith.constant 0 : index
    %c17_75 = arith.constant 17 : index
    %82 = vector.load %arg14[%c0_74, %c17_75] : memref<8x290xf32, #tpu.memory_space<vmem>>, vector<8x256xf32>
    %c32_76 = arith.constant 32 : index
    %c256_77 = arith.constant 256 : index
    %83 = vector.load %arg15[%c32_76, %c256_77] : memref<72x512xf32, #tpu.memory_space<vmem>>, vector<8x256xf32>
    tpu.vector_store %arg15[%c32_76, %c256_77], %82 {strides = array<i32>} : memref<72x512xf32, #tpu.memory_space<vmem>>, vector<8x256xf32>,
    %c0_78 = arith.constant 0 : index
    %c18_79 = arith.constant 18 : index
    %84 = vector.load %arg14[%c0_78, %c18_79] : memref<8x290xf32, #tpu.memory_space<vmem>>, vector<8x256xf32>
    %85 = vector.broadcast %4 : vector<1x256xf32> to vector<8x256xf32>
    %86 = arith.mulf %84, %85 : vector<8x256xf32>
    %c40_80 = arith.constant 40 : index
    %c256_81 = arith.constant 256 : index
    %87 = vector.load %arg15[%c40_80, %c256_81] : memref<72x512xf32, #tpu.memory_space<vmem>>, vector<8x256xf32>
    tpu.vector_store %arg15[%c40_80, %c256_81], %86 {strides = array<i32>} : memref<72x512xf32, #tpu.memory_space<vmem>>, vector<8x256xf32>,
    %c0_82 = arith.constant 0 : index
    %c32_83 = arith.constant 32 : index
    %88 = vector.load %arg14[%c0_82, %c32_83] : memref<8x290xf32, #tpu.memory_space<vmem>>, vector<8x256xf32>
    %89 = vector.broadcast %5 : vector<1x256xf32> to vector<8x256xf32>
    %90 = arith.mulf %88, %89 : vector<8x256xf32>
    %c48_84 = arith.constant 48 : index
    %c256_85 = arith.constant 256 : index
    %91 = vector.load %arg15[%c48_84, %c256_85] : memref<72x512xf32, #tpu.memory_space<vmem>>, vector<8x256xf32>
    tpu.vector_store %arg15[%c48_84, %c256_85], %90 {strides = array<i32>} : memref<72x512xf32, #tpu.memory_space<vmem>>, vector<8x256xf32>,
    %c0_86 = arith.constant 0 : index
    %c33_87 = arith.constant 33 : index
    %92 = vector.load %arg14[%c0_86, %c33_87] : memref<8x290xf32, #tpu.memory_space<vmem>>, vector<8x256xf32>
    %c56_88 = arith.constant 56 : index
    %c256_89 = arith.constant 256 : index
    %93 = vector.load %arg15[%c56_88, %c256_89] : memref<72x512xf32, #tpu.memory_space<vmem>>, vector<8x256xf32>
    tpu.vector_store %arg15[%c56_88, %c256_89], %92 {strides = array<i32>} : memref<72x512xf32, #tpu.memory_space<vmem>>, vector<8x256xf32>,
    %c0_90 = arith.constant 0 : index
    %c34_91 = arith.constant 34 : index
    %94 = vector.load %arg14[%c0_90, %c34_91] : memref<8x290xf32, #tpu.memory_space<vmem>>, vector<8x256xf32>
    %95 = vector.broadcast %6 : vector<1x256xf32> to vector<8x256xf32>
    %96 = arith.mulf %94, %95 : vector<8x256xf32>
    %c64_92 = arith.constant 64 : index
    %c256_93 = arith.constant 256 : index
    %97 = vector.load %arg15[%c64_92, %c256_93] : memref<72x512xf32, #tpu.memory_space<vmem>>, vector<8x256xf32>
    tpu.vector_store %arg15[%c64_92, %c256_93], %96 {strides = array<i32>} : memref<72x512xf32, #tpu.memory_space<vmem>>, vector<8x256xf32>,
    %c0_94 = arith.constant 0 : index
    %c0_95 = arith.constant 0 : index
    %98 = vector.load %arg15[%c0_94, %c0_95] : memref<72x512xf32, #tpu.memory_space<vmem>>, vector<72x512xf32>
    %cst_96 = arith.constant dense<0.000000e+00> : vector<8x512xf32>
    %99 = tpu.matmul %7, %98, %cst_96 {dimension_numbers = #tpu.dot_dimension_numbers<[1], [0], [0], [1], [0, 0, 1, 1], [], []>} : vector<8x72xf32>, vector<72x512xf32>, vector<8x512xf32> -> vector<8x512xf32>
    %100 = vector.broadcast %9 : vector<8x1xf32> to vector<8x512xf32>
    %101 = arith.addf %99, %100 : vector<8x512xf32>
    %c0_97 = arith.constant 0 : index
    %c0_98 = arith.constant 0 : index
    %102 = vector.load %arg17[%c0_97, %c0_98] : memref<8x512xf32, #tpu.memory_space<vmem>>, vector<8x512xf32>
    tpu.vector_store %arg17[%c0_97, %c0_98], %101 {strides = array<i32>} : memref<8x512xf32, #tpu.memory_space<vmem>>, vector<8x512xf32>,
    %c0_99 = arith.constant 0 : index
    %c0_100 = arith.constant 0 : index
    %103 = vector.load %arg17[%c0_99, %c0_100] : memref<8x512xf32, #tpu.memory_space<vmem>>, vector<8x256xf32>
    %cst_101 = arith.constant dense<0.000000e+00> : vector<8xf32>
    %104 = vector.multi_reduction <add>, %103, %cst_101 [1] : vector<8x256xf32> to vector<8xf32>
    %105 = vector.shape_cast %104 : vector<8xf32> to vector<8x1xf32>
    %106 = arith.mulf %103, %103 : vector<8x256xf32>
    %cst_102 = arith.constant dense<0.000000e+00> : vector<8xf32>
    %107 = vector.multi_reduction <add>, %106, %cst_102 [1] : vector<8x256xf32> to vector<8xf32>
    %108 = vector.shape_cast %107 : vector<8xf32> to vector<8x1xf32>
    %cst_103 = arith.constant dense<0.000000e+00> : vector<8x1xf32>
    %109 = tpu.matmul %15, %105, %cst_103 {dimension_numbers = #tpu.dot_dimension_numbers<[1], [0], [0], [1], [0, 0, 1, 1], [], []>} : vector<8x8xf32>, vector<8x1xf32>, vector<8x1xf32> -> vector<8x1xf32>
    %cst_104 = arith.constant 9.765625E-4 : f32
    %110 = vector.broadcast %cst_104 : f32 to vector<8x1xf32>
    %111 = arith.mulf %109, %110 : vector<8x1xf32>
    %cst_105 = arith.constant dense<0.000000e+00> : vector<8x1xf32>
    %112 = tpu.matmul %15, %108, %cst_105 {dimension_numbers = #tpu.dot_dimension_numbers<[1], [0], [0], [1], [0, 0, 1, 1], [], []>} : vector<8x8xf32>, vector<8x1xf32>, vector<8x1xf32> -> vector<8x1xf32>
    %cst_106 = arith.constant 9.765625E-4 : f32
    %113 = vector.broadcast %cst_106 : f32 to vector<8x1xf32>
    %114 = arith.mulf %112, %113 : vector<8x1xf32>
    %115 = arith.mulf %111, %111 : vector<8x1xf32>
    %116 = arith.subf %114, %115 : vector<8x1xf32>
    %cst_107 = arith.constant 9.99999974E-6 : f32
    %117 = vector.broadcast %cst_107 : f32 to vector<8x1xf32>
    %118 = arith.addf %116, %117 : vector<8x1xf32>
    %119 = math.rsqrt %118 : vector<8x1xf32>
    %120 = vector.broadcast %111 : vector<8x1xf32> to vector<8x256xf32>
    %121 = arith.subf %103, %120 : vector<8x256xf32>
    %122 = arith.mulf %119, %10 : vector<8x1xf32>
    %123 = vector.broadcast %122 : vector<8x1xf32> to vector<8x256xf32>
    %124 = arith.mulf %121, %123 : vector<8x256xf32>
    %125 = vector.broadcast %11 : vector<8x1xf32> to vector<8x256xf32>
    %126 = arith.addf %124, %125 : vector<8x256xf32>
    %c0_108 = arith.constant 0 : index
    %c17_109 = arith.constant 17 : index
    %127 = vector.load %arg14[%c0_108, %c17_109] : memref<8x290xf32, #tpu.memory_space<vmem>>, vector<8x256xf32>
    tpu.vector_store %arg14[%c0_108, %c17_109], %126 {strides = array<i32>} : memref<8x290xf32, #tpu.memory_space<vmem>>, vector<8x256xf32>,
    %c0_110 = arith.constant 0 : index
    %c0_111 = arith.constant 0 : index
    %128 = vector.load %arg14[%c0_110, %c0_111] : memref<8x290xf32, #tpu.memory_space<vmem>>, vector<8x256xf32>
    %129 = vector.broadcast %1 : vector<1x256xf32> to vector<8x256xf32>
    %130 = arith.mulf %128, %129 : vector<8x256xf32>
    %c0_112 = arith.constant 0 : index
    %c0_113 = arith.constant 0 : index
    %131 = vector.load %arg16[%c0_112, %c0_113] : memref<72x512xf32, #tpu.memory_space<vmem>>, vector<8x256xf32>
    tpu.vector_store %arg16[%c0_112, %c0_113], %130 {strides = array<i32>} : memref<72x512xf32, #tpu.memory_space<vmem>>, vector<8x256xf32>,
    %c0_114 = arith.constant 0 : index
    %c1_115 = arith.constant 1 : index
    %132 = vector.load %arg14[%c0_114, %c1_115] : memref<8x290xf32, #tpu.memory_space<vmem>>, vector<8x256xf32>
    %c8_116 = arith.constant 8 : index
    %c0_117 = arith.constant 0 : index
    %133 = vector.load %arg16[%c8_116, %c0_117] : memref<72x512xf32, #tpu.memory_space<vmem>>, vector<8x256xf32>
    tpu.vector_store %arg16[%c8_116, %c0_117], %132 {strides = array<i32>} : memref<72x512xf32, #tpu.memory_space<vmem>>, vector<8x256xf32>,
    %c0_118 = arith.constant 0 : index
    %c2_119 = arith.constant 2 : index
    %134 = vector.load %arg14[%c0_118, %c2_119] : memref<8x290xf32, #tpu.memory_space<vmem>>, vector<8x256xf32>
    %135 = vector.broadcast %2 : vector<1x256xf32> to vector<8x256xf32>
    %136 = arith.mulf %134, %135 : vector<8x256xf32>
    %c16_120 = arith.constant 16 : index
    %c0_121 = arith.constant 0 : index
    %137 = vector.load %arg16[%c16_120, %c0_121] : memref<72x512xf32, #tpu.memory_space<vmem>>, vector<8x256xf32>
    tpu.vector_store %arg16[%c16_120, %c0_121], %136 {strides = array<i32>} : memref<72x512xf32, #tpu.memory_space<vmem>>, vector<8x256xf32>,
    %c0_122 = arith.constant 0 : index
    %c16_123 = arith.constant 16 : index
    %138 = vector.load %arg14[%c0_122, %c16_123] : memref<8x290xf32, #tpu.memory_space<vmem>>, vector<8x256xf32>
    %139 = vector.broadcast %3 : vector<1x256xf32> to vector<8x256xf32>
    %140 = arith.mulf %138, %139 : vector<8x256xf32>
    %c24_124 = arith.constant 24 : index
    %c0_125 = arith.constant 0 : index
    %141 = vector.load %arg16[%c24_124, %c0_125] : memref<72x512xf32, #tpu.memory_space<vmem>>, vector<8x256xf32>
    tpu.vector_store %arg16[%c24_124, %c0_125], %140 {strides = array<i32>} : memref<72x512xf32, #tpu.memory_space<vmem>>, vector<8x256xf32>,
    %c0_126 = arith.constant 0 : index
    %c17_127 = arith.constant 17 : index
    %142 = vector.load %arg14[%c0_126, %c17_127] : memref<8x290xf32, #tpu.memory_space<vmem>>, vector<8x256xf32>
    %c32_128 = arith.constant 32 : index
    %c0_129 = arith.constant 0 : index
    %143 = vector.load %arg16[%c32_128, %c0_129] : memref<72x512xf32, #tpu.memory_space<vmem>>, vector<8x256xf32>
    tpu.vector_store %arg16[%c32_128, %c0_129], %142 {strides = array<i32>} : memref<72x512xf32, #tpu.memory_space<vmem>>, vector<8x256xf32>,
    %c0_130 = arith.constant 0 : index
    %c18_131 = arith.constant 18 : index
    %144 = vector.load %arg14[%c0_130, %c18_131] : memref<8x290xf32, #tpu.memory_space<vmem>>, vector<8x256xf32>
    %145 = vector.broadcast %4 : vector<1x256xf32> to vector<8x256xf32>
    %146 = arith.mulf %144, %145 : vector<8x256xf32>
    %c40_132 = arith.constant 40 : index
    %c0_133 = arith.constant 0 : index
    %147 = vector.load %arg16[%c40_132, %c0_133] : memref<72x512xf32, #tpu.memory_space<vmem>>, vector<8x256xf32>
    tpu.vector_store %arg16[%c40_132, %c0_133], %146 {strides = array<i32>} : memref<72x512xf32, #tpu.memory_space<vmem>>, vector<8x256xf32>,
    %c0_134 = arith.constant 0 : index
    %c32_135 = arith.constant 32 : index
    %148 = vector.load %arg14[%c0_134, %c32_135] : memref<8x290xf32, #tpu.memory_space<vmem>>, vector<8x256xf32>
    %149 = vector.broadcast %5 : vector<1x256xf32> to vector<8x256xf32>
    %150 = arith.mulf %148, %149 : vector<8x256xf32>
    %c48_136 = arith.constant 48 : index
    %c0_137 = arith.constant 0 : index
    %151 = vector.load %arg16[%c48_136, %c0_137] : memref<72x512xf32, #tpu.memory_space<vmem>>, vector<8x256xf32>
    tpu.vector_store %arg16[%c48_136, %c0_137], %150 {strides = array<i32>} : memref<72x512xf32, #tpu.memory_space<vmem>>, vector<8x256xf32>,
    %c0_138 = arith.constant 0 : index
    %c33_139 = arith.constant 33 : index
    %152 = vector.load %arg14[%c0_138, %c33_139] : memref<8x290xf32, #tpu.memory_space<vmem>>, vector<8x256xf32>
    %c56_140 = arith.constant 56 : index
    %c0_141 = arith.constant 0 : index
    %153 = vector.load %arg16[%c56_140, %c0_141] : memref<72x512xf32, #tpu.memory_space<vmem>>, vector<8x256xf32>
    tpu.vector_store %arg16[%c56_140, %c0_141], %152 {strides = array<i32>} : memref<72x512xf32, #tpu.memory_space<vmem>>, vector<8x256xf32>,
    %c0_142 = arith.constant 0 : index
    %c34_143 = arith.constant 34 : index
    %154 = vector.load %arg14[%c0_142, %c34_143] : memref<8x290xf32, #tpu.memory_space<vmem>>, vector<8x256xf32>
    %155 = vector.broadcast %6 : vector<1x256xf32> to vector<8x256xf32>
    %156 = arith.mulf %154, %155 : vector<8x256xf32>
    %c64_144 = arith.constant 64 : index
    %c0_145 = arith.constant 0 : index
    %157 = vector.load %arg16[%c64_144, %c0_145] : memref<72x512xf32, #tpu.memory_space<vmem>>, vector<8x256xf32>
    tpu.vector_store %arg16[%c64_144, %c0_145], %156 {strides = array<i32>} : memref<72x512xf32, #tpu.memory_space<vmem>>, vector<8x256xf32>,
    %c0_146 = arith.constant 0 : index
    %c256_147 = arith.constant 256 : index
    %158 = vector.load %arg17[%c0_146, %c256_147] : memref<8x512xf32, #tpu.memory_space<vmem>>, vector<8x256xf32>
    %cst_148 = arith.constant dense<0.000000e+00> : vector<8xf32>
    %159 = vector.multi_reduction <add>, %158, %cst_148 [1] : vector<8x256xf32> to vector<8xf32>
    %160 = vector.shape_cast %159 : vector<8xf32> to vector<8x1xf32>
    %161 = arith.mulf %158, %158 : vector<8x256xf32>
    %cst_149 = arith.constant dense<0.000000e+00> : vector<8xf32>
    %162 = vector.multi_reduction <add>, %161, %cst_149 [1] : vector<8x256xf32> to vector<8xf32>
    %163 = vector.shape_cast %162 : vector<8xf32> to vector<8x1xf32>
    %cst_150 = arith.constant dense<0.000000e+00> : vector<8x1xf32>
    %164 = tpu.matmul %15, %160, %cst_150 {dimension_numbers = #tpu.dot_dimension_numbers<[1], [0], [0], [1], [0, 0, 1, 1], [], []>} : vector<8x8xf32>, vector<8x1xf32>, vector<8x1xf32> -> vector<8x1xf32>
    %cst_151 = arith.constant 9.765625E-4 : f32
    %165 = vector.broadcast %cst_151 : f32 to vector<8x1xf32>
    %166 = arith.mulf %164, %165 : vector<8x1xf32>
    %cst_152 = arith.constant dense<0.000000e+00> : vector<8x1xf32>
    %167 = tpu.matmul %15, %163, %cst_152 {dimension_numbers = #tpu.dot_dimension_numbers<[1], [0], [0], [1], [0, 0, 1, 1], [], []>} : vector<8x8xf32>, vector<8x1xf32>, vector<8x1xf32> -> vector<8x1xf32>
    %cst_153 = arith.constant 9.765625E-4 : f32
    %168 = vector.broadcast %cst_153 : f32 to vector<8x1xf32>
    %169 = arith.mulf %167, %168 : vector<8x1xf32>
    %170 = arith.mulf %166, %166 : vector<8x1xf32>
    %171 = arith.subf %169, %170 : vector<8x1xf32>
    %cst_154 = arith.constant 9.99999974E-6 : f32
    %172 = vector.broadcast %cst_154 : f32 to vector<8x1xf32>
    %173 = arith.addf %171, %172 : vector<8x1xf32>
    %174 = math.rsqrt %173 : vector<8x1xf32>
    %175 = vector.broadcast %166 : vector<8x1xf32> to vector<8x256xf32>
    %176 = arith.subf %158, %175 : vector<8x256xf32>
    %177 = arith.mulf %174, %10 : vector<8x1xf32>
    %178 = vector.broadcast %177 : vector<8x1xf32> to vector<8x256xf32>
    %179 = arith.mulf %176, %178 : vector<8x256xf32>
    %180 = vector.broadcast %11 : vector<8x1xf32> to vector<8x256xf32>
    %181 = arith.addf %179, %180 : vector<8x256xf32>
    %c0_155 = arith.constant 0 : index
    %c17_156 = arith.constant 17 : index
    %182 = vector.load %arg14[%c0_155, %c17_156] : memref<8x290xf32, #tpu.memory_space<vmem>>, vector<8x256xf32>
    tpu.vector_store %arg14[%c0_155, %c17_156], %181 {strides = array<i32>} : memref<8x290xf32, #tpu.memory_space<vmem>>, vector<8x256xf32>,
    %c0_157 = arith.constant 0 : index
    %c0_158 = arith.constant 0 : index
    %183 = vector.load %arg14[%c0_157, %c0_158] : memref<8x290xf32, #tpu.memory_space<vmem>>, vector<8x256xf32>
    %184 = vector.broadcast %1 : vector<1x256xf32> to vector<8x256xf32>
    %185 = arith.mulf %183, %184 : vector<8x256xf32>
    %c0_159 = arith.constant 0 : index
    %c256_160 = arith.constant 256 : index
    %186 = vector.load %arg16[%c0_159, %c256_160] : memref<72x512xf32, #tpu.memory_space<vmem>>, vector<8x256xf32>
    tpu.vector_store %arg16[%c0_159, %c256_160], %185 {strides = array<i32>} : memref<72x512xf32, #tpu.memory_space<vmem>>, vector<8x256xf32>,
    %c0_161 = arith.constant 0 : index
    %c1_162 = arith.constant 1 : index
    %187 = vector.load %arg14[%c0_161, %c1_162] : memref<8x290xf32, #tpu.memory_space<vmem>>, vector<8x256xf32>
    %c8_163 = arith.constant 8 : index
    %c256_164 = arith.constant 256 : index
    %188 = vector.load %arg16[%c8_163, %c256_164] : memref<72x512xf32, #tpu.memory_space<vmem>>, vector<8x256xf32>
    tpu.vector_store %arg16[%c8_163, %c256_164], %187 {strides = array<i32>} : memref<72x512xf32, #tpu.memory_space<vmem>>, vector<8x256xf32>,
    %c0_165 = arith.constant 0 : index
    %c2_166 = arith.constant 2 : index
    %189 = vector.load %arg14[%c0_165, %c2_166] : memref<8x290xf32, #tpu.memory_space<vmem>>, vector<8x256xf32>
    %190 = vector.broadcast %2 : vector<1x256xf32> to vector<8x256xf32>
    %191 = arith.mulf %189, %190 : vector<8x256xf32>
    %c16_167 = arith.constant 16 : index
    %c256_168 = arith.constant 256 : index
    %192 = vector.load %arg16[%c16_167, %c256_168] : memref<72x512xf32, #tpu.memory_space<vmem>>, vector<8x256xf32>
    tpu.vector_store %arg16[%c16_167, %c256_168], %191 {strides = array<i32>} : memref<72x512xf32, #tpu.memory_space<vmem>>, vector<8x256xf32>,
    %c0_169 = arith.constant 0 : index
    %c16_170 = arith.constant 16 : index
    %193 = vector.load %arg14[%c0_169, %c16_170] : memref<8x290xf32, #tpu.memory_space<vmem>>, vector<8x256xf32>
    %194 = vector.broadcast %3 : vector<1x256xf32> to vector<8x256xf32>
    %195 = arith.mulf %193, %194 : vector<8x256xf32>
    %c24_171 = arith.constant 24 : index
    %c256_172 = arith.constant 256 : index
    %196 = vector.load %arg16[%c24_171, %c256_172] : memref<72x512xf32, #tpu.memory_space<vmem>>, vector<8x256xf32>
    tpu.vector_store %arg16[%c24_171, %c256_172], %195 {strides = array<i32>} : memref<72x512xf32, #tpu.memory_space<vmem>>, vector<8x256xf32>,
    %c0_173 = arith.constant 0 : index
    %c17_174 = arith.constant 17 : index
    %197 = vector.load %arg14[%c0_173, %c17_174] : memref<8x290xf32, #tpu.memory_space<vmem>>, vector<8x256xf32>
    %c32_175 = arith.constant 32 : index
    %c256_176 = arith.constant 256 : index
    %198 = vector.load %arg16[%c32_175, %c256_176] : memref<72x512xf32, #tpu.memory_space<vmem>>, vector<8x256xf32>
    tpu.vector_store %arg16[%c32_175, %c256_176], %197 {strides = array<i32>} : memref<72x512xf32, #tpu.memory_space<vmem>>, vector<8x256xf32>,
    %c0_177 = arith.constant 0 : index
    %c18_178 = arith.constant 18 : index
    %199 = vector.load %arg14[%c0_177, %c18_178] : memref<8x290xf32, #tpu.memory_space<vmem>>, vector<8x256xf32>
    %200 = vector.broadcast %4 : vector<1x256xf32> to vector<8x256xf32>
    %201 = arith.mulf %199, %200 : vector<8x256xf32>
    %c40_179 = arith.constant 40 : index
    %c256_180 = arith.constant 256 : index
    %202 = vector.load %arg16[%c40_179, %c256_180] : memref<72x512xf32, #tpu.memory_space<vmem>>, vector<8x256xf32>
    tpu.vector_store %arg16[%c40_179, %c256_180], %201 {strides = array<i32>} : memref<72x512xf32, #tpu.memory_space<vmem>>, vector<8x256xf32>,
    %c0_181 = arith.constant 0 : index
    %c32_182 = arith.constant 32 : index
    %203 = vector.load %arg14[%c0_181, %c32_182] : memref<8x290xf32, #tpu.memory_space<vmem>>, vector<8x256xf32>
    %204 = vector.broadcast %5 : vector<1x256xf32> to vector<8x256xf32>
    %205 = arith.mulf %203, %204 : vector<8x256xf32>
    %c48_183 = arith.constant 48 : index
    %c256_184 = arith.constant 256 : index
    %206 = vector.load %arg16[%c48_183, %c256_184] : memref<72x512xf32, #tpu.memory_space<vmem>>, vector<8x256xf32>
    tpu.vector_store %arg16[%c48_183, %c256_184], %205 {strides = array<i32>} : memref<72x512xf32, #tpu.memory_space<vmem>>, vector<8x256xf32>,
    %c0_185 = arith.constant 0 : index
    %c33_186 = arith.constant 33 : index
    %207 = vector.load %arg14[%c0_185, %c33_186] : memref<8x290xf32, #tpu.memory_space<vmem>>, vector<8x256xf32>
    %c56_187 = arith.constant 56 : index
    %c256_188 = arith.constant 256 : index
    %208 = vector.load %arg16[%c56_187, %c256_188] : memref<72x512xf32, #tpu.memory_space<vmem>>, vector<8x256xf32>
    tpu.vector_store %arg16[%c56_187, %c256_188], %207 {strides = array<i32>} : memref<72x512xf32, #tpu.memory_space<vmem>>, vector<8x256xf32>,
    %c0_189 = arith.constant 0 : index
    %c34_190 = arith.constant 34 : index
    %209 = vector.load %arg14[%c0_189, %c34_190] : memref<8x290xf32, #tpu.memory_space<vmem>>, vector<8x256xf32>
    %210 = vector.broadcast %6 : vector<1x256xf32> to vector<8x256xf32>
    %211 = arith.mulf %209, %210 : vector<8x256xf32>
    %c64_191 = arith.constant 64 : index
    %c256_192 = arith.constant 256 : index
    %212 = vector.load %arg16[%c64_191, %c256_192] : memref<72x512xf32, #tpu.memory_space<vmem>>, vector<8x256xf32>
    tpu.vector_store %arg16[%c64_191, %c256_192], %211 {strides = array<i32>} : memref<72x512xf32, #tpu.memory_space<vmem>>, vector<8x256xf32>,
    %c0_193 = arith.constant 0 : index
    %c0_194 = arith.constant 0 : index
    %213 = vector.load %arg16[%c0_193, %c0_194] : memref<72x512xf32, #tpu.memory_space<vmem>>, vector<72x512xf32>
    %cst_195 = arith.constant dense<0.000000e+00> : vector<8x512xf32>
    %214 = tpu.matmul %8, %213, %cst_195 {dimension_numbers = #tpu.dot_dimension_numbers<[1], [0], [0], [1], [0, 0, 1, 1], [], []>} : vector<8x72xf32>, vector<72x512xf32>, vector<8x512xf32> -> vector<8x512xf32>
    %215 = vector.broadcast %12 : vector<8x1xf32> to vector<8x512xf32>
    %216 = arith.addf %214, %215 : vector<8x512xf32>
    %c0_196 = arith.constant 0 : index
    %c0_197 = arith.constant 0 : index
    %217 = vector.load %arg17[%c0_196, %c0_197] : memref<8x512xf32, #tpu.memory_space<vmem>>, vector<8x512xf32>
    tpu.vector_store %arg17[%c0_196, %c0_197], %216 {strides = array<i32>} : memref<8x512xf32, #tpu.memory_space<vmem>>, vector<8x512xf32>,
    %c0_198 = arith.constant 0 : index
    %c0_199 = arith.constant 0 : index
    %218 = vector.load %arg17[%c0_198, %c0_199] : memref<8x512xf32, #tpu.memory_space<vmem>>, vector<8x256xf32>
    %cst_200 = arith.constant dense<0.000000e+00> : vector<8xf32>
    %219 = vector.multi_reduction <add>, %218, %cst_200 [1] : vector<8x256xf32> to vector<8xf32>
    %220 = vector.shape_cast %219 : vector<8xf32> to vector<8x1xf32>
    %221 = arith.mulf %218, %218 : vector<8x256xf32>
    %cst_201 = arith.constant dense<0.000000e+00> : vector<8xf32>
    %222 = vector.multi_reduction <add>, %221, %cst_201 [1] : vector<8x256xf32> to vector<8xf32>
    %223 = vector.shape_cast %222 : vector<8xf32> to vector<8x1xf32>
    %cst_202 = arith.constant dense<0.000000e+00> : vector<8x1xf32>
    %224 = tpu.matmul %15, %220, %cst_202 {dimension_numbers = #tpu.dot_dimension_numbers<[1], [0], [0], [1], [0, 0, 1, 1], [], []>} : vector<8x8xf32>, vector<8x1xf32>, vector<8x1xf32> -> vector<8x1xf32>
    %cst_203 = arith.constant 9.765625E-4 : f32
    %225 = vector.broadcast %cst_203 : f32 to vector<8x1xf32>
    %226 = arith.mulf %224, %225 : vector<8x1xf32>
    %cst_204 = arith.constant dense<0.000000e+00> : vector<8x1xf32>
    %227 = tpu.matmul %15, %223, %cst_204 {dimension_numbers = #tpu.dot_dimension_numbers<[1], [0], [0], [1], [0, 0, 1, 1], [], []>} : vector<8x8xf32>, vector<8x1xf32>, vector<8x1xf32> -> vector<8x1xf32>
    %cst_205 = arith.constant 9.765625E-4 : f32
    %228 = vector.broadcast %cst_205 : f32 to vector<8x1xf32>
    %229 = arith.mulf %227, %228 : vector<8x1xf32>
    %230 = arith.mulf %226, %226 : vector<8x1xf32>
    %231 = arith.subf %229, %230 : vector<8x1xf32>
    %cst_206 = arith.constant 9.99999974E-6 : f32
    %232 = vector.broadcast %cst_206 : f32 to vector<8x1xf32>
    %233 = arith.addf %231, %232 : vector<8x1xf32>
    %234 = math.rsqrt %233 : vector<8x1xf32>
    %235 = vector.broadcast %226 : vector<8x1xf32> to vector<8x256xf32>
    %236 = arith.subf %218, %235 : vector<8x256xf32>
    %237 = arith.mulf %234, %13 : vector<8x1xf32>
    %238 = vector.broadcast %237 : vector<8x1xf32> to vector<8x256xf32>
    %239 = arith.mulf %236, %238 : vector<8x256xf32>
    %240 = vector.broadcast %14 : vector<8x1xf32> to vector<8x256xf32>
    %241 = arith.addf %239, %240 : vector<8x256xf32>
    %242 = arith.negf %241 : vector<8x256xf32>
    %243 = math.exp %242 : vector<8x256xf32>
    %cst_207 = arith.constant 1.000000e+00 : f32
    %244 = vector.broadcast %cst_207 : f32 to vector<8x256xf32>
    %245 = arith.addf %244, %243 : vector<8x256xf32>
    %246 = arith.divf %244, %245 : vector<8x256xf32>
    %c0_208 = arith.constant 0 : index
    %c0_209 = arith.constant 0 : index
    %c0_210 = arith.constant 0 : index
    %247 = vector.load %arg13[%c0_208, %c0_209, %c0_210] : memref<2x8x256xf32, #tpu.memory_space<vmem>>, vector<1x8x256xf32>
    %248 = vector.shape_cast %247 : vector<1x8x256xf32> to vector<8x256xf32>
    %249 = vector.shape_cast %246 : vector<8x256xf32> to vector<1x8x256xf32>
    tpu.vector_store %arg13[%c0_208, %c0_209, %c0_210], %249 {strides = array<i32>} : memref<2x8x256xf32, #tpu.memory_space<vmem>>, vector<1x8x256xf32>,
    %c0_211 = arith.constant 0 : index
    %c256_212 = arith.constant 256 : index
    %250 = vector.load %arg17[%c0_211, %c256_212] : memref<8x512xf32, #tpu.memory_space<vmem>>, vector<8x256xf32>
    %cst_213 = arith.constant dense<0.000000e+00> : vector<8xf32>
    %251 = vector.multi_reduction <add>, %250, %cst_213 [1] : vector<8x256xf32> to vector<8xf32>
    %252 = vector.shape_cast %251 : vector<8xf32> to vector<8x1xf32>
    %253 = arith.mulf %250, %250 : vector<8x256xf32>
    %cst_214 = arith.constant dense<0.000000e+00> : vector<8xf32>
    %254 = vector.multi_reduction <add>, %253, %cst_214 [1] : vector<8x256xf32> to vector<8xf32>
    %255 = vector.shape_cast %254 : vector<8xf32> to vector<8x1xf32>
    %cst_215 = arith.constant dense<0.000000e+00> : vector<8x1xf32>
    %256 = tpu.matmul %15, %252, %cst_215 {dimension_numbers = #tpu.dot_dimension_numbers<[1], [0], [0], [1], [0, 0, 1, 1], [], []>} : vector<8x8xf32>, vector<8x1xf32>, vector<8x1xf32> -> vector<8x1xf32>
    %cst_216 = arith.constant 9.765625E-4 : f32
    %257 = vector.broadcast %cst_216 : f32 to vector<8x1xf32>
    %258 = arith.mulf %256, %257 : vector<8x1xf32>
    %cst_217 = arith.constant dense<0.000000e+00> : vector<8x1xf32>
    %259 = tpu.matmul %15, %255, %cst_217 {dimension_numbers = #tpu.dot_dimension_numbers<[1], [0], [0], [1], [0, 0, 1, 1], [], []>} : vector<8x8xf32>, vector<8x1xf32>, vector<8x1xf32> -> vector<8x1xf32>
    %cst_218 = arith.constant 9.765625E-4 : f32
    %260 = vector.broadcast %cst_218 : f32 to vector<8x1xf32>
    %261 = arith.mulf %259, %260 : vector<8x1xf32>
    %262 = arith.mulf %258, %258 : vector<8x1xf32>
    %263 = arith.subf %261, %262 : vector<8x1xf32>
    %cst_219 = arith.constant 9.99999974E-6 : f32
    %264 = vector.broadcast %cst_219 : f32 to vector<8x1xf32>
    %265 = arith.addf %263, %264 : vector<8x1xf32>
    %266 = math.rsqrt %265 : vector<8x1xf32>
    %267 = vector.broadcast %258 : vector<8x1xf32> to vector<8x256xf32>
    %268 = arith.subf %250, %267 : vector<8x256xf32>
    %269 = arith.mulf %266, %13 : vector<8x1xf32>
    %270 = vector.broadcast %269 : vector<8x1xf32> to vector<8x256xf32>
    %271 = arith.mulf %268, %270 : vector<8x256xf32>
    %272 = vector.broadcast %14 : vector<8x1xf32> to vector<8x256xf32>
    %273 = arith.addf %271, %272 : vector<8x256xf32>
    %274 = arith.negf %273 : vector<8x256xf32>
    %275 = math.exp %274 : vector<8x256xf32>
    %cst_220 = arith.constant 1.000000e+00 : f32
    %276 = vector.broadcast %cst_220 : f32 to vector<8x256xf32>
    %277 = arith.addf %276, %275 : vector<8x256xf32>
    %278 = arith.divf %276, %277 : vector<8x256xf32>
    %c1_221 = arith.constant 1 : index
    %c0_222 = arith.constant 0 : index
    %c0_223 = arith.constant 0 : index
    %279 = vector.load %arg13[%c1_221, %c0_222, %c0_223] : memref<2x8x256xf32, #tpu.memory_space<vmem>>, vector<1x8x256xf32>
    %280 = vector.shape_cast %279 : vector<1x8x256xf32> to vector<8x256xf32>
    %281 = vector.shape_cast %278 : vector<8x256xf32> to vector<1x8x256xf32>
    tpu.vector_store %arg13[%c1_221, %c0_222, %c0_223], %281 {strides = array<i32>} : memref<2x8x256xf32, #tpu.memory_space<vmem>>, vector<1x8x256xf32>,
    return
  }
  func.func @transform_0(%arg0: i32) -> (i32, i32, i32) {
    %c0_i32 = arith.constant 0 : i32
    %c0_i32_0 = arith.constant 0 : i32
    %c0_i32_1 = arith.constant 0 : i32
    return %arg0, %c0_i32, %c0_i32_0 : i32, i32, i32
  }
  func.func @transform_1(%arg0: i32) -> (i32, i32, i32) {
    %c0_i32 = arith.constant 0 : i32
    %c0_i32_0 = arith.constant 0 : i32
    %c0_i32_1 = arith.constant 0 : i32
    return %arg0, %c0_i32, %c0_i32_0 : i32, i32, i32
  }
  func.func @transform_2(%arg0: i32) -> (i32, i32) {
    %c0_i32 = arith.constant 0 : i32
    %c0_i32_0 = arith.constant 0 : i32
    %c0_i32_1 = arith.constant 0 : i32
    return %c0_i32, %c0_i32_0 : i32, i32
  }
  func.func @transform_3(%arg0: i32) -> (i32, i32) {
    %c0_i32 = arith.constant 0 : i32
    %c0_i32_0 = arith.constant 0 : i32
    %c0_i32_1 = arith.constant 0 : i32
    return %c0_i32, %c0_i32_0 : i32, i32
  }
  func.func @transform_4(%arg0: i32) -> (i32, i32) {
    %c0_i32 = arith.constant 0 : i32
    %c0_i32_0 = arith.constant 0 : i32
    %c0_i32_1 = arith.constant 0 : i32
    return %c0_i32, %c0_i32_0 : i32, i32
  }
  func.func @transform_5(%arg0: i32) -> (i32, i32) {
    %c0_i32 = arith.constant 0 : i32
    %c0_i32_0 = arith.constant 0 : i32
    %c0_i32_1 = arith.constant 0 : i32
    return %c0_i32, %c0_i32_0 : i32, i32
  }
  func.func @transform_6(%arg0: i32) -> (i32, i32) {
    %c0_i32 = arith.constant 0 : i32
    %c0_i32_0 = arith.constant 0 : i32
    %c0_i32_1 = arith.constant 0 : i32
    return %c0_i32, %c0_i32_0 : i32, i32
  }
  func.func @transform_7(%arg0: i32) -> (i32, i32) {
    %c0_i32 = arith.constant 0 : i32
    %c0_i32_0 = arith.constant 0 : i32
    %c0_i32_1 = arith.constant 0 : i32
    return %c0_i32, %c0_i32_0 : i32, i32
  }
  func.func @transform_8(%arg0: i32) -> (i32, i32) {
    %c0_i32 = arith.constant 0 : i32
    %c0_i32_0 = arith.constant 0 : i32
    %c0_i32_1 = arith.constant 0 : i32
    return %c0_i32, %c0_i32_0 : i32, i32
  }
  func.func @transform_9(%arg0: i32) -> (i32, i32) {
    %c0_i32 = arith.constant 0 : i32
    %c0_i32_0 = arith.constant 0 : i32
    %c0_i32_1 = arith.constant 0 : i32
    return %c0_i32, %c0_i32_0 : i32, i32
  }
  func.func @transform_10(%arg0: i32) -> (i32, i32) {
    %c0_i32 = arith.constant 0 : i32
    %c0_i32_0 = arith.constant 0 : i32
    %c0_i32_1 = arith.constant 0 : i32
    return %c0_i32, %c0_i32_0 : i32, i32
  }
  func.func @transform_11(%arg0: i32) -> (i32, i32) {
    %c0_i32 = arith.constant 0 : i32
    %c0_i32_0 = arith.constant 0 : i32
    %c0_i32_1 = arith.constant 0 : i32
    return %c0_i32, %c0_i32_0 : i32, i32
  }
  func.func @transform_12(%arg0: i32) -> (i32, i32, i32) {
    %c0_i32 = arith.constant 0 : i32
    %c0_i32_0 = arith.constant 0 : i32
    %c0_i32_1 = arith.constant 0 : i32
    return %arg0, %c0_i32, %c0_i32_0 : i32, i32, i32
  }
}

</mosaic_0001>

<llo_original>
// kernel: tpu_custom_call.1
$region0: #{tpu_custom_call.1}
  #allocation0 [shape = 'u32[]', space=smem, size = 0x4, offset = 0x4, fixed_abs, tag = 'smem constant byte address 0x4 - core index']
  #allocation1 [shape = 'u32[144,128]{1,0:T(1,128)}', space=vmem, size = 0x12000, scoped, tag = 'internal scratch']
  #allocation2 [shape = 'f32[8,290]{1,0:T(8,128)}', space=vmem, size = 0x3000, scoped, tag = 'scratch operand']
  #allocation3 [shape = 'f32[72,512]{1,0:T(8,128)}', space=vmem, size = 0x24000, scoped, tag = 'scratch operand']
  #allocation4 [shape = 'f32[72,512]{1,0:T(8,128)}', space=vmem, size = 0x24000, scoped, tag = 'scratch operand']
  #allocation5 [shape = 'f32[8,512]{1,0:T(8,128)}', space=vmem, size = 0x4000, scoped, tag = 'scratch operand']
  %s0 = inlined_call_operand.hbm [shape: f32[2,4,256], index: 0, kind: input, shape index: {}]
  %s1 = inlined_call_operand.hbm [shape: f32[2,4,256], index: 1, kind: input, shape index: {}]
  %s2 = inlined_call_operand.hbm [shape: f32[9,256], index: 2, kind: input, shape index: {}]
  %s3 = inlined_call_operand.hbm [shape: f32[8,72], index: 3, kind: input, shape index: {}]
  %s4 = inlined_call_operand.hbm [shape: f32[8,1], index: 4, kind: input, shape index: {}]
  %s5 = inlined_call_operand.hbm [shape: f32[8,1], index: 5, kind: input, shape index: {}]
  %s6 = inlined_call_operand.hbm [shape: f32[8,1], index: 6, kind: input, shape index: {}]
  %s7 = inlined_call_operand.hbm [shape: f32[8,72], index: 7, kind: input, shape index: {}]
  %s8 = inlined_call_operand.hbm [shape: f32[8,1], index: 8, kind: input, shape index: {}]
  %s9 = inlined_call_operand.hbm [shape: f32[8,1], index: 9, kind: input, shape index: {}]
  %s10 = inlined_call_operand.hbm [shape: f32[8,1], index: 10, kind: input, shape index: {}]
  %s11 = inlined_call_operand.hbm [shape: f32[8,8], index: 11, kind: input, shape index: {}]
  %s12 = inlined_call_operand.hbm [shape: f32[2,8,256], index: 12, kind: output, shape index: {}]
  %s13 = sld [smem:[#allocation0]]
  $region106: #{tpu_custom_call.1} parent=0
    _
  %s15 = ssub.s32 1, %s13
  %s16 = scalar_select 0, %s15, %s13
  $region1: #{tpu_custom_call.1} parent=0
    #allocation6 [shape = 'u8[8192]{0}', space=vmem, size = 0x2000, scoped, tag = 'input window, operand 0, single buffered']
    #allocation7 [shape = 's32[1]{0}', space=sflag, size = 0x4, scoped, tag = 'scoped memory for tpu_custom_call.1']
    #allocation8 [shape = 's32[1]{0}', space=sflag, size = 0x4, scoped, tag = 'scoped memory for tpu_custom_call.1']
    #allocation9 [shape = 'u8[8192]{0}', space=vmem, size = 0x2000, scoped, tag = 'input window, operand 1, single buffered']
    #allocation10 [shape = 's32[1]{0}', space=sflag, size = 0x4, scoped, tag = 'scoped memory for tpu_custom_call.1']
    #allocation11 [shape = 'u8[16384]{0}', space=vmem, size = 0x4000, scoped, tag = 'input window, operand 2, single buffered']
    #allocation12 [shape = 'u8[4096]{0}', space=vmem, size = 0x1000, scoped, tag = 'input window, operand 3, single buffered']
    #allocation13 [shape = 's32[1]{0}', space=sflag, size = 0x4, scoped, tag = 'scoped memory for tpu_custom_call.1']
    #allocation14 [shape = 'u8[4096]{0}', space=vmem, size = 0x1000, scoped, tag = 'input window, operand 4, single buffered']
    #allocation15 [shape = 'u8[4096]{0}', space=vmem, size = 0x1000, scoped, tag = 'input window, operand 5, single buffered']
    #allocation16 [shape = 's32[1]{0}', space=sflag, size = 0x4, scoped, tag = 'scoped memory for tpu_custom_call.1']
    #allocation17 [shape = 'u8[4096]{0}', space=vmem, size = 0x1000, scoped, tag = 'input window, operand 6, single buffered']
    #allocation18 [shape = 'u8[4096]{0}', space=vmem, size = 0x1000, scoped, tag = 'input window, operand 7, single buffered']
    #allocation19 [shape = 's32[1]{0}', space=sflag, size = 0x4, scoped, tag = 'scoped memory for tpu_custom_call.1']
    #allocation20 [shape = 'u8[4096]{0}', space=vmem, size = 0x1000, scoped, tag = 'input window, operand 8, single buffered']
    #allocation21 [shape = 'u8[4096]{0}', space=vmem, size = 0x1000, scoped, tag = 'input window, operand 9, single buffered']
    #allocation22 [shape = 's32[1]{0}', space=sflag, size = 0x4, scoped, tag = 'scoped memory for tpu_custom_call.1']
    #allocation23 [shape = 'u8[4096]{0}', space=vmem, size = 0x1000, scoped, tag = 'input window, operand 10, single buffered']
    #allocation24 [shape = 'u8[4096]{0}', space=vmem, size = 0x1000, scoped, tag = 'input window, operand 11, single buffered']
    #allocation25 [shape = 's32[1]{0}', space=sflag, size = 0x4, scoped, tag = 'scoped memory for tpu_custom_call.1']
    #allocation26 [shape = 'u8[16384]{0}', space=vmem, size = 0x4000, scoped, tag = 'output window, operand 0, single buffered']
    %17 = vsyncpa [#allocation7], 0
    %18 = vsyncpa [#allocation10], 0
    %19 = vsyncpa [#allocation13], 0
    %20 = vsyncpa [#allocation16], 0
    %21 = vsyncpa [#allocation19], 0
    %22 = vsyncpa [#allocation22], 0
    %23 = vsyncpa [#allocation25], 0
    %24 = vsyncpa [#allocation8], 0
    // Predicated region
    $region2: #{tpu_custom_call.1} parent=1 // pred_check
      _
    $region3: #{tpu_custom_call.1} parent=1 // pred_check_branch
      %26 = sbr.rel (0) target = $region5
    $region4: #{tpu_custom_call.1} parent=1 // pred_region
      %s28 = ssub.s32 256, 256
      %29 = vsyncadd [#allocation7], %s28
      %s30 = sshll.u32 [#allocation6], 4
      %s31 = int_to_ptr.vmem [resolvable:$true] %s30
      %36 = dma.hbm_to_vmem [thread:$0]  %s0, 256, %s31, [#allocation7], 128, 128, 8
    $region5: #{tpu_custom_call.1} parent=1 // pred_fallthru
      _
    // Predicated region
    $region6: #{tpu_custom_call.1} parent=1 // pred_check
      _
    $region7: #{tpu_custom_call.1} parent=1 // pred_check_branch
      %38 = sbr.rel (0) target = $region9
    $region8: #{tpu_custom_call.1} parent=1 // pred_region
      %s40 = ssub.s32 256, 256
      %41 = vsyncadd [#allocation10], %s40
      %s42 = sshll.u32 [#allocation9], 4
      %s43 = int_to_ptr.vmem [resolvable:$true] %s42
      %48 = dma.hbm_to_vmem [thread:$0]  %s1, 256, %s43, [#allocation10], 128, 128, 8
    $region9: #{tpu_custom_call.1} parent=1 // pred_fallthru
      _
    // Predicated region
    $region10: #{tpu_custom_call.1} parent=1 // pred_check
      _
    $region11: #{tpu_custom_call.1} parent=1 // pred_check_branch
      %50 = sbr.rel (0) target = $region13
    $region12: #{tpu_custom_call.1} parent=1 // pred_region
      %s52 = ssub.s32 512, 512
      %53 = vsyncadd [#allocation10], %s52
      %s54 = sshll.u32 [#allocation11], 4
      %s55 = int_to_ptr.vmem [resolvable:$true] %s54
      %60 = dma.hbm_to_vmem [thread:$0]  %s2, 512, %s55, [#allocation10], 256, 256, 16
    $region13: #{tpu_custom_call.1} parent=1 // pred_fallthru
      _
    // Predicated region
    $region14: #{tpu_custom_call.1} parent=1 // pred_check
      _
    $region15: #{tpu_custom_call.1} parent=1 // pred_check_branch
      %62 = sbr.rel (0) target = $region17
    $region16: #{tpu_custom_call.1} parent=1 // pred_region
      %s64 = ssub.s32 128, 128
      %65 = vsyncadd [#allocation13], %s64
      %s67 = sshll.u32 [#allocation12], 4
      %s68 = int_to_ptr.vmem [resolvable:$true] %s67
      %70 = dma.hbm_to_vmem [thread:$0]  %s3, 128, %s68, [#allocation13]
    $region17: #{tpu_custom_call.1} parent=1 // pred_fallthru
      _
    // Predicated region
    $region18: #{tpu_custom_call.1} parent=1 // pred_check
      _
    $region19: #{tpu_custom_call.1} parent=1 // pred_check_branch
      %72 = sbr.rel (0) target = $region21
    $region20: #{tpu_custom_call.1} parent=1 // pred_region
      %s74 = ssub.s32 128, 128
      %75 = vsyncadd [#allocation13], %s74
      %s77 = sshll.u32 [#allocation14], 4
      %s78 = int_to_ptr.vmem [resolvable:$true] %s77
      %80 = dma.hbm_to_vmem [thread:$0]  %s4, 128, %s78, [#allocation13]
    $region21: #{tpu_custom_call.1} parent=1 // pred_fallthru
      _
    // Predicated region
    $region22: #{tpu_custom_call.1} parent=1 // pred_check
      _
    $region23: #{tpu_custom_call.1} parent=1 // pred_check_branch
      %82 = sbr.rel (0) target = $region25
    $region24: #{tpu_custom_call.1} parent=1 // pred_region
      %s84 = ssub.s32 128, 128
      %85 = vsyncadd [#allocation16], %s84
      %s87 = sshll.u32 [#allocation15], 4
      %s88 = int_to_ptr.vmem [resolvable:$true] %s87
      %90 = dma.hbm_to_vmem [thread:$0]  %s5, 128, %s88, [#allocation16]
    $region25: #{tpu_custom_call.1} parent=1 // pred_fallthru
      _
    // Predicated region
    $region26: #{tpu_custom_call.1} parent=1 // pred_check
      _
    $region27: #{tpu_custom_call.1} parent=1 // pred_check_branch
      %92 = sbr.rel (0) target = $region29
    $region28: #{tpu_custom_call.1} parent=1 // pred_region
      %s94 = ssub.s32 128, 128
      %95 = vsyncadd [#allocation16], %s94
      %s97 = sshll.u32 [#allocation17], 4
      %s98 = int_to_ptr.vmem [resolvable:$true] %s97
      %100 = dma.hbm_to_vmem [thread:$0]  %s6, 128, %s98, [#allocation16]
    $region29: #{tpu_custom_call.1} parent=1 // pred_fallthru
      _
    // Predicated region
    $region30: #{tpu_custom_call.1} parent=1 // pred_check
      _
    $region31: #{tpu_custom_call.1} parent=1 // pred_check_branch
      %102 = sbr.rel (0) target = $region33
    $region32: #{tpu_custom_call.1} parent=1 // pred_region
      %s104 = ssub.s32 128, 128
      %105 = vsyncadd [#allocation19], %s104
      %s107 = sshll.u32 [#allocation18], 4
      %s108 = int_to_ptr.vmem [resolvable:$true] %s107
      %110 = dma.hbm_to_vmem [thread:$0]  %s7, 128, %s108, [#allocation19]
    $region33: #{tpu_custom_call.1} parent=1 // pred_fallthru
      _
    // Predicated region
    $region34: #{tpu_custom_call.1} parent=1 // pred_check
      _
    $region35: #{tpu_custom_call.1} parent=1 // pred_check_branch
      %112 = sbr.rel (0) target = $region37
    $region36: #{tpu_custom_call.1} parent=1 // pred_region
      %s114 = ssub.s32 128, 128
      %115 = vsyncadd [#allocation19], %s114
      %s117 = sshll.u32 [#allocation20], 4
      %s118 = int_to_ptr.vmem [resolvable:$true] %s117
      %120 = dma.hbm_to_vmem [thread:$0]  %s8, 128, %s118, [#allocation19]
    $region37: #{tpu_custom_call.1} parent=1 // pred_fallthru
      _
    // Predicated region
    $region38: #{tpu_custom_call.1} parent=1 // pred_check
      _
    $region39: #{tpu_custom_call.1} parent=1 // pred_check_branch
      %122 = sbr.rel (0) target = $region41
    $region40: #{tpu_custom_call.1} parent=1 // pred_region
      %s124 = ssub.s32 128, 128
      %125 = vsyncadd [#allocation22], %s124
      %s127 = sshll.u32 [#allocation21], 4
      %s128 = int_to_ptr.vmem [resolvable:$true] %s127
      %130 = dma.hbm_to_vmem [thread:$0]  %s9, 128, %s128, [#allocation22]
    $region41: #{tpu_custom_call.1} parent=1 // pred_fallthru
      _
    // Predicated region
    $region42: #{tpu_custom_call.1} parent=1 // pred_check
      _
    $region43: #{tpu_custom_call.1} parent=1 // pred_check_branch
      %132 = sbr.rel (0) target = $region45
    $region44: #{tpu_custom_call.1} parent=1 // pred_region
      %s134 = ssub.s32 128, 128
      %135 = vsyncadd [#allocation22], %s134
      %s137 = sshll.u32 [#allocation23], 4
      %s138 = int_to_ptr.vmem [resolvable:$true] %s137
      %140 = dma.hbm_to_vmem [thread:$0]  %s10, 128, %s138, [#allocation22]
    $region45: #{tpu_custom_call.1} parent=1 // pred_fallthru
      _
    // Predicated region
    $region46: #{tpu_custom_call.1} parent=1 // pred_check
      _
    $region47: #{tpu_custom_call.1} parent=1 // pred_check_branch
      %142 = sbr.rel (0) target = $region49
    $region48: #{tpu_custom_call.1} parent=1 // pred_region
      %s144 = ssub.s32 128, 128
      %145 = vsyncadd [#allocation25], %s144
      %s147 = sshll.u32 [#allocation24], 4
      %s148 = int_to_ptr.vmem [resolvable:$true] %s147
      %150 = dma.hbm_to_vmem [thread:$0]  %s11, 128, %s148, [#allocation25]
    $region49: #{tpu_custom_call.1} parent=1 // pred_fallthru
      _
    // Predicated region
    $region50: #{tpu_custom_call.1} parent=1 // pred_check
      _
    $region51: #{tpu_custom_call.1} parent=1 // pred_check_branch
      %152 = sbr.rel (0) target = $region53
    $region52: #{tpu_custom_call.1} parent=1 // pred_region
      %153 = dma.done [#allocation7], 256
    $region53: #{tpu_custom_call.1} parent=1 // pred_fallthru
      _
    // Predicated region
    $region54: #{tpu_custom_call.1} parent=1 // pred_check
      _
    $region55: #{tpu_custom_call.1} parent=1 // pred_check_branch
      %155 = sbr.rel (0) target = $region57
    $region56: #{tpu_custom_call.1} parent=1 // pred_region
      %156 = dma.done [#allocation10], 256
    $region57: #{tpu_custom_call.1} parent=1 // pred_fallthru
      _
    // Predicated region
    $region58: #{tpu_custom_call.1} parent=1 // pred_check
      _
    $region59: #{tpu_custom_call.1} parent=1 // pred_check_branch
      %158 = sbr.rel (0) target = $region61
    $region60: #{tpu_custom_call.1} parent=1 // pred_region
      %159 = dma.done [#allocation10], 512
    $region61: #{tpu_custom_call.1} parent=1 // pred_fallthru
      _
    // Predicated region
    $region62: #{tpu_custom_call.1} parent=1 // pred_check
      _
    $region63: #{tpu_custom_call.1} parent=1 // pred_check_branch
      %161 = sbr.rel (0) target = $region65
    $region64: #{tpu_custom_call.1} parent=1 // pred_region
      %162 = dma.done [#allocation13], 128
    $region65: #{tpu_custom_call.1} parent=1 // pred_fallthru
      _
    // Predicated region
    $region66: #{tpu_custom_call.1} parent=1 // pred_check
      _
    $region67: #{tpu_custom_call.1} parent=1 // pred_check_branch
      %164 = sbr.rel (0) target = $region69
    $region68: #{tpu_custom_call.1} parent=1 // pred_region
      %165 = dma.done [#allocation13], 128
    $region69: #{tpu_custom_call.1} parent=1 // pred_fallthru
      _
    // Predicated region
    $region70: #{tpu_custom_call.1} parent=1 // pred_check
      _
    $region71: #{tpu_custom_call.1} parent=1 // pred_check_branch
      %167 = sbr.rel (0) target = $region73
    $region72: #{tpu_custom_call.1} parent=1 // pred_region
      %168 = dma.done [#allocation16], 128
    $region73: #{tpu_custom_call.1} parent=1 // pred_fallthru
      _
    // Predicated region
    $region74: #{tpu_custom_call.1} parent=1 // pred_check
      _
    $region75: #{tpu_custom_call.1} parent=1 // pred_check_branch
      %170 = sbr.rel (0) target = $region77
    $region76: #{tpu_custom_call.1} parent=1 // pred_region
      %171 = dma.done [#allocation16], 128
    $region77: #{tpu_custom_call.1} parent=1 // pred_fallthru
      _
    // Predicated region
    $region78: #{tpu_custom_call.1} parent=1 // pred_check
      _
    $region79: #{tpu_custom_call.1} parent=1 // pred_check_branch
      %173 = sbr.rel (0) target = $region81
    $region80: #{tpu_custom_call.1} parent=1 // pred_region
      %174 = dma.done [#allocation19], 128
    $region81: #{tpu_custom_call.1} parent=1 // pred_fallthru
      _
    // Predicated region
    $region82: #{tpu_custom_call.1} parent=1 // pred_check
      _
    $region83: #{tpu_custom_call.1} parent=1 // pred_check_branch
      %176 = sbr.rel (0) target = $region85
    $region84: #{tpu_custom_call.1} parent=1 // pred_region
      %177 = dma.done [#allocation19], 128
    $region85: #{tpu_custom_call.1} parent=1 // pred_fallthru
      _
    // Predicated region
    $region86: #{tpu_custom_call.1} parent=1 // pred_check
      _
    $region87: #{tpu_custom_call.1} parent=1 // pred_check_branch
      %179 = sbr.rel (0) target = $region89
    $region88: #{tpu_custom_call.1} parent=1 // pred_region
      %180 = dma.done [#allocation22], 128
    $region89: #{tpu_custom_call.1} parent=1 // pred_fallthru
      _
    // Predicated region
    $region90: #{tpu_custom_call.1} parent=1 // pred_check
      _
    $region91: #{tpu_custom_call.1} parent=1 // pred_check_branch
      %182 = sbr.rel (0) target = $region93
    $region92: #{tpu_custom_call.1} parent=1 // pred_region
      %183 = dma.done [#allocation22], 128
    $region93: #{tpu_custom_call.1} parent=1 // pred_fallthru
      _
    // Predicated region
    $region94: #{tpu_custom_call.1} parent=1 // pred_check
      _
    $region95: #{tpu_custom_call.1} parent=1 // pred_check_branch
      %185 = sbr.rel (0) target = $region97
    $region96: #{tpu_custom_call.1} parent=1 // pred_region
      %186 = dma.done [#allocation25], 128
    $region97: #{tpu_custom_call.1} parent=1 // pred_fallthru
      _
    %v187 = vld [vmem:[#allocation11] sm:$0xff]
    %v188 = vld [vmem:[#allocation11 + $0x8] sm:$0xff]
    %v189 = vld [vmem:[#allocation11 + $0x10] sm:$0x1]
    %v190 = vld [vmem:[#allocation11 + $0x18] sm:$0x1]
    %v191 = vld [vmem:[#allocation12] sm:$0xff]
    %v192 = vld [vmem:[#allocation18] sm:$0xff]
    %v193 = vld [vmem:[#allocation14] sm:$0xff]
    %v194 = vld [vmem:[#allocation15] sm:$0xff]
    %v195 = vld [vmem:[#allocation17] sm:$0xff]
    %v196 = vld [vmem:[#allocation20] sm:$0xff]
    %v197 = vld [vmem:[#allocation21] sm:$0xff]
    %v198 = vld [vmem:[#allocation23] sm:$0xff]
    %v199 = vld [vmem:[#allocation24] sm:$0xff]
    %vm200 = vcmask 138240
    %201 = vst.msk [vmem:[#allocation2] sm:$0xff] %vm200, 0.0
    %vm202 = vcmask 277640
    %203 = vst.msk [vmem:[#allocation2 + $0x10] sm:$0xff] %vm202, 0.0
    %204 = vst [vmem:[#allocation2] sm:$0xf0] 0.0
    %205 = vst [vmem:[#allocation2 + $0x8] sm:$0xf0] 0.0
    %vm206 = vcmask 277508
    %207 = vst.msk [vmem:[#allocation2 + $0x10] sm:$0xf0] %vm206, 0.0
    %v208 = vld [vmem:[#allocation6] sm:$0xff]
    %v209 = vld [vmem:[#allocation6 + $0x8] sm:$0xff]
    %v210 = vld [vmem:[#allocation9] sm:$0xff]
    %v211 = vld [vmem:[#allocation9 + $0x8] sm:$0xff]
    %v212 = vadd.f32 %v208, %v210
    %v213 = vadd.f32 %v209, %v211
    %v214 = vmul.f32 %v212, 0.5
    %v215 = vmul.f32 %v213, 0.5
    %v216 = vmul.f32 %v212, 0.70710677
    %v217 = vmul.f32 %v213, 0.70710677
    %v218 = verf.f32.pop %v216
    %v219 = verf.f32.pop %v217
    %v220 = vadd.f32 %v218, 1.0
    %v221 = vadd.f32 %v219, 1.0
    %v222 = vmul.f32 %v214, %v220
    %v223 = vmul.f32 %v215, %v221
    %v225 = vcombine.high %v222, %v222
    %226 = vrot.lane.b32.xlu0 %v222, 17
    %v227 = vpop.permute.xlu0 %226
    %228 = vrot.lane.b32.xlu0 %v225, 17
    %v229 = vpop.permute.xlu0 %228
    %v230 = vsel %vm200, %v227, %v229
    %vm234 = vcmask 1043592
    %235 = vst.msk [vmem:[#allocation2] sm:$0xf] %vm234, %v227
    %236 = vst [vmem:[#allocation2 + $0x8] sm:$0xf] %v230
    %vm237 = vcmask 134144
    %238 = vst.msk [vmem:[#allocation2 + $0x10] sm:$0xf] %vm237, %v229
    %v239 = vld [vmem:[#allocation2] sm:$0xff]
    %v240 = vld [vmem:[#allocation2 + $0x8] sm:$0xff]
    %v241 = vlaneseq
    %v242 = vshrl.u32 %v241, 7
    %v243 = vsub.s32 0, %v242
    %v244 = vrot.slane %v187, %v243
    %v245 = vlaneseq
    %v246 = vshrl.u32 %v245, 7
    %v247 = vsub.s32 0, %v246
    %v248 = vrot.slane %v188, %v247
    %v249 = vmul.f32 %v239, %v244
    %v250 = vmul.f32 %v240, %v248
    %251 = vst [vmem:[#allocation3] sm:$0xff] %v249
    %252 = vst [vmem:[#allocation3 + $0x8] sm:$0xff] %v250
    %v253 = vld [vmem:[#allocation2] sm:$0xff]
    %v254 = vld [vmem:[#allocation2 + $0x8] sm:$0xff]
    %v255 = vld [vmem:[#allocation2 + $0x10] sm:$0xff]
    %259 = vrot.lane.b32.xlu0 %v253, 127
    %v260 = vpop.permute.xlu0 %259
    %261 = vrot.lane.b32.xlu0 %v254, 127
    %v262 = vpop.permute.xlu0 %261
    %263 = vrot.lane.b32.xlu0 %v255, 127
    %v264 = vpop.permute.xlu0 %263
    %vm265 = vcmask 1039360
    %v266 = vsel %vm265, %v260, %v262
    %v267 = vsel %vm265, %v262, %v264
    %270 = vst [vmem:[#allocation3 + $0x20] sm:$0xff] %v266
    %271 = vst [vmem:[#allocation3 + $0x28] sm:$0xff] %v267
    %v272 = vld [vmem:[#allocation2] sm:$0xff]
    %v273 = vld [vmem:[#allocation2 + $0x8] sm:$0xff]
    %v274 = vld [vmem:[#allocation2 + $0x10] sm:$0xff]
    %v275 = vlaneseq
    %v276 = vshrl.u32 %v275, 7
    %v277 = vsub.s32 2, %v276
    %v278 = vrot.slane %v187, %v277
    %v279 = vlaneseq
    %v280 = vshrl.u32 %v279, 7
    %v281 = vsub.s32 2, %v280
    %v282 = vrot.slane %v188, %v281
    %285 = vrot.lane.b32.xlu0 %v278, 2
    %v286 = vpop.permute.xlu0 %285
    %287 = vrot.lane.b32.xlu0 %v282, 2
    %v288 = vpop.permute.xlu0 %287
    %vm289 = vcmask 15360
    %v290 = vsel %vm289, %v286, %v288
    %v294 = vmul.f32 %v272, %v286
    %v295 = vmul.f32 %v273, %v290
    %v296 = vmul.f32 %v274, %v288
    %300 = vrot.lane.b32.xlu0 %v294, 126
    %v301 = vpop.permute.xlu0 %300
    %302 = vrot.lane.b32.xlu0 %v295, 126
    %v303 = vpop.permute.xlu0 %302
    %304 = vrot.lane.b32.xlu0 %v296, 126
    %v305 = vpop.permute.xlu0 %304
    %vm306 = vcmask 1031168
    %v307 = vsel %vm306, %v301, %v303
    %v308 = vsel %vm306, %v303, %v305
    %311 = vst [vmem:[#allocation3 + $0x40] sm:$0xff] %v307
    %312 = vst [vmem:[#allocation3 + $0x48] sm:$0xff] %v308
    %v313 = vld [vmem:[#allocation2] sm:$0xff]
    %v314 = vld [vmem:[#allocation2 + $0x8] sm:$0xff]
    %v315 = vld [vmem:[#allocation2 + $0x10] sm:$0xff]
    %v316 = vlaneseq
    %v317 = vshrl.u32 %v316, 7
    %v318 = vsub.s32 3, %v317
    %v319 = vrot.slane %v187, %v318
    %v320 = vlaneseq
    %v321 = vshrl.u32 %v320, 7
    %v322 = vsub.s32 3, %v321
    %v323 = vrot.slane %v188, %v322
    %326 = vrot.lane.b32.xlu0 %v319, 16
    %v327 = vpop.permute.xlu0 %326
    %328 = vrot.lane.b32.xlu0 %v323, 16
    %v329 = vpop.permute.xlu0 %328
    %vm330 = vcmask 130048
    %v331 = vsel %vm330, %v327, %v329
    %v335 = vmul.f32 %v313, %v327
    %v336 = vmul.f32 %v314, %v331
    %v337 = vmul.f32 %v315, %v329
    %341 = vrot.lane.b32.xlu0 %v335, 112
    %v342 = vpop.permute.xlu0 %341
    %343 = vrot.lane.b32.xlu0 %v336, 112
    %v344 = vpop.permute.xlu0 %343
    %345 = vrot.lane.b32.xlu0 %v337, 112
    %v346 = vpop.permute.xlu0 %345
    %vm347 = vcmask 916480
    %v348 = vsel %vm347, %v342, %v344
    %v349 = vsel %vm347, %v344, %v346
    %352 = vst [vmem:[#allocation3 + $0x60] sm:$0xff] %v348
    %353 = vst [vmem:[#allocation3 + $0x68] sm:$0xff] %v349
    %v354 = vld [vmem:[#allocation2] sm:$0xff]
    %v355 = vld [vmem:[#allocation2 + $0x8] sm:$0xff]
    %v356 = vld [vmem:[#allocation2 + $0x10] sm:$0xff]
    %360 = vrot.lane.b32.xlu0 %v354, 111
    %v361 = vpop.permute.xlu0 %360
    %362 = vrot.lane.b32.xlu0 %v355, 111
    %v363 = vpop.permute.xlu0 %362
    %364 = vrot.lane.b32.xlu0 %v356, 111
    %v365 = vpop.permute.xlu0 %364
    %vm366 = vcmask 908288
    %v367 = vsel %vm366, %v361, %v363
    %v368 = vsel %vm366, %v363, %v365
    %371 = vst [vmem:[#allocation3 + $0x80] sm:$0xff] %v367
    %372 = vst [vmem:[#allocation3 + $0x88] sm:$0xff] %v368
    %v373 = vld [vmem:[#allocation2] sm:$0xff]
    %v374 = vld [vmem:[#allocation2 + $0x8] sm:$0xff]
    %v375 = vld [vmem:[#allocation2 + $0x10] sm:$0xff]
    %v376 = vlaneseq
    %v377 = vshrl.u32 %v376, 7
    %v378 = vsub.s32 5, %v377
    %v379 = vrot.slane %v187, %v378
    %v380 = vlaneseq
    %v381 = vshrl.u32 %v380, 7
    %v382 = vsub.s32 5, %v381
    %v383 = vrot.slane %v188, %v382
    %386 = vrot.lane.b32.xlu0 %v379, 18
    %v387 = vpop.permute.xlu0 %386
    %388 = vrot.lane.b32.xlu0 %v383, 18
    %v389 = vpop.permute.xlu0 %388
    %vm390 = vcmask 146432
    %v391 = vsel %vm390, %v387, %v389
    %v395 = vmul.f32 %v373, %v387
    %v396 = vmul.f32 %v374, %v391
    %v397 = vmul.f32 %v375, %v389
    %401 = vrot.lane.b32.xlu0 %v395, 110
    %v402 = vpop.permute.xlu0 %401
    %403 = vrot.lane.b32.xlu0 %v396, 110
    %v404 = vpop.permute.xlu0 %403
    %405 = vrot.lane.b32.xlu0 %v397, 110
    %v406 = vpop.permute.xlu0 %405
    %vm407 = vcmask 900096
    %v408 = vsel %vm407, %v402, %v404
    %v409 = vsel %vm407, %v404, %v406
    %412 = vst [vmem:[#allocation3 + $0xa0] sm:$0xff] %v408
    %413 = vst [vmem:[#allocation3 + $0xa8] sm:$0xff] %v409
    %v414 = vld [vmem:[#allocation2] sm:$0xff]
    %v415 = vld [vmem:[#allocation2 + $0x8] sm:$0xff]
    %v416 = vld [vmem:[#allocation2 + $0x10] sm:$0xff]
    %v417 = vlaneseq
    %v418 = vshrl.u32 %v417, 7
    %v419 = vsub.s32 6, %v418
    %v420 = vrot.slane %v187, %v419
    %v421 = vlaneseq
    %v422 = vshrl.u32 %v421, 7
    %v423 = vsub.s32 6, %v422
    %v424 = vrot.slane %v188, %v423
    %427 = vrot.lane.b32.xlu0 %v420, 32
    %v428 = vpop.permute.xlu0 %427
    %429 = vrot.lane.b32.xlu0 %v424, 32
    %v430 = vpop.permute.xlu0 %429
    %vm431 = vcmask 261120
    %v432 = vsel %vm431, %v428, %v430
    %v436 = vmul.f32 %v414, %v428
    %v437 = vmul.f32 %v415, %v432
    %v438 = vmul.f32 %v416, %v430
    %442 = vrot.lane.b32.xlu0 %v436, 96
    %v443 = vpop.permute.xlu0 %442
    %444 = vrot.lane.b32.xlu0 %v437, 96
    %v445 = vpop.permute.xlu0 %444
    %446 = vrot.lane.b32.xlu0 %v438, 96
    %v447 = vpop.permute.xlu0 %446
    %vm448 = vcmask 785408
    %v449 = vsel %vm448, %v443, %v445
    %v450 = vsel %vm448, %v445, %v447
    %453 = vst [vmem:[#allocation3 + $0xc0] sm:$0xff] %v449
    %454 = vst [vmem:[#allocation3 + $0xc8] sm:$0xff] %v450
    %v455 = vld [vmem:[#allocation2] sm:$0xff]
    %v456 = vld [vmem:[#allocation2 + $0x8] sm:$0xff]
    %v457 = vld [vmem:[#allocation2 + $0x10] sm:$0xff]
    %461 = vrot.lane.b32.xlu0 %v455, 95
    %v462 = vpop.permute.xlu0 %461
    %463 = vrot.lane.b32.xlu0 %v456, 95
    %v464 = vpop.permute.xlu0 %463
    %465 = vrot.lane.b32.xlu0 %v457, 95
    %v466 = vpop.permute.xlu0 %465
    %vm467 = vcmask 777216
    %v468 = vsel %vm467, %v462, %v464
    %v469 = vsel %vm467, %v464, %v466
    %472 = vst [vmem:[#allocation3 + $0xe0] sm:$0xff] %v468
    %473 = vst [vmem:[#allocation3 + $0xe8] sm:$0xff] %v469
    %v474 = vld [vmem:[#allocation2] sm:$0xff]
    %v475 = vld [vmem:[#allocation2 + $0x8] sm:$0xff]
    %v476 = vld [vmem:[#allocation2 + $0x10] sm:$0xff]
    %v477 = vlaneseq
    %v478 = vshrl.u32 %v477, 7
    %v479 = vsub.s32 0, %v478
    %v480 = vrot.slane %v189, %v479
    %v481 = vlaneseq
    %v482 = vshrl.u32 %v481, 7
    %v483 = vsub.s32 0, %v482
    %v484 = vrot.slane %v190, %v483
    %487 = vrot.lane.b32.xlu0 %v480, 34
    %v488 = vpop.permute.xlu0 %487
    %489 = vrot.lane.b32.xlu0 %v484, 34
    %v490 = vpop.permute.xlu0 %489
    %vm491 = vcmask 277504
    %v492 = vsel %vm491, %v488, %v490
    %v496 = vmul.f32 %v474, %v488
    %v497 = vmul.f32 %v475, %v492
    %v498 = vmul.f32 %v476, %v490
    %502 = vrot.lane.b32.xlu0 %v496, 94
    %v503 = vpop.permute.xlu0 %502
    %504 = vrot.lane.b32.xlu0 %v497, 94
    %v505 = vpop.permute.xlu0 %504
    %506 = vrot.lane.b32.xlu0 %v498, 94
    %v507 = vpop.permute.xlu0 %506
    %vm508 = vcmask 769024
    %v509 = vsel %vm508, %v503, %v505
    %v510 = vsel %vm508, %v505, %v507
    %513 = vst [vmem:[#allocation3 + $0x100] sm:$0xff] %v509
    %514 = vst [vmem:[#allocation3 + $0x108] sm:$0xff] %v510
    %v516 = vcombine.high %v223, %v223
    %517 = vrot.lane.b32.xlu0 %v223, 17
    %v518 = vpop.permute.xlu0 %517
    %519 = vrot.lane.b32.xlu0 %v516, 17
    %v520 = vpop.permute.xlu0 %519
    %v521 = vsel %vm200, %v518, %v520
    %525 = vst.msk [vmem:[#allocation2] sm:$0xf] %vm234, %v518
    %526 = vst [vmem:[#allocation2 + $0x8] sm:$0xf] %v521
    %527 = vst.msk [vmem:[#allocation2 + $0x10] sm:$0xf] %vm237, %v520
    %v528 = vld [vmem:[#allocation2] sm:$0xff]
    %v529 = vld [vmem:[#allocation2 + $0x8] sm:$0xff]
    %v530 = vmul.f32 %v528, %v244
    %v531 = vmul.f32 %v529, %v248
    %532 = vst [vmem:[#allocation3 + $0x10] sm:$0xff] %v530
    %533 = vst [vmem:[#allocation3 + $0x18] sm:$0xff] %v531
    %v534 = vld [vmem:[#allocation2] sm:$0xff]
    %v535 = vld [vmem:[#allocation2 + $0x8] sm:$0xff]
    %v536 = vld [vmem:[#allocation2 + $0x10] sm:$0xff]
    %540 = vrot.lane.b32.xlu0 %v534, 127
    %v541 = vpop.permute.xlu0 %540
    %542 = vrot.lane.b32.xlu0 %v535, 127
    %v543 = vpop.permute.xlu0 %542
    %544 = vrot.lane.b32.xlu0 %v536, 127
    %v545 = vpop.permute.xlu0 %544
    %v546 = vsel %vm265, %v541, %v543
    %v547 = vsel %vm265, %v543, %v545
    %550 = vst [vmem:[#allocation3 + $0x30] sm:$0xff] %v546
    %551 = vst [vmem:[#allocation3 + $0x38] sm:$0xff] %v547
    %v552 = vld [vmem:[#allocation2] sm:$0xff]
    %v553 = vld [vmem:[#allocation2 + $0x8] sm:$0xff]
    %v554 = vld [vmem:[#allocation2 + $0x10] sm:$0xff]
    %v555 = vmul.f32 %v552, %v286
    %v556 = vmul.f32 %v553, %v290
    %v557 = vmul.f32 %v554, %v288
    %561 = vrot.lane.b32.xlu0 %v555, 126
    %v562 = vpop.permute.xlu0 %561
    %563 = vrot.lane.b32.xlu0 %v556, 126
    %v564 = vpop.permute.xlu0 %563
    %565 = vrot.lane.b32.xlu0 %v557, 126
    %v566 = vpop.permute.xlu0 %565
    %v567 = vsel %vm306, %v562, %v564
    %v568 = vsel %vm306, %v564, %v566
    %571 = vst [vmem:[#allocation3 + $0x50] sm:$0xff] %v567
    %572 = vst [vmem:[#allocation3 + $0x58] sm:$0xff] %v568
    %v573 = vld [vmem:[#allocation2] sm:$0xff]
    %v574 = vld [vmem:[#allocation2 + $0x8] sm:$0xff]
    %v575 = vld [vmem:[#allocation2 + $0x10] sm:$0xff]
    %v576 = vmul.f32 %v573, %v327
    %v577 = vmul.f32 %v574, %v331
    %v578 = vmul.f32 %v575, %v329
    %582 = vrot.lane.b32.xlu0 %v576, 112
    %v583 = vpop.permute.xlu0 %582
    %584 = vrot.lane.b32.xlu0 %v577, 112
    %v585 = vpop.permute.xlu0 %584
    %586 = vrot.lane.b32.xlu0 %v578, 112
    %v587 = vpop.permute.xlu0 %586
    %v588 = vsel %vm347, %v583, %v585
    %v589 = vsel %vm347, %v585, %v587
    %592 = vst [vmem:[#allocation3 + $0x70] sm:$0xff] %v588
    %593 = vst [vmem:[#allocation3 + $0x78] sm:$0xff] %v589
    %v594 = vld [vmem:[#allocation2] sm:$0xff]
    %v595 = vld [vmem:[#allocation2 + $0x8] sm:$0xff]
    %v596 = vld [vmem:[#allocation2 + $0x10] sm:$0xff]
    %600 = vrot.lane.b32.xlu0 %v594, 111
    %v601 = vpop.permute.xlu0 %600
    %602 = vrot.lane.b32.xlu0 %v595, 111
    %v603 = vpop.permute.xlu0 %602
    %604 = vrot.lane.b32.xlu0 %v596, 111
    %v605 = vpop.permute.xlu0 %604
    %v606 = vsel %vm366, %v601, %v603
    %v607 = vsel %vm366, %v603, %v605
    %610 = vst [vmem:[#allocation3 + $0x90] sm:$0xff] %v606
    %611 = vst [vmem:[#allocation3 + $0x98] sm:$0xff] %v607
    %v612 = vld [vmem:[#allocation2] sm:$0xff]
    %v613 = vld [vmem:[#allocation2 + $0x8] sm:$0xff]
    %v614 = vld [vmem:[#allocation2 + $0x10] sm:$0xff]
    %v615 = vmul.f32 %v612, %v387
    %v616 = vmul.f32 %v613, %v391
    %v617 = vmul.f32 %v614, %v389
    %621 = vrot.lane.b32.xlu0 %v615, 110
    %v622 = vpop.permute.xlu0 %621
    %623 = vrot.lane.b32.xlu0 %v616, 110
    %v624 = vpop.permute.xlu0 %623
    %625 = vrot.lane.b32.xlu0 %v617, 110
    %v626 = vpop.permute.xlu0 %625
    %v627 = vsel %vm407, %v622, %v624
    %v628 = vsel %vm407, %v624, %v626
    %631 = vst [vmem:[#allocation3 + $0xb0] sm:$0xff] %v627
    %632 = vst [vmem:[#allocation3 + $0xb8] sm:$0xff] %v628
    %v633 = vld [vmem:[#allocation2] sm:$0xff]
    %v634 = vld [vmem:[#allocation2 + $0x8] sm:$0xff]
    %v635 = vld [vmem:[#allocation2 + $0x10] sm:$0xff]
    %v636 = vmul.f32 %v633, %v428
    %v637 = vmul.f32 %v634, %v432
    %v638 = vmul.f32 %v635, %v430
    %642 = vrot.lane.b32.xlu0 %v636, 96
    %v643 = vpop.permute.xlu0 %642
    %644 = vrot.lane.b32.xlu0 %v637, 96
    %v645 = vpop.permute.xlu0 %644
    %646 = vrot.lane.b32.xlu0 %v638, 96
    %v647 = vpop.permute.xlu0 %646
    %v648 = vsel %vm448, %v643, %v645
    %v649 = vsel %vm448, %v645, %v647
    %652 = vst [vmem:[#allocation3 + $0xd0] sm:$0xff] %v648
    %653 = vst [vmem:[#allocation3 + $0xd8] sm:$0xff] %v649
    %v654 = vld [vmem:[#allocation2] sm:$0xff]
    %v655 = vld [vmem:[#allocation2 + $0x8] sm:$0xff]
    %v656 = vld [vmem:[#allocation2 + $0x10] sm:$0xff]
    %660 = vrot.lane.b32.xlu0 %v654, 95
    %v661 = vpop.permute.xlu0 %660
    %662 = vrot.lane.b32.xlu0 %v655, 95
    %v663 = vpop.permute.xlu0 %662
    %664 = vrot.lane.b32.xlu0 %v656, 95
    %v665 = vpop.permute.xlu0 %664
    %v666 = vsel %vm467, %v661, %v663
    %v667 = vsel %vm467, %v663, %v665
    %670 = vst [vmem:[#allocation3 + $0xf0] sm:$0xff] %v666
    %671 = vst [vmem:[#allocation3 + $0xf8] sm:$0xff] %v667
    %v672 = vld [vmem:[#allocation2] sm:$0xff]
    %v673 = vld [vmem:[#allocation2 + $0x8] sm:$0xff]
    %v674 = vld [vmem:[#allocation2 + $0x10] sm:$0xff]
    %v675 = vmul.f32 %v672, %v488
    %v676 = vmul.f32 %v673, %v492
    %v677 = vmul.f32 %v674, %v490
    %681 = vrot.lane.b32.xlu0 %v675, 94
    %v682 = vpop.permute.xlu0 %681
    %683 = vrot.lane.b32.xlu0 %v676, 94
    %v684 = vpop.permute.xlu0 %683
    %685 = vrot.lane.b32.xlu0 %v677, 94
    %v686 = vpop.permute.xlu0 %685
    %v687 = vsel %vm508, %v682, %v684
    %v688 = vsel %vm508, %v684, %v686
    %691 = vst [vmem:[#allocation3 + $0x110] sm:$0xff] %v687
    %692 = vst [vmem:[#allocation3 + $0x118] sm:$0xff] %v688
    %v693 = vld [vmem:[#allocation3] sm:$0xff]
    %v694 = vld [vmem:[#allocation3 + $0x8] sm:$0xff]
    %v695 = vld [vmem:[#allocation3 + $0x10] sm:$0xff]
    %v696 = vld [vmem:[#allocation3 + $0x18] sm:$0xff]
    %v697 = vld [vmem:[#allocation3 + $0x20] sm:$0xff]
    %v698 = vld [vmem:[#allocation3 + $0x28] sm:$0xff]
    %v699 = vld [vmem:[#allocation3 + $0x30] sm:$0xff]
    %v700 = vld [vmem:[#allocation3 + $0x38] sm:$0xff]
    %v701 = vld [vmem:[#allocation3 + $0x40] sm:$0xff]
    %v702 = vld [vmem:[#allocation3 + $0x48] sm:$0xff]
    %v703 = vld [vmem:[#allocation3 + $0x50] sm:$0xff]
    %v704 = vld [vmem:[#allocation3 + $0x58] sm:$0xff]
    %v705 = vld [vmem:[#allocation3 + $0x60] sm:$0xff]
    %v706 = vld [vmem:[#allocation3 + $0x68] sm:$0xff]
    %v707 = vld [vmem:[#allocation3 + $0x70] sm:$0xff]
    %v708 = vld [vmem:[#allocation3 + $0x78] sm:$0xff]
    %v709 = vld [vmem:[#allocation3 + $0x80] sm:$0xff]
    %v710 = vld [vmem:[#allocation3 + $0x88] sm:$0xff]
    %v711 = vld [vmem:[#allocation3 + $0x90] sm:$0xff]
    %v712 = vld [vmem:[#allocation3 + $0x98] sm:$0xff]
    %v713 = vld [vmem:[#allocation3 + $0xa0] sm:$0xff]
    %v714 = vld [vmem:[#allocation3 + $0xa8] sm:$0xff]
    %v715 = vld [vmem:[#allocation3 + $0xb0] sm:$0xff]
    %v716 = vld [vmem:[#allocation3 + $0xb8] sm:$0xff]
    %v717 = vld [vmem:[#allocation3 + $0xc0] sm:$0xff]
    %v718 = vld [vmem:[#allocation3 + $0xc8] sm:$0xff]
    %v719 = vld [vmem:[#allocation3 + $0xd0] sm:$0xff]
    %v720 = vld [vmem:[#allocation3 + $0xd8] sm:$0xff]
    %v721 = vld [vmem:[#allocation3 + $0xe0] sm:$0xff]
    %v722 = vld [vmem:[#allocation3 + $0xe8] sm:$0xff]
    %v723 = vld [vmem:[#allocation3 + $0xf0] sm:$0xff]
    %v724 = vld [vmem:[#allocation3 + $0xf8] sm:$0xff]
    %v725 = vld [vmem:[#allocation3 + $0x100] sm:$0xff]
    %v726 = vld [vmem:[#allocation3 + $0x108] sm:$0xff]
    %v727 = vld [vmem:[#allocation3 + $0x110] sm:$0xff]
    %v728 = vld [vmem:[#allocation3 + $0x118] sm:$0xff]
    %730 = vset.pattern.permute.xlu0 0
    %731 = vperm.xlu0 %730, %v193
    %v732 = vpop.permute.xlu0 %731
    %vm734 = vcmask 588800
    %v736 = vsel %vm734, %v191, 0
    %738 = vmatprep.subr.mxu0 %v694
    %739 = vmatpush1.msra.mxu0 %v693
    %740 = vmatprep.subr.mxu0 %v698
    %741 = vmatpush1.msra.mxu0 %v697
    %742 = vmatprep.subr.mxu0 %v702
    %743 = vmatpush1.msra.mxu0 %v701
    %744 = vmatprep.subr.mxu0 %v706
    %745 = vmatpush1.msra.mxu0 %v705
    %746 = vmatprep.subr.mxu0 %v710
    %747 = vmatpush1.msra.mxu0 %v709
    %748 = vmatprep.subr.mxu0 %v714
    %749 = vmatpush1.msra.mxu0 %v713
    %750 = vmatprep.subr.mxu0 %v718
    %751 = vmatpush1.msra.mxu0 %v717
    %752 = vmatprep.subr.mxu0 %v722
    %753 = vmatpush1.msra.mxu0 %v721
    %754 = vmatprep.subr.mxu0 %v726
    %755 = vmatpush1.msra.mxu0 %v725
    %756 = vmatprep.subr.mxu0 0.0
    %757 = vmatpush1.msra.mxu0 0.0
    %758 = vmatprep.subr.mxu0 0.0
    %759 = vmatpush1.msra.mxu0 0.0
    %760 = vmatprep.subr.mxu0 0.0
    %761 = vmatpush1.msra.mxu0 0.0
    %762 = vmatprep.subr.mxu0 0.0
    %763 = vmatpush1.msra.mxu0 0.0
    %764 = vmatprep.subr.mxu0 0.0
    %765 = vmatpush1.msra.mxu0 0.0
    %766 = vmatprep.subr.mxu0 0.0
    %767 = vmatpush1.msra.mxu0 0.0
    %768 = vmatprep.subr.mxu0 0.0
    %769 = vmatpush1.msra.mxu0 0.0
    %770 = vmatprep.subr.mxu0 0.0
    %771 = vmatpush1.msra.mxu0 0.0
    %772 = vmatprep.subr.mxu0 0.0
    %773 = vmatpush1.msra.mxu0 0.0
    %774 = vmatprep.subr.mxu0 0.0
    %775 = vmatpush1.msra.mxu0 0.0
    %776 = vmatprep.subr.mxu0 0.0
    %777 = vmatpush1.msra.mxu0 0.0
    %778 = vmatprep.subr.mxu0 0.0
    %779 = vmatpush1.msra.mxu0 0.0
    %780 = vmatprep.subr.mxu0 0.0
    %781 = vmatpush1.msra.mxu0 0.0
    %782 = vmatprep.subr.mxu0 0.0
    %783 = vmatpush1.msra.mxu0 0.0
    %784 = vmatprep.subr.mxu0 0.0
    %785 = vmatpush1.msra.mxu0 0.0
    %786 = vmatprep.subr.mxu0 0.0
    %787 = vmatpush1.msra.mxu0 0.0
    %788 = vmatprep.subr.mxu0 0.0
    %789 = vmatpush1.msra.mxu0 0.0
    %790 = vmatprep.subr.mxu0 0.0
    %791 = vmatpush1.msra.mxu0 0.0
    %792 = vmatprep.subr.mxu0 0.0
    %793 = vmatpush1.msra.mxu0 0.0
    %794 = vmatprep.subr.mxu0 0.0
    %795 = vmatpush1.msra.mxu0 0.0
    %796 = vmatprep.subr.mxu0 0.0
    %797 = vmatpush1.msra.mxu0 0.0
    %798 = vmatprep.subr.mxu0 0.0
    %799 = vmatpush1.msra.mxu0 0.0
    %800 = vmatprep.subr.mxu0 0.0
    %801 = vmatpush1.msra.mxu0 0.0
    %802 = vmatprep.mubr.f32.mxu0 0.0
    %803 = vmatmul.mubr.f32.gmra.mrb[0].mxu0 %v736
    %v804 = vpop.f32.mrb[0].mxu0
    %v805 = vadd.f32 %v732, %v804
    %v806 = vpop.f32.mrb[0].mxu0
    %v807 = vadd.f32 %v732, %v806
    %808 = vdwg.mxu0
    %809 = vmatprep.subr.mxu0 %v696
    %810 = vmatpush1.msra.mxu0 %v695
    %811 = vmatprep.subr.mxu0 %v700
    %812 = vmatpush1.msra.mxu0 %v699
    %813 = vmatprep.subr.mxu0 %v704
    %814 = vmatpush1.msra.mxu0 %v703
    %815 = vmatprep.subr.mxu0 %v708
    %816 = vmatpush1.msra.mxu0 %v707
    %817 = vmatprep.subr.mxu0 %v712
    %818 = vmatpush1.msra.mxu0 %v711
    %819 = vmatprep.subr.mxu0 %v716
    %820 = vmatpush1.msra.mxu0 %v715
    %821 = vmatprep.subr.mxu0 %v720
    %822 = vmatpush1.msra.mxu0 %v719
    %823 = vmatprep.subr.mxu0 %v724
    %824 = vmatpush1.msra.mxu0 %v723
    %825 = vmatprep.subr.mxu0 %v728
    %826 = vmatpush1.msra.mxu0 %v727
    %827 = vmatprep.subr.mxu0 0.0
    %828 = vmatpush1.msra.mxu0 0.0
    %829 = vmatprep.subr.mxu0 0.0
    %830 = vmatpush1.msra.mxu0 0.0
    %831 = vmatprep.subr.mxu0 0.0
    %832 = vmatpush1.msra.mxu0 0.0
    %833 = vmatprep.subr.mxu0 0.0
    %834 = vmatpush1.msra.mxu0 0.0
    %835 = vmatprep.subr.mxu0 0.0
    %836 = vmatpush1.msra.mxu0 0.0
    %837 = vmatprep.subr.mxu0 0.0
    %838 = vmatpush1.msra.mxu0 0.0
    %839 = vmatprep.subr.mxu0 0.0
    %840 = vmatpush1.msra.mxu0 0.0
    %841 = vmatprep.subr.mxu0 0.0
    %842 = vmatpush1.msra.mxu0 0.0
    %843 = vmatprep.subr.mxu0 0.0
    %844 = vmatpush1.msra.mxu0 0.0
    %845 = vmatprep.subr.mxu0 0.0
    %846 = vmatpush1.msra.mxu0 0.0
    %847 = vmatprep.subr.mxu0 0.0
    %848 = vmatpush1.msra.mxu0 0.0
    %849 = vmatprep.subr.mxu0 0.0
    %850 = vmatpush1.msra.mxu0 0.0
    %851 = vmatprep.subr.mxu0 0.0
    %852 = vmatpush1.msra.mxu0 0.0
    %853 = vmatprep.subr.mxu0 0.0
    %854 = vmatpush1.msra.mxu0 0.0
    %855 = vmatprep.subr.mxu0 0.0
    %856 = vmatpush1.msra.mxu0 0.0
    %857 = vmatprep.subr.mxu0 0.0
    %858 = vmatpush1.msra.mxu0 0.0
    %859 = vmatprep.subr.mxu0 0.0
    %860 = vmatpush1.msra.mxu0 0.0
    %861 = vmatprep.subr.mxu0 0.0
    %862 = vmatpush1.msra.mxu0 0.0
    %863 = vmatprep.subr.mxu0 0.0
    %864 = vmatpush1.msra.mxu0 0.0
    %865 = vmatprep.subr.mxu0 0.0
    %866 = vmatpush1.msra.mxu0 0.0
    %867 = vmatprep.subr.mxu0 0.0
    %868 = vmatpush1.msra.mxu0 0.0
    %869 = vmatprep.subr.mxu0 0.0
    %870 = vmatpush1.msra.mxu0 0.0
    %871 = vmatprep.subr.mxu0 0.0
    %872 = vmatpush1.msra.mxu0 0.0
    %873 = vmatprep.mubr.f32.mxu0 0.0
    %874 = vmatmul.mubr.f32.gmra.mrb[0].mxu0 %v736
    %v875 = vpop.f32.mrb[0].mxu0
    %v876 = vadd.f32 %v732, %v875
    %v877 = vpop.f32.mrb[0].mxu0
    %v878 = vadd.f32 %v732, %v877
    %879 = vdwg.mxu0
    %880 = vst [vmem:[#allocation5] sm:$0xff] %v805
    %881 = vst [vmem:[#allocation5 + $0x8] sm:$0xff] %v807
    %882 = vst [vmem:[#allocation5 + $0x10] sm:$0xff] %v876
    %883 = vst [vmem:[#allocation5 + $0x18] sm:$0xff] %v878
    %v884 = vld [vmem:[#allocation5] sm:$0xff]
    %v885 = vld [vmem:[#allocation5 + $0x8] sm:$0xff]
    %v886 = vadd.f32 %v884, %v885
    %887 = vadd.xlane.f32.xlu0 %v886
    %v888 = vpop.xlane.xlu0 %887
    %v889 = vmul.f32 %v884, %v884
    %v890 = vmul.f32 %v885, %v885
    %v891 = vadd.f32 %v889, %v890
    %892 = vadd.xlane.f32.xlu0 %v891
    %v893 = vpop.xlane.xlu0 %892
    %vm894 = vcmask 64512
    %v896 = vsel %vm894, %v199, 0
    %898 = vmatprep.subr.mxu0 0.0
    %899 = vmatpush1.msra.mxu0 %v888
    %900 = vmatprep.subr.mxu0 0.0
    %901 = vmatpush1.msra.mxu0 0.0
    %902 = vmatprep.subr.mxu0 0.0
    %903 = vmatpush1.msra.mxu0 0.0
    %904 = vmatprep.subr.mxu0 0.0
    %905 = vmatpush1.msra.mxu0 0.0
    %906 = vmatprep.subr.mxu0 0.0
    %907 = vmatpush1.msra.mxu0 0.0
    %908 = vmatprep.subr.mxu0 0.0
    %909 = vmatpush1.msra.mxu0 0.0
    %910 = vmatprep.subr.mxu0 0.0
    %911 = vmatpush1.msra.mxu0 0.0
    %912 = vmatprep.subr.mxu0 0.0
    %913 = vmatpush1.msra.mxu0 0.0
    %914 = vmatprep.subr.mxu0 0.0
    %915 = vmatpush1.msra.mxu0 0.0
    %916 = vmatprep.subr.mxu0 0.0
    %917 = vmatpush1.msra.mxu0 0.0
    %918 = vmatprep.subr.mxu0 0.0
    %919 = vmatpush1.msra.mxu0 0.0
    %920 = vmatprep.subr.mxu0 0.0
    %921 = vmatpush1.msra.mxu0 0.0
    %922 = vmatprep.subr.mxu0 0.0
    %923 = vmatpush1.msra.mxu0 0.0
    %924 = vmatprep.subr.mxu0 0.0
    %925 = vmatpush1.msra.mxu0 0.0
    %926 = vmatprep.subr.mxu0 0.0
    %927 = vmatpush1.msra.mxu0 0.0
    %928 = vmatprep.subr.mxu0 0.0
    %929 = vmatpush1.msra.mxu0 0.0
    %930 = vmatprep.subr.mxu0 0.0
    %931 = vmatpush1.msra.mxu0 0.0
    %932 = vmatprep.subr.mxu0 0.0
    %933 = vmatpush1.msra.mxu0 0.0
    %934 = vmatprep.subr.mxu0 0.0
    %935 = vmatpush1.msra.mxu0 0.0
    %936 = vmatprep.subr.mxu0 0.0
    %937 = vmatpush1.msra.mxu0 0.0
    %938 = vmatprep.subr.mxu0 0.0
    %939 = vmatpush1.msra.mxu0 0.0
    %940 = vmatprep.subr.mxu0 0.0
    %941 = vmatpush1.msra.mxu0 0.0
    %942 = vmatprep.subr.mxu0 0.0
    %943 = vmatpush1.msra.mxu0 0.0
    %944 = vmatprep.subr.mxu0 0.0
    %945 = vmatpush1.msra.mxu0 0.0
    %946 = vmatprep.subr.mxu0 0.0
    %947 = vmatpush1.msra.mxu0 0.0
    %948 = vmatprep.subr.mxu0 0.0
    %949 = vmatpush1.msra.mxu0 0.0
    %950 = vmatprep.subr.mxu0 0.0
    %951 = vmatpush1.msra.mxu0 0.0
    %952 = vmatprep.subr.mxu0 0.0
    %953 = vmatpush1.msra.mxu0 0.0
    %954 = vmatprep.subr.mxu0 0.0
    %955 = vmatpush1.msra.mxu0 0.0
    %956 = vmatprep.subr.mxu0 0.0
    %957 = vmatpush1.msra.mxu0 0.0
    %958 = vmatprep.subr.mxu0 0.0
    %959 = vmatpush1.msra.mxu0 0.0
    %960 = vmatprep.subr.mxu0 0.0
    %961 = vmatpush1.msra.mxu0 0.0
    %962 = vmatprep.mubr.f32.mxu0 0.0
    %963 = vmatmul.mubr.f32.gmra.mrb[0].mxu0 %v896
    %v964 = vpop.f32.mrb[0].mxu0
    %v965 = vadd.f32 0.0, %v964
    %v966 = vpop.f32.mrb[0].mxu0
    %967 = vdwg.mxu0
    %v968 = vmul.f32 %v965, 0.0009765625
    %969 = vmatprep.subr.mxu0 0.0
    %970 = vmatpush1.msra.mxu0 %v893
    %971 = vmatprep.subr.mxu0 0.0
    %972 = vmatpush1.msra.mxu0 0.0
    %973 = vmatprep.subr.mxu0 0.0
    %974 = vmatpush1.msra.mxu0 0.0
    %975 = vmatprep.subr.mxu0 0.0
    %976 = vmatpush1.msra.mxu0 0.0
    %977 = vmatprep.subr.mxu0 0.0
    %978 = vmatpush1.msra.mxu0 0.0
    %979 = vmatprep.subr.mxu0 0.0
    %980 = vmatpush1.msra.mxu0 0.0
    %981 = vmatprep.subr.mxu0 0.0
    %982 = vmatpush1.msra.mxu0 0.0
    %983 = vmatprep.subr.mxu0 0.0
    %984 = vmatpush1.msra.mxu0 0.0
    %985 = vmatprep.subr.mxu0 0.0
    %986 = vmatpush1.msra.mxu0 0.0
    %987 = vmatprep.subr.mxu0 0.0
    %988 = vmatpush1.msra.mxu0 0.0
    %989 = vmatprep.subr.mxu0 0.0
    %990 = vmatpush1.msra.mxu0 0.0
    %991 = vmatprep.subr.mxu0 0.0
    %992 = vmatpush1.msra.mxu0 0.0
    %993 = vmatprep.subr.mxu0 0.0
    %994 = vmatpush1.msra.mxu0 0.0
    %995 = vmatprep.subr.mxu0 0.0
    %996 = vmatpush1.msra.mxu0 0.0
    %997 = vmatprep.subr.mxu0 0.0
    %998 = vmatpush1.msra.mxu0 0.0
    %999 = vmatprep.subr.mxu0 0.0
    %1000 = vmatpush1.msra.mxu0 0.0
    %1001 = vmatprep.subr.mxu0 0.0
    %1002 = vmatpush1.msra.mxu0 0.0
    %1003 = vmatprep.subr.mxu0 0.0
    %1004 = vmatpush1.msra.mxu0 0.0
    %1005 = vmatprep.subr.mxu0 0.0
    %1006 = vmatpush1.msra.mxu0 0.0
    %1007 = vmatprep.subr.mxu0 0.0
    %1008 = vmatpush1.msra.mxu0 0.0
    %1009 = vmatprep.subr.mxu0 0.0
    %1010 = vmatpush1.msra.mxu0 0.0
    %1011 = vmatprep.subr.mxu0 0.0
    %1012 = vmatpush1.msra.mxu0 0.0
    %1013 = vmatprep.subr.mxu0 0.0
    %1014 = vmatpush1.msra.mxu0 0.0
    %1015 = vmatprep.subr.mxu0 0.0
    %1016 = vmatpush1.msra.mxu0 0.0
    %1017 = vmatprep.subr.mxu0 0.0
    %1018 = vmatpush1.msra.mxu0 0.0
    %1019 = vmatprep.subr.mxu0 0.0
    %1020 = vmatpush1.msra.mxu0 0.0
    %1021 = vmatprep.subr.mxu0 0.0
    %1022 = vmatpush1.msra.mxu0 0.0
    %1023 = vmatprep.subr.mxu0 0.0
    %1024 = vmatpush1.msra.mxu0 0.0
    %1025 = vmatprep.subr.mxu0 0.0
    %1026 = vmatpush1.msra.mxu0 0.0
    %1027 = vmatprep.subr.mxu0 0.0
    %1028 = vmatpush1.msra.mxu0 0.0
    %1029 = vmatprep.subr.mxu0 0.0
    %1030 = vmatpush1.msra.mxu0 0.0
    %1031 = vmatprep.subr.mxu0 0.0
    %1032 = vmatpush1.msra.mxu0 0.0
    %1033 = vmatprep.mubr.f32.mxu0 0.0
    %1034 = vmatmul.mubr.f32.gmra.mrb[0].mxu0 %v896
    %v1035 = vpop.f32.mrb[0].mxu0
    %v1036 = vadd.f32 0.0, %v1035
    %v1037 = vpop.f32.mrb[0].mxu0
    %1038 = vdwg.mxu0
    %v1039 = vmul.f32 %v1036, 0.0009765625
    %v1040 = vmul.f32 %v968, %v968
    %v1041 = vsub.f32 %v1039, %v1040
    %v1042 = vadd.f32 %v1041, 1e-05
    %v1043 = vrsqrt.pop %v1042
    %1045 = vset.pattern.permute.xlu0 0
    %1046 = vperm.xlu0 %1045, %v968
    %v1047 = vpop.permute.xlu0 %1046
    %v1049 = vsub.f32 %v884, %v1047
    %v1050 = vsub.f32 %v885, %v1047
    %v1051 = vmul.f32 %v1043, %v194
    %1053 = vset.pattern.permute.xlu0 0
    %1054 = vperm.xlu0 %1053, %v1051
    %v1055 = vpop.permute.xlu0 %1054
    %v1057 = vmul.f32 %v1049, %v1055
    %v1058 = vmul.f32 %v1050, %v1055
    %1060 = vset.pattern.permute.xlu0 0
    %1061 = vperm.xlu0 %1060, %v195
    %v1062 = vpop.permute.xlu0 %1061
    %v1064 = vadd.f32 %v1057, %v1062
    %v1065 = vadd.f32 %v1058, %v1062
    %1068 = vrot.lane.b32.xlu0 %v1064, 17
    %v1069 = vpop.permute.xlu0 %1068
    %1070 = vrot.lane.b32.xlu0 %v1065, 17
    %v1071 = vpop.permute.xlu0 %1070
    %v1072 = vsel %vm200, %v1069, %v1071
    %vm1076 = vcmask 1047688
    %1077 = vst.msk [vmem:[#allocation2] sm:$0xff] %vm1076, %v1069
    %1078 = vst [vmem:[#allocation2 + $0x8] sm:$0xff] %v1072
    %1079 = vst.msk [vmem:[#allocation2 + $0x10] sm:$0xff] %vm200, %v1071
    %v1080 = vld [vmem:[#allocation2] sm:$0xff]
    %v1081 = vld [vmem:[#allocation2 + $0x8] sm:$0xff]
    %v1082 = vmul.f32 %v1080, %v244
    %v1083 = vmul.f32 %v1081, %v248
    %1084 = vst [vmem:[#allocation4] sm:$0xff] %v1082
    %1085 = vst [vmem:[#allocation4 + $0x8] sm:$0xff] %v1083
    %v1086 = vld [vmem:[#allocation2] sm:$0xff]
    %v1087 = vld [vmem:[#allocation2 + $0x8] sm:$0xff]
    %v1088 = vld [vmem:[#allocation2 + $0x10] sm:$0xff]
    %1092 = vrot.lane.b32.xlu0 %v1086, 127
    %v1093 = vpop.permute.xlu0 %1092
    %1094 = vrot.lane.b32.xlu0 %v1087, 127
    %v1095 = vpop.permute.xlu0 %1094
    %1096 = vrot.lane.b32.xlu0 %v1088, 127
    %v1097 = vpop.permute.xlu0 %1096
    %v1098 = vsel %vm265, %v1093, %v1095
    %v1099 = vsel %vm265, %v1095, %v1097
    %1102 = vst [vmem:[#allocation4 + $0x20] sm:$0xff] %v1098
    %1103 = vst [vmem:[#allocation4 + $0x28] sm:$0xff] %v1099
    %v1104 = vld [vmem:[#allocation2] sm:$0xff]
    %v1105 = vld [vmem:[#allocation2 + $0x8] sm:$0xff]
    %v1106 = vld [vmem:[#allocation2 + $0x10] sm:$0xff]
    %v1107 = vmul.f32 %v1104, %v286
    %v1108 = vmul.f32 %v1105, %v290
    %v1109 = vmul.f32 %v1106, %v288
    %1113 = vrot.lane.b32.xlu0 %v1107, 126
    %v1114 = vpop.permute.xlu0 %1113
    %1115 = vrot.lane.b32.xlu0 %v1108, 126
    %v1116 = vpop.permute.xlu0 %1115
    %1117 = vrot.lane.b32.xlu0 %v1109, 126
    %v1118 = vpop.permute.xlu0 %1117
    %v1119 = vsel %vm306, %v1114, %v1116
    %v1120 = vsel %vm306, %v1116, %v1118
    %1123 = vst [vmem:[#allocation4 + $0x40] sm:$0xff] %v1119
    %1124 = vst [vmem:[#allocation4 + $0x48] sm:$0xff] %v1120
    %v1125 = vld [vmem:[#allocation2] sm:$0xff]
    %v1126 = vld [vmem:[#allocation2 + $0x8] sm:$0xff]
    %v1127 = vld [vmem:[#allocation2 + $0x10] sm:$0xff]
    %v1128 = vmul.f32 %v1125, %v327
    %v1129 = vmul.f32 %v1126, %v331
    %v1130 = vmul.f32 %v1127, %v329
    %1134 = vrot.lane.b32.xlu0 %v1128, 112
    %v1135 = vpop.permute.xlu0 %1134
    %1136 = vrot.lane.b32.xlu0 %v1129, 112
    %v1137 = vpop.permute.xlu0 %1136
    %1138 = vrot.lane.b32.xlu0 %v1130, 112
    %v1139 = vpop.permute.xlu0 %1138
    %v1140 = vsel %vm347, %v1135, %v1137
    %v1141 = vsel %vm347, %v1137, %v1139
    %1144 = vst [vmem:[#allocation4 + $0x60] sm:$0xff] %v1140
    %1145 = vst [vmem:[#allocation4 + $0x68] sm:$0xff] %v1141
    %v1146 = vld [vmem:[#allocation2] sm:$0xff]
    %v1147 = vld [vmem:[#allocation2 + $0x8] sm:$0xff]
    %v1148 = vld [vmem:[#allocation2 + $0x10] sm:$0xff]
    %1152 = vrot.lane.b32.xlu0 %v1146, 111
    %v1153 = vpop.permute.xlu0 %1152
    %1154 = vrot.lane.b32.xlu0 %v1147, 111
    %v1155 = vpop.permute.xlu0 %1154
    %1156 = vrot.lane.b32.xlu0 %v1148, 111
    %v1157 = vpop.permute.xlu0 %1156
    %v1158 = vsel %vm366, %v1153, %v1155
    %v1159 = vsel %vm366, %v1155, %v1157
    %1162 = vst [vmem:[#allocation4 + $0x80] sm:$0xff] %v1158
    %1163 = vst [vmem:[#allocation4 + $0x88] sm:$0xff] %v1159
    %v1164 = vld [vmem:[#allocation2] sm:$0xff]
    %v1165 = vld [vmem:[#allocation2 + $0x8] sm:$0xff]
    %v1166 = vld [vmem:[#allocation2 + $0x10] sm:$0xff]
    %v1167 = vmul.f32 %v1164, %v387
    %v1168 = vmul.f32 %v1165, %v391
    %v1169 = vmul.f32 %v1166, %v389
    %1173 = vrot.lane.b32.xlu0 %v1167, 110
    %v1174 = vpop.permute.xlu0 %1173
    %1175 = vrot.lane.b32.xlu0 %v1168, 110
    %v1176 = vpop.permute.xlu0 %1175
    %1177 = vrot.lane.b32.xlu0 %v1169, 110
    %v1178 = vpop.permute.xlu0 %1177
    %v1179 = vsel %vm407, %v1174, %v1176
    %v1180 = vsel %vm407, %v1176, %v1178
    %1183 = vst [vmem:[#allocation4 + $0xa0] sm:$0xff] %v1179
    %1184 = vst [vmem:[#allocation4 + $0xa8] sm:$0xff] %v1180
    %v1185 = vld [vmem:[#allocation2] sm:$0xff]
    %v1186 = vld [vmem:[#allocation2 + $0x8] sm:$0xff]
    %v1187 = vld [vmem:[#allocation2 + $0x10] sm:$0xff]
    %v1188 = vmul.f32 %v1185, %v428
    %v1189 = vmul.f32 %v1186, %v432
    %v1190 = vmul.f32 %v1187, %v430
    %1194 = vrot.lane.b32.xlu0 %v1188, 96
    %v1195 = vpop.permute.xlu0 %1194
    %1196 = vrot.lane.b32.xlu0 %v1189, 96
    %v1197 = vpop.permute.xlu0 %1196
    %1198 = vrot.lane.b32.xlu0 %v1190, 96
    %v1199 = vpop.permute.xlu0 %1198
    %v1200 = vsel %vm448, %v1195, %v1197
    %v1201 = vsel %vm448, %v1197, %v1199
    %1204 = vst [vmem:[#allocation4 + $0xc0] sm:$0xff] %v1200
    %1205 = vst [vmem:[#allocation4 + $0xc8] sm:$0xff] %v1201
    %v1206 = vld [vmem:[#allocation2] sm:$0xff]
    %v1207 = vld [vmem:[#allocation2 + $0x8] sm:$0xff]
    %v1208 = vld [vmem:[#allocation2 + $0x10] sm:$0xff]
    %1212 = vrot.lane.b32.xlu0 %v1206, 95
    %v1213 = vpop.permute.xlu0 %1212
    %1214 = vrot.lane.b32.xlu0 %v1207, 95
    %v1215 = vpop.permute.xlu0 %1214
    %1216 = vrot.lane.b32.xlu0 %v1208, 95
    %v1217 = vpop.permute.xlu0 %1216
    %v1218 = vsel %vm467, %v1213, %v1215
    %v1219 = vsel %vm467, %v1215, %v1217
    %1222 = vst [vmem:[#allocation4 + $0xe0] sm:$0xff] %v1218
    %1223 = vst [vmem:[#allocation4 + $0xe8] sm:$0xff] %v1219
    %v1224 = vld [vmem:[#allocation2] sm:$0xff]
    %v1225 = vld [vmem:[#allocation2 + $0x8] sm:$0xff]
    %v1226 = vld [vmem:[#allocation2 + $0x10] sm:$0xff]
    %v1227 = vmul.f32 %v1224, %v488
    %v1228 = vmul.f32 %v1225, %v492
    %v1229 = vmul.f32 %v1226, %v490
    %1233 = vrot.lane.b32.xlu0 %v1227, 94
    %v1234 = vpop.permute.xlu0 %1233
    %1235 = vrot.lane.b32.xlu0 %v1228, 94
    %v1236 = vpop.permute.xlu0 %1235
    %1237 = vrot.lane.b32.xlu0 %v1229, 94
    %v1238 = vpop.permute.xlu0 %1237
    %v1239 = vsel %vm508, %v1234, %v1236
    %v1240 = vsel %vm508, %v1236, %v1238
    %1243 = vst [vmem:[#allocation4 + $0x100] sm:$0xff] %v1239
    %1244 = vst [vmem:[#allocation4 + $0x108] sm:$0xff] %v1240
    %v1245 = vld [vmem:[#allocation5 + $0x10] sm:$0xff]
    %v1246 = vld [vmem:[#allocation5 + $0x18] sm:$0xff]
    %v1247 = vadd.f32 %v1245, %v1246
    %1248 = vadd.xlane.f32.xlu0 %v1247
    %v1249 = vpop.xlane.xlu0 %1248
    %v1250 = vmul.f32 %v1245, %v1245
    %v1251 = vmul.f32 %v1246, %v1246
    %v1252 = vadd.f32 %v1250, %v1251
    %1253 = vadd.xlane.f32.xlu0 %v1252
    %v1254 = vpop.xlane.xlu0 %1253
    %1255 = vmatprep.subr.mxu0 0.0
    %1256 = vmatpush1.msra.mxu0 %v1249
    %1257 = vmatprep.subr.mxu0 0.0
    %1258 = vmatpush1.msra.mxu0 0.0
    %1259 = vmatprep.subr.mxu0 0.0
    %1260 = vmatpush1.msra.mxu0 0.0
    %1261 = vmatprep.subr.mxu0 0.0
    %1262 = vmatpush1.msra.mxu0 0.0
    %1263 = vmatprep.subr.mxu0 0.0
    %1264 = vmatpush1.msra.mxu0 0.0
    %1265 = vmatprep.subr.mxu0 0.0
    %1266 = vmatpush1.msra.mxu0 0.0
    %1267 = vmatprep.subr.mxu0 0.0
    %1268 = vmatpush1.msra.mxu0 0.0
    %1269 = vmatprep.subr.mxu0 0.0
    %1270 = vmatpush1.msra.mxu0 0.0
    %1271 = vmatprep.subr.mxu0 0.0
    %1272 = vmatpush1.msra.mxu0 0.0
    %1273 = vmatprep.subr.mxu0 0.0
    %1274 = vmatpush1.msra.mxu0 0.0
    %1275 = vmatprep.subr.mxu0 0.0
    %1276 = vmatpush1.msra.mxu0 0.0
    %1277 = vmatprep.subr.mxu0 0.0
    %1278 = vmatpush1.msra.mxu0 0.0
    %1279 = vmatprep.subr.mxu0 0.0
    %1280 = vmatpush1.msra.mxu0 0.0
    %1281 = vmatprep.subr.mxu0 0.0
    %1282 = vmatpush1.msra.mxu0 0.0
    %1283 = vmatprep.subr.mxu0 0.0
    %1284 = vmatpush1.msra.mxu0 0.0
    %1285 = vmatprep.subr.mxu0 0.0
    %1286 = vmatpush1.msra.mxu0 0.0
    %1287 = vmatprep.subr.mxu0 0.0
    %1288 = vmatpush1.msra.mxu0 0.0
    %1289 = vmatprep.subr.mxu0 0.0
    %1290 = vmatpush1.msra.mxu0 0.0
    %1291 = vmatprep.subr.mxu0 0.0
    %1292 = vmatpush1.msra.mxu0 0.0
    %1293 = vmatprep.subr.mxu0 0.0
    %1294 = vmatpush1.msra.mxu0 0.0
    %1295 = vmatprep.subr.mxu0 0.0
    %1296 = vmatpush1.msra.mxu0 0.0
    %1297 = vmatprep.subr.mxu0 0.0
    %1298 = vmatpush1.msra.mxu0 0.0
    %1299 = vmatprep.subr.mxu0 0.0
    %1300 = vmatpush1.msra.mxu0 0.0
    %1301 = vmatprep.subr.mxu0 0.0
    %1302 = vmatpush1.msra.mxu0 0.0
    %1303 = vmatprep.subr.mxu0 0.0
    %1304 = vmatpush1.msra.mxu0 0.0
    %1305 = vmatprep.subr.mxu0 0.0
    %1306 = vmatpush1.msra.mxu0 0.0
    %1307 = vmatprep.subr.mxu0 0.0
    %1308 = vmatpush1.msra.mxu0 0.0
    %1309 = vmatprep.subr.mxu0 0.0
    %1310 = vmatpush1.msra.mxu0 0.0
    %1311 = vmatprep.subr.mxu0 0.0
    %1312 = vmatpush1.msra.mxu0 0.0
    %1313 = vmatprep.subr.mxu0 0.0
    %1314 = vmatpush1.msra.mxu0 0.0
    %1315 = vmatprep.subr.mxu0 0.0
    %1316 = vmatpush1.msra.mxu0 0.0
    %1317 = vmatprep.subr.mxu0 0.0
    %1318 = vmatpush1.msra.mxu0 0.0
    %1319 = vmatprep.mubr.f32.mxu0 0.0
    %1320 = vmatmul.mubr.f32.gmra.mrb[0].mxu0 %v896
    %v1321 = vpop.f32.mrb[0].mxu0
    %v1322 = vadd.f32 0.0, %v1321
    %v1323 = vpop.f32.mrb[0].mxu0
    %1324 = vdwg.mxu0
    %v1325 = vmul.f32 %v1322, 0.0009765625
    %1326 = vmatprep.subr.mxu0 0.0
    %1327 = vmatpush1.msra.mxu0 %v1254
    %1328 = vmatprep.subr.mxu0 0.0
    %1329 = vmatpush1.msra.mxu0 0.0
    %1330 = vmatprep.subr.mxu0 0.0
    %1331 = vmatpush1.msra.mxu0 0.0
    %1332 = vmatprep.subr.mxu0 0.0
    %1333 = vmatpush1.msra.mxu0 0.0
    %1334 = vmatprep.subr.mxu0 0.0
    %1335 = vmatpush1.msra.mxu0 0.0
    %1336 = vmatprep.subr.mxu0 0.0
    %1337 = vmatpush1.msra.mxu0 0.0
    %1338 = vmatprep.subr.mxu0 0.0
    %1339 = vmatpush1.msra.mxu0 0.0
    %1340 = vmatprep.subr.mxu0 0.0
    %1341 = vmatpush1.msra.mxu0 0.0
    %1342 = vmatprep.subr.mxu0 0.0
    %1343 = vmatpush1.msra.mxu0 0.0
    %1344 = vmatprep.subr.mxu0 0.0
    %1345 = vmatpush1.msra.mxu0 0.0
    %1346 = vmatprep.subr.mxu0 0.0
    %1347 = vmatpush1.msra.mxu0 0.0
    %1348 = vmatprep.subr.mxu0 0.0
    %1349 = vmatpush1.msra.mxu0 0.0
    %1350 = vmatprep.subr.mxu0 0.0
    %1351 = vmatpush1.msra.mxu0 0.0
    %1352 = vmatprep.subr.mxu0 0.0
    %1353 = vmatpush1.msra.mxu0 0.0
    %1354 = vmatprep.subr.mxu0 0.0
    %1355 = vmatpush1.msra.mxu0 0.0
    %1356 = vmatprep.subr.mxu0 0.0
    %1357 = vmatpush1.msra.mxu0 0.0
    %1358 = vmatprep.subr.mxu0 0.0
    %1359 = vmatpush1.msra.mxu0 0.0
    %1360 = vmatprep.subr.mxu0 0.0
    %1361 = vmatpush1.msra.mxu0 0.0
    %1362 = vmatprep.subr.mxu0 0.0
    %1363 = vmatpush1.msra.mxu0 0.0
    %1364 = vmatprep.subr.mxu0 0.0
    %1365 = vmatpush1.msra.mxu0 0.0
    %1366 = vmatprep.subr.mxu0 0.0
    %1367 = vmatpush1.msra.mxu0 0.0
    %1368 = vmatprep.subr.mxu0 0.0
    %1369 = vmatpush1.msra.mxu0 0.0
    %1370 = vmatprep.subr.mxu0 0.0
    %1371 = vmatpush1.msra.mxu0 0.0
    %1372 = vmatprep.subr.mxu0 0.0
    %1373 = vmatpush1.msra.mxu0 0.0
    %1374 = vmatprep.subr.mxu0 0.0
    %1375 = vmatpush1.msra.mxu0 0.0
    %1376 = vmatprep.subr.mxu0 0.0
    %1377 = vmatpush1.msra.mxu0 0.0
    %1378 = vmatprep.subr.mxu0 0.0
    %1379 = vmatpush1.msra.mxu0 0.0
    %1380 = vmatprep.subr.mxu0 0.0
    %1381 = vmatpush1.msra.mxu0 0.0
    %1382 = vmatprep.subr.mxu0 0.0
    %1383 = vmatpush1.msra.mxu0 0.0
    %1384 = vmatprep.subr.mxu0 0.0
    %1385 = vmatpush1.msra.mxu0 0.0
    %1386 = vmatprep.subr.mxu0 0.0
    %1387 = vmatpush1.msra.mxu0 0.0
    %1388 = vmatprep.subr.mxu0 0.0
    %1389 = vmatpush1.msra.mxu0 0.0
    %1390 = vmatprep.mubr.f32.mxu0 0.0
    %1391 = vmatmul.mubr.f32.gmra.mrb[0].mxu0 %v896
    %v1392 = vpop.f32.mrb[0].mxu0
    %v1393 = vadd.f32 0.0, %v1392
    %v1394 = vpop.f32.mrb[0].mxu0
    %1395 = vdwg.mxu0
    %v1396 = vmul.f32 %v1393, 0.0009765625
    %v1397 = vmul.f32 %v1325, %v1325
    %v1398 = vsub.f32 %v1396, %v1397
    %v1399 = vadd.f32 %v1398, 1e-05
    %v1400 = vrsqrt.pop %v1399
    %1402 = vset.pattern.permute.xlu0 0
    %1403 = vperm.xlu0 %1402, %v1325
    %v1404 = vpop.permute.xlu0 %1403
    %v1406 = vsub.f32 %v1245, %v1404
    %v1407 = vsub.f32 %v1246, %v1404
    %v1408 = vmul.f32 %v1400, %v194
    %1410 = vset.pattern.permute.xlu0 0
    %1411 = vperm.xlu0 %1410, %v1408
    %v1412 = vpop.permute.xlu0 %1411
    %v1414 = vmul.f32 %v1406, %v1412
    %v1415 = vmul.f32 %v1407, %v1412
    %v1416 = vadd.f32 %v1414, %v1062
    %v1417 = vadd.f32 %v1415, %v1062
    %1420 = vrot.lane.b32.xlu0 %v1416, 17
    %v1421 = vpop.permute.xlu0 %1420
    %1422 = vrot.lane.b32.xlu0 %v1417, 17
    %v1423 = vpop.permute.xlu0 %1422
    %v1424 = vsel %vm200, %v1421, %v1423
    %1428 = vst.msk [vmem:[#allocation2] sm:$0xff] %vm1076, %v1421
    %1429 = vst [vmem:[#allocation2 + $0x8] sm:$0xff] %v1424
    %1430 = vst.msk [vmem:[#allocation2 + $0x10] sm:$0xff] %vm200, %v1423
    %v1431 = vld [vmem:[#allocation2] sm:$0xff]
    %v1432 = vld [vmem:[#allocation2 + $0x8] sm:$0xff]
    %v1433 = vmul.f32 %v1431, %v244
    %v1434 = vmul.f32 %v1432, %v248
    %1435 = vst [vmem:[#allocation4 + $0x10] sm:$0xff] %v1433
    %1436 = vst [vmem:[#allocation4 + $0x18] sm:$0xff] %v1434
    %v1437 = vld [vmem:[#allocation2] sm:$0xff]
    %v1438 = vld [vmem:[#allocation2 + $0x8] sm:$0xff]
    %v1439 = vld [vmem:[#allocation2 + $0x10] sm:$0xff]
    %1443 = vrot.lane.b32.xlu0 %v1437, 127
    %v1444 = vpop.permute.xlu0 %1443
    %1445 = vrot.lane.b32.xlu0 %v1438, 127
    %v1446 = vpop.permute.xlu0 %1445
    %1447 = vrot.lane.b32.xlu0 %v1439, 127
    %v1448 = vpop.permute.xlu0 %1447
    %v1449 = vsel %vm265, %v1444, %v1446
    %v1450 = vsel %vm265, %v1446, %v1448
    %1453 = vst [vmem:[#allocation4 + $0x30] sm:$0xff] %v1449
    %1454 = vst [vmem:[#allocation4 + $0x38] sm:$0xff] %v1450
    %v1455 = vld [vmem:[#allocation2] sm:$0xff]
    %v1456 = vld [vmem:[#allocation2 + $0x8] sm:$0xff]
    %v1457 = vld [vmem:[#allocation2 + $0x10] sm:$0xff]
    %v1458 = vmul.f32 %v1455, %v286
    %v1459 = vmul.f32 %v1456, %v290
    %v1460 = vmul.f32 %v1457, %v288
    %1464 = vrot.lane.b32.xlu0 %v1458, 126
    %v1465 = vpop.permute.xlu0 %1464
    %1466 = vrot.lane.b32.xlu0 %v1459, 126
    %v1467 = vpop.permute.xlu0 %1466
    %1468 = vrot.lane.b32.xlu0 %v1460, 126
    %v1469 = vpop.permute.xlu0 %1468
    %v1470 = vsel %vm306, %v1465, %v1467
    %v1471 = vsel %vm306, %v1467, %v1469
    %1474 = vst [vmem:[#allocation4 + $0x50] sm:$0xff] %v1470
    %1475 = vst [vmem:[#allocation4 + $0x58] sm:$0xff] %v1471
    %v1476 = vld [vmem:[#allocation2] sm:$0xff]
    %v1477 = vld [vmem:[#allocation2 + $0x8] sm:$0xff]
    %v1478 = vld [vmem:[#allocation2 + $0x10] sm:$0xff]
    %v1479 = vmul.f32 %v1476, %v327
    %v1480 = vmul.f32 %v1477, %v331
    %v1481 = vmul.f32 %v1478, %v329
    %1485 = vrot.lane.b32.xlu0 %v1479, 112
    %v1486 = vpop.permute.xlu0 %1485
    %1487 = vrot.lane.b32.xlu0 %v1480, 112
    %v1488 = vpop.permute.xlu0 %1487
    %1489 = vrot.lane.b32.xlu0 %v1481, 112
    %v1490 = vpop.permute.xlu0 %1489
    %v1491 = vsel %vm347, %v1486, %v1488
    %v1492 = vsel %vm347, %v1488, %v1490
    %1495 = vst [vmem:[#allocation4 + $0x70] sm:$0xff] %v1491
    %1496 = vst [vmem:[#allocation4 + $0x78] sm:$0xff] %v1492
    %v1497 = vld [vmem:[#allocation2] sm:$0xff]
    %v1498 = vld [vmem:[#allocation2 + $0x8] sm:$0xff]
    %v1499 = vld [vmem:[#allocation2 + $0x10] sm:$0xff]
    %1503 = vrot.lane.b32.xlu0 %v1497, 111
    %v1504 = vpop.permute.xlu0 %1503
    %1505 = vrot.lane.b32.xlu0 %v1498, 111
    %v1506 = vpop.permute.xlu0 %1505
    %1507 = vrot.lane.b32.xlu0 %v1499, 111
    %v1508 = vpop.permute.xlu0 %1507
    %v1509 = vsel %vm366, %v1504, %v1506
    %v1510 = vsel %vm366, %v1506, %v1508
    %1513 = vst [vmem:[#allocation4 + $0x90] sm:$0xff] %v1509
    %1514 = vst [vmem:[#allocation4 + $0x98] sm:$0xff] %v1510
    %v1515 = vld [vmem:[#allocation2] sm:$0xff]
    %v1516 = vld [vmem:[#allocation2 + $0x8] sm:$0xff]
    %v1517 = vld [vmem:[#allocation2 + $0x10] sm:$0xff]
    %v1518 = vmul.f32 %v1515, %v387
    %v1519 = vmul.f32 %v1516, %v391
    %v1520 = vmul.f32 %v1517, %v389
    %1524 = vrot.lane.b32.xlu0 %v1518, 110
    %v1525 = vpop.permute.xlu0 %1524
    %1526 = vrot.lane.b32.xlu0 %v1519, 110
    %v1527 = vpop.permute.xlu0 %1526
    %1528 = vrot.lane.b32.xlu0 %v1520, 110
    %v1529 = vpop.permute.xlu0 %1528
    %v1530 = vsel %vm407, %v1525, %v1527
    %v1531 = vsel %vm407, %v1527, %v1529
    %1534 = vst [vmem:[#allocation4 + $0xb0] sm:$0xff] %v1530
    %1535 = vst [vmem:[#allocation4 + $0xb8] sm:$0xff] %v1531
    %v1536 = vld [vmem:[#allocation2] sm:$0xff]
    %v1537 = vld [vmem:[#allocation2 + $0x8] sm:$0xff]
    %v1538 = vld [vmem:[#allocation2 + $0x10] sm:$0xff]
    %v1539 = vmul.f32 %v1536, %v428
    %v1540 = vmul.f32 %v1537, %v432
    %v1541 = vmul.f32 %v1538, %v430
    %1545 = vrot.lane.b32.xlu0 %v1539, 96
    %v1546 = vpop.permute.xlu0 %1545
    %1547 = vrot.lane.b32.xlu0 %v1540, 96
    %v1548 = vpop.permute.xlu0 %1547
    %1549 = vrot.lane.b32.xlu0 %v1541, 96
    %v1550 = vpop.permute.xlu0 %1549
    %v1551 = vsel %vm448, %v1546, %v1548
    %v1552 = vsel %vm448, %v1548, %v1550
    %1555 = vst [vmem:[#allocation4 + $0xd0] sm:$0xff] %v1551
    %1556 = vst [vmem:[#allocation4 + $0xd8] sm:$0xff] %v1552
    %v1557 = vld [vmem:[#allocation2] sm:$0xff]
    %v1558 = vld [vmem:[#allocation2 + $0x8] sm:$0xff]
    %v1559 = vld [vmem:[#allocation2 + $0x10] sm:$0xff]
    %1563 = vrot.lane.b32.xlu0 %v1557, 95
    %v1564 = vpop.permute.xlu0 %1563
    %1565 = vrot.lane.b32.xlu0 %v1558, 95
    %v1566 = vpop.permute.xlu0 %1565
    %1567 = vrot.lane.b32.xlu0 %v1559, 95
    %v1568 = vpop.permute.xlu0 %1567
    %v1569 = vsel %vm467, %v1564, %v1566
    %v1570 = vsel %vm467, %v1566, %v1568
    %1573 = vst [vmem:[#allocation4 + $0xf0] sm:$0xff] %v1569
    %1574 = vst [vmem:[#allocation4 + $0xf8] sm:$0xff] %v1570
    %v1575 = vld [vmem:[#allocation2] sm:$0xff]
    %v1576 = vld [vmem:[#allocation2 + $0x8] sm:$0xff]
    %v1577 = vld [vmem:[#allocation2 + $0x10] sm:$0xff]
    %v1578 = vmul.f32 %v1575, %v488
    %v1579 = vmul.f32 %v1576, %v492
    %v1580 = vmul.f32 %v1577, %v490
    %1584 = vrot.lane.b32.xlu0 %v1578, 94
    %v1585 = vpop.permute.xlu0 %1584
    %1586 = vrot.lane.b32.xlu0 %v1579, 94
    %v1587 = vpop.permute.xlu0 %1586
    %1588 = vrot.lane.b32.xlu0 %v1580, 94
    %v1589 = vpop.permute.xlu0 %1588
    %v1590 = vsel %vm508, %v1585, %v1587
    %v1591 = vsel %vm508, %v1587, %v1589
    %1594 = vst [vmem:[#allocation4 + $0x110] sm:$0xff] %v1590
    %1595 = vst [vmem:[#allocation4 + $0x118] sm:$0xff] %v1591
    %v1596 = vld [vmem:[#allocation4] sm:$0xff]
    %v1597 = vld [vmem:[#allocation4 + $0x8] sm:$0xff]
    %v1598 = vld [vmem:[#allocation4 + $0x10] sm:$0xff]
    %v1599 = vld [vmem:[#allocation4 + $0x18] sm:$0xff]
    %v1600 = vld [vmem:[#allocation4 + $0x20] sm:$0xff]
    %v1601 = vld [vmem:[#allocation4 + $0x28] sm:$0xff]
    %v1602 = vld [vmem:[#allocation4 + $0x30] sm:$0xff]
    %v1603 = vld [vmem:[#allocation4 + $0x38] sm:$0xff]
    %v1604 = vld [vmem:[#allocation4 + $0x40] sm:$0xff]
    %v1605 = vld [vmem:[#allocation4 + $0x48] sm:$0xff]
    %v1606 = vld [vmem:[#allocation4 + $0x50] sm:$0xff]
    %v1607 = vld [vmem:[#allocation4 + $0x58] sm:$0xff]
    %v1608 = vld [vmem:[#allocation4 + $0x60] sm:$0xff]
    %v1609 = vld [vmem:[#allocation4 + $0x68] sm:$0xff]
    %v1610 = vld [vmem:[#allocation4 + $0x70] sm:$0xff]
    %v1611 = vld [vmem:[#allocation4 + $0x78] sm:$0xff]
    %v1612 = vld [vmem:[#allocation4 + $0x80] sm:$0xff]
    %v1613 = vld [vmem:[#allocation4 + $0x88] sm:$0xff]
    %v1614 = vld [vmem:[#allocation4 + $0x90] sm:$0xff]
    %v1615 = vld [vmem:[#allocation4 + $0x98] sm:$0xff]
    %v1616 = vld [vmem:[#allocation4 + $0xa0] sm:$0xff]
    %v1617 = vld [vmem:[#allocation4 + $0xa8] sm:$0xff]
    %v1618 = vld [vmem:[#allocation4 + $0xb0] sm:$0xff]
    %v1619 = vld [vmem:[#allocation4 + $0xb8] sm:$0xff]
    %v1620 = vld [vmem:[#allocation4 + $0xc0] sm:$0xff]
    %v1621 = vld [vmem:[#allocation4 + $0xc8] sm:$0xff]
    %v1622 = vld [vmem:[#allocation4 + $0xd0] sm:$0xff]
    %v1623 = vld [vmem:[#allocation4 + $0xd8] sm:$0xff]
    %v1624 = vld [vmem:[#allocation4 + $0xe0] sm:$0xff]
    %v1625 = vld [vmem:[#allocation4 + $0xe8] sm:$0xff]
    %v1626 = vld [vmem:[#allocation4 + $0xf0] sm:$0xff]
    %v1627 = vld [vmem:[#allocation4 + $0xf8] sm:$0xff]
    %v1628 = vld [vmem:[#allocation4 + $0x100] sm:$0xff]
    %v1629 = vld [vmem:[#allocation4 + $0x108] sm:$0xff]
    %v1630 = vld [vmem:[#allocation4 + $0x110] sm:$0xff]
    %v1631 = vld [vmem:[#allocation4 + $0x118] sm:$0xff]
    %1633 = vset.pattern.permute.xlu0 0
    %1634 = vperm.xlu0 %1633, %v196
    %v1635 = vpop.permute.xlu0 %1634
    %v1638 = vsel %vm734, %v192, 0
    %1640 = vmatprep.subr.mxu0 %v1597
    %1641 = vmatpush1.msra.mxu0 %v1596
    %1642 = vmatprep.subr.mxu0 %v1601
    %1643 = vmatpush1.msra.mxu0 %v1600
    %1644 = vmatprep.subr.mxu0 %v1605
    %1645 = vmatpush1.msra.mxu0 %v1604
    %1646 = vmatprep.subr.mxu0 %v1609
    %1647 = vmatpush1.msra.mxu0 %v1608
    %1648 = vmatprep.subr.mxu0 %v1613
    %1649 = vmatpush1.msra.mxu0 %v1612
    %1650 = vmatprep.subr.mxu0 %v1617
    %1651 = vmatpush1.msra.mxu0 %v1616
    %1652 = vmatprep.subr.mxu0 %v1621
    %1653 = vmatpush1.msra.mxu0 %v1620
    %1654 = vmatprep.subr.mxu0 %v1625
    %1655 = vmatpush1.msra.mxu0 %v1624
    %1656 = vmatprep.subr.mxu0 %v1629
    %1657 = vmatpush1.msra.mxu0 %v1628
    %1658 = vmatprep.subr.mxu0 0.0
    %1659 = vmatpush1.msra.mxu0 0.0
    %1660 = vmatprep.subr.mxu0 0.0
    %1661 = vmatpush1.msra.mxu0 0.0
    %1662 = vmatprep.subr.mxu0 0.0
    %1663 = vmatpush1.msra.mxu0 0.0
    %1664 = vmatprep.subr.mxu0 0.0
    %1665 = vmatpush1.msra.mxu0 0.0
    %1666 = vmatprep.subr.mxu0 0.0
    %1667 = vmatpush1.msra.mxu0 0.0
    %1668 = vmatprep.subr.mxu0 0.0
    %1669 = vmatpush1.msra.mxu0 0.0
    %1670 = vmatprep.subr.mxu0 0.0
    %1671 = vmatpush1.msra.mxu0 0.0
    %1672 = vmatprep.subr.mxu0 0.0
    %1673 = vmatpush1.msra.mxu0 0.0
    %1674 = vmatprep.subr.mxu0 0.0
    %1675 = vmatpush1.msra.mxu0 0.0
    %1676 = vmatprep.subr.mxu0 0.0
    %1677 = vmatpush1.msra.mxu0 0.0
    %1678 = vmatprep.subr.mxu0 0.0
    %1679 = vmatpush1.msra.mxu0 0.0
    %1680 = vmatprep.subr.mxu0 0.0
    %1681 = vmatpush1.msra.mxu0 0.0
    %1682 = vmatprep.subr.mxu0 0.0
    %1683 = vmatpush1.msra.mxu0 0.0
    %1684 = vmatprep.subr.mxu0 0.0
    %1685 = vmatpush1.msra.mxu0 0.0
    %1686 = vmatprep.subr.mxu0 0.0
    %1687 = vmatpush1.msra.mxu0 0.0
    %1688 = vmatprep.subr.mxu0 0.0
    %1689 = vmatpush1.msra.mxu0 0.0
    %1690 = vmatprep.subr.mxu0 0.0
    %1691 = vmatpush1.msra.mxu0 0.0
    %1692 = vmatprep.subr.mxu0 0.0
    %1693 = vmatpush1.msra.mxu0 0.0
    %1694 = vmatprep.subr.mxu0 0.0
    %1695 = vmatpush1.msra.mxu0 0.0
    %1696 = vmatprep.subr.mxu0 0.0
    %1697 = vmatpush1.msra.mxu0 0.0
    %1698 = vmatprep.subr.mxu0 0.0
    %1699 = vmatpush1.msra.mxu0 0.0
    %1700 = vmatprep.subr.mxu0 0.0
    %1701 = vmatpush1.msra.mxu0 0.0
    %1702 = vmatprep.subr.mxu0 0.0
    %1703 = vmatpush1.msra.mxu0 0.0
    %1704 = vmatprep.mubr.f32.mxu0 0.0
    %1705 = vmatmul.mubr.f32.gmra.mrb[0].mxu0 %v1638
    %v1706 = vpop.f32.mrb[0].mxu0
    %v1707 = vadd.f32 %v1635, %v1706
    %v1708 = vpop.f32.mrb[0].mxu0
    %v1709 = vadd.f32 %v1635, %v1708
    %1710 = vdwg.mxu0
    %1711 = vmatprep.subr.mxu0 %v1599
    %1712 = vmatpush1.msra.mxu0 %v1598
    %1713 = vmatprep.subr.mxu0 %v1603
    %1714 = vmatpush1.msra.mxu0 %v1602
    %1715 = vmatprep.subr.mxu0 %v1607
    %1716 = vmatpush1.msra.mxu0 %v1606
    %1717 = vmatprep.subr.mxu0 %v1611
    %1718 = vmatpush1.msra.mxu0 %v1610
    %1719 = vmatprep.subr.mxu0 %v1615
    %1720 = vmatpush1.msra.mxu0 %v1614
    %1721 = vmatprep.subr.mxu0 %v1619
    %1722 = vmatpush1.msra.mxu0 %v1618
    %1723 = vmatprep.subr.mxu0 %v1623
    %1724 = vmatpush1.msra.mxu0 %v1622
    %1725 = vmatprep.subr.mxu0 %v1627
    %1726 = vmatpush1.msra.mxu0 %v1626
    %1727 = vmatprep.subr.mxu0 %v1631
    %1728 = vmatpush1.msra.mxu0 %v1630
    %1729 = vmatprep.subr.mxu0 0.0
    %1730 = vmatpush1.msra.mxu0 0.0
    %1731 = vmatprep.subr.mxu0 0.0
    %1732 = vmatpush1.msra.mxu0 0.0
    %1733 = vmatprep.subr.mxu0 0.0
    %1734 = vmatpush1.msra.mxu0 0.0
    %1735 = vmatprep.subr.mxu0 0.0
    %1736 = vmatpush1.msra.mxu0 0.0
    %1737 = vmatprep.subr.mxu0 0.0
    %1738 = vmatpush1.msra.mxu0 0.0
    %1739 = vmatprep.subr.mxu0 0.0
    %1740 = vmatpush1.msra.mxu0 0.0
    %1741 = vmatprep.subr.mxu0 0.0
    %1742 = vmatpush1.msra.mxu0 0.0
    %1743 = vmatprep.subr.mxu0 0.0
    %1744 = vmatpush1.msra.mxu0 0.0
    %1745 = vmatprep.subr.mxu0 0.0
    %1746 = vmatpush1.msra.mxu0 0.0
    %1747 = vmatprep.subr.mxu0 0.0
    %1748 = vmatpush1.msra.mxu0 0.0
    %1749 = vmatprep.subr.mxu0 0.0
    %1750 = vmatpush1.msra.mxu0 0.0
    %1751 = vmatprep.subr.mxu0 0.0
    %1752 = vmatpush1.msra.mxu0 0.0
    %1753 = vmatprep.subr.mxu0 0.0
    %1754 = vmatpush1.msra.mxu0 0.0
    %1755 = vmatprep.subr.mxu0 0.0
    %1756 = vmatpush1.msra.mxu0 0.0
    %1757 = vmatprep.subr.mxu0 0.0
    %1758 = vmatpush1.msra.mxu0 0.0
    %1759 = vmatprep.subr.mxu0 0.0
    %1760 = vmatpush1.msra.mxu0 0.0
    %1761 = vmatprep.subr.mxu0 0.0
    %1762 = vmatpush1.msra.mxu0 0.0
    %1763 = vmatprep.subr.mxu0 0.0
    %1764 = vmatpush1.msra.mxu0 0.0
    %1765 = vmatprep.subr.mxu0 0.0
    %1766 = vmatpush1.msra.mxu0 0.0
    %1767 = vmatprep.subr.mxu0 0.0
    %1768 = vmatpush1.msra.mxu0 0.0
    %1769 = vmatprep.subr.mxu0 0.0
    %1770 = vmatpush1.msra.mxu0 0.0
    %1771 = vmatprep.subr.mxu0 0.0
    %1772 = vmatpush1.msra.mxu0 0.0
    %1773 = vmatprep.subr.mxu0 0.0
    %1774 = vmatpush1.msra.mxu0 0.0
    %1775 = vmatprep.mubr.f32.mxu0 0.0
    %1776 = vmatmul.mubr.f32.gmra.mrb[0].mxu0 %v1638
    %v1777 = vpop.f32.mrb[0].mxu0
    %v1778 = vadd.f32 %v1635, %v1777
    %v1779 = vpop.f32.mrb[0].mxu0
    %v1780 = vadd.f32 %v1635, %v1779
    %1781 = vdwg.mxu0
    %1782 = vst [vmem:[#allocation5] sm:$0xff] %v1707
    %1783 = vst [vmem:[#allocation5 + $0x8] sm:$0xff] %v1709
    %1784 = vst [vmem:[#allocation5 + $0x10] sm:$0xff] %v1778
    %1785 = vst [vmem:[#allocation5 + $0x18] sm:$0xff] %v1780
    %v1786 = vld [vmem:[#allocation5] sm:$0xff]
    %v1787 = vld [vmem:[#allocation5 + $0x8] sm:$0xff]
    %v1788 = vadd.f32 %v1786, %v1787
    %1789 = vadd.xlane.f32.xlu0 %v1788
    %v1790 = vpop.xlane.xlu0 %1789
    %v1791 = vmul.f32 %v1786, %v1786
    %v1792 = vmul.f32 %v1787, %v1787
    %v1793 = vadd.f32 %v1791, %v1792
    %1794 = vadd.xlane.f32.xlu0 %v1793
    %v1795 = vpop.xlane.xlu0 %1794
    %1796 = vmatprep.subr.mxu0 0.0
    %1797 = vmatpush1.msra.mxu0 %v1790
    %1798 = vmatprep.subr.mxu0 0.0
    %1799 = vmatpush1.msra.mxu0 0.0
    %1800 = vmatprep.subr.mxu0 0.0
    %1801 = vmatpush1.msra.mxu0 0.0
    %1802 = vmatprep.subr.mxu0 0.0
    %1803 = vmatpush1.msra.mxu0 0.0
    %1804 = vmatprep.subr.mxu0 0.0
    %1805 = vmatpush1.msra.mxu0 0.0
    %1806 = vmatprep.subr.mxu0 0.0
    %1807 = vmatpush1.msra.mxu0 0.0
    %1808 = vmatprep.subr.mxu0 0.0
    %1809 = vmatpush1.msra.mxu0 0.0
    %1810 = vmatprep.subr.mxu0 0.0
    %1811 = vmatpush1.msra.mxu0 0.0
    %1812 = vmatprep.subr.mxu0 0.0
    %1813 = vmatpush1.msra.mxu0 0.0
    %1814 = vmatprep.subr.mxu0 0.0
    %1815 = vmatpush1.msra.mxu0 0.0
    %1816 = vmatprep.subr.mxu0 0.0
    %1817 = vmatpush1.msra.mxu0 0.0
    %1818 = vmatprep.subr.mxu0 0.0
    %1819 = vmatpush1.msra.mxu0 0.0
    %1820 = vmatprep.subr.mxu0 0.0
    %1821 = vmatpush1.msra.mxu0 0.0
    %1822 = vmatprep.subr.mxu0 0.0
    %1823 = vmatpush1.msra.mxu0 0.0
    %1824 = vmatprep.subr.mxu0 0.0
    %1825 = vmatpush1.msra.mxu0 0.0
    %1826 = vmatprep.subr.mxu0 0.0
    %1827 = vmatpush1.msra.mxu0 0.0
    %1828 = vmatprep.subr.mxu0 0.0
    %1829 = vmatpush1.msra.mxu0 0.0
    %1830 = vmatprep.subr.mxu0 0.0
    %1831 = vmatpush1.msra.mxu0 0.0
    %1832 = vmatprep.subr.mxu0 0.0
    %1833 = vmatpush1.msra.mxu0 0.0
    %1834 = vmatprep.subr.mxu0 0.0
    %1835 = vmatpush1.msra.mxu0 0.0
    %1836 = vmatprep.subr.mxu0 0.0
    %1837 = vmatpush1.msra.mxu0 0.0
    %1838 = vmatprep.subr.mxu0 0.0
    %1839 = vmatpush1.msra.mxu0 0.0
    %1840 = vmatprep.subr.mxu0 0.0
    %1841 = vmatpush1.msra.mxu0 0.0
    %1842 = vmatprep.subr.mxu0 0.0
    %1843 = vmatpush1.msra.mxu0 0.0
    %1844 = vmatprep.subr.mxu0 0.0
    %1845 = vmatpush1.msra.mxu0 0.0
    %1846 = vmatprep.subr.mxu0 0.0
    %1847 = vmatpush1.msra.mxu0 0.0
    %1848 = vmatprep.subr.mxu0 0.0
    %1849 = vmatpush1.msra.mxu0 0.0
    %1850 = vmatprep.subr.mxu0 0.0
    %1851 = vmatpush1.msra.mxu0 0.0
    %1852 = vmatprep.subr.mxu0 0.0
    %1853 = vmatpush1.msra.mxu0 0.0
    %1854 = vmatprep.subr.mxu0 0.0
    %1855 = vmatpush1.msra.mxu0 0.0
    %1856 = vmatprep.subr.mxu0 0.0
    %1857 = vmatpush1.msra.mxu0 0.0
    %1858 = vmatprep.subr.mxu0 0.0
    %1859 = vmatpush1.msra.mxu0 0.0
    %1860 = vmatprep.mubr.f32.mxu0 0.0
    %1861 = vmatmul.mubr.f32.gmra.mrb[0].mxu0 %v896
    %v1862 = vpop.f32.mrb[0].mxu0
    %v1863 = vadd.f32 0.0, %v1862
    %v1864 = vpop.f32.mrb[0].mxu0
    %1865 = vdwg.mxu0
    %v1866 = vmul.f32 %v1863, 0.0009765625
    %1867 = vmatprep.subr.mxu0 0.0
    %1868 = vmatpush1.msra.mxu0 %v1795
    %1869 = vmatprep.subr.mxu0 0.0
    %1870 = vmatpush1.msra.mxu0 0.0
    %1871 = vmatprep.subr.mxu0 0.0
    %1872 = vmatpush1.msra.mxu0 0.0
    %1873 = vmatprep.subr.mxu0 0.0
    %1874 = vmatpush1.msra.mxu0 0.0
    %1875 = vmatprep.subr.mxu0 0.0
    %1876 = vmatpush1.msra.mxu0 0.0
    %1877 = vmatprep.subr.mxu0 0.0
    %1878 = vmatpush1.msra.mxu0 0.0
    %1879 = vmatprep.subr.mxu0 0.0
    %1880 = vmatpush1.msra.mxu0 0.0
    %1881 = vmatprep.subr.mxu0 0.0
    %1882 = vmatpush1.msra.mxu0 0.0
    %1883 = vmatprep.subr.mxu0 0.0
    %1884 = vmatpush1.msra.mxu0 0.0
    %1885 = vmatprep.subr.mxu0 0.0
    %1886 = vmatpush1.msra.mxu0 0.0
    %1887 = vmatprep.subr.mxu0 0.0
    %1888 = vmatpush1.msra.mxu0 0.0
    %1889 = vmatprep.subr.mxu0 0.0
    %1890 = vmatpush1.msra.mxu0 0.0
    %1891 = vmatprep.subr.mxu0 0.0
    %1892 = vmatpush1.msra.mxu0 0.0
    %1893 = vmatprep.subr.mxu0 0.0
    %1894 = vmatpush1.msra.mxu0 0.0
    %1895 = vmatprep.subr.mxu0 0.0
    %1896 = vmatpush1.msra.mxu0 0.0
    %1897 = vmatprep.subr.mxu0 0.0
    %1898 = vmatpush1.msra.mxu0 0.0
    %1899 = vmatprep.subr.mxu0 0.0
    %1900 = vmatpush1.msra.mxu0 0.0
    %1901 = vmatprep.subr.mxu0 0.0
    %1902 = vmatpush1.msra.mxu0 0.0
    %1903 = vmatprep.subr.mxu0 0.0
    %1904 = vmatpush1.msra.mxu0 0.0
    %1905 = vmatprep.subr.mxu0 0.0
    %1906 = vmatpush1.msra.mxu0 0.0
    %1907 = vmatprep.subr.mxu0 0.0
    %1908 = vmatpush1.msra.mxu0 0.0
    %1909 = vmatprep.subr.mxu0 0.0
    %1910 = vmatpush1.msra.mxu0 0.0
    %1911 = vmatprep.subr.mxu0 0.0
    %1912 = vmatpush1.msra.mxu0 0.0
    %1913 = vmatprep.subr.mxu0 0.0
    %1914 = vmatpush1.msra.mxu0 0.0
    %1915 = vmatprep.subr.mxu0 0.0
    %1916 = vmatpush1.msra.mxu0 0.0
    %1917 = vmatprep.subr.mxu0 0.0
    %1918 = vmatpush1.msra.mxu0 0.0
    %1919 = vmatprep.subr.mxu0 0.0
    %1920 = vmatpush1.msra.mxu0 0.0
    %1921 = vmatprep.subr.mxu0 0.0
    %1922 = vmatpush1.msra.mxu0 0.0
    %1923 = vmatprep.subr.mxu0 0.0
    %1924 = vmatpush1.msra.mxu0 0.0
    %1925 = vmatprep.subr.mxu0 0.0
    %1926 = vmatpush1.msra.mxu0 0.0
    %1927 = vmatprep.subr.mxu0 0.0
    %1928 = vmatpush1.msra.mxu0 0.0
    %1929 = vmatprep.subr.mxu0 0.0
    %1930 = vmatpush1.msra.mxu0 0.0
    %1931 = vmatprep.mubr.f32.mxu0 0.0
    %1932 = vmatmul.mubr.f32.gmra.mrb[0].mxu0 %v896
    %v1933 = vpop.f32.mrb[0].mxu0
    %v1934 = vadd.f32 0.0, %v1933
    %v1935 = vpop.f32.mrb[0].mxu0
    %1936 = vdwg.mxu0
    %v1937 = vmul.f32 %v1934, 0.0009765625
    %v1938 = vmul.f32 %v1866, %v1866
    %v1939 = vsub.f32 %v1937, %v1938
    %v1940 = vadd.f32 %v1939, 1e-05
    %v1941 = vrsqrt.pop %v1940
    %1943 = vset.pattern.permute.xlu0 0
    %1944 = vperm.xlu0 %1943, %v1866
    %v1945 = vpop.permute.xlu0 %1944
    %v1947 = vsub.f32 %v1786, %v1945
    %v1948 = vsub.f32 %v1787, %v1945
    %v1949 = vmul.f32 %v1941, %v197
    %1951 = vset.pattern.permute.xlu0 0
    %1952 = vperm.xlu0 %1951, %v1949
    %v1953 = vpop.permute.xlu0 %1952
    %v1955 = vmul.f32 %v1947, %v1953
    %v1956 = vmul.f32 %v1948, %v1953
    %1958 = vset.pattern.permute.xlu0 0
    %1959 = vperm.xlu0 %1958, %v198
    %v1960 = vpop.permute.xlu0 %1959
    %v1962 = vadd.f32 %v1955, %v1960
    %v1963 = vadd.f32 %v1956, %v1960
    %v1964 = vxor.u32 %v1962, 2147483648
    %v1965 = vxor.u32 %v1963, 2147483648
    %v1966 = vmul.f32 %v1964, 1.442695
    %v1967 = vpow.pop %v1966
    %v1968 = vmul.f32 %v1965, 1.442695
    %v1969 = vpow.pop %v1968
    %v1970 = vadd.f32 %v1967, 1.0
    %v1971 = vadd.f32 %v1969, 1.0
    %v1972 = vrcp.pop %v1970
    %v1973 = vmul.f32 1.0, %v1972
    %v1974 = vrcp.pop %v1971
    %v1975 = vmul.f32 1.0, %v1974
    %1976 = vst [vmem:[#allocation26] sm:$0xff] %v1973
    %1977 = vst [vmem:[#allocation26 + $0x8] sm:$0xff] %v1975
    %v1978 = vld [vmem:[#allocation5 + $0x10] sm:$0xff]
    %v1979 = vld [vmem:[#allocation5 + $0x18] sm:$0xff]
    %v1980 = vadd.f32 %v1978, %v1979
    %1981 = vadd.xlane.f32.xlu0 %v1980
    %v1982 = vpop.xlane.xlu0 %1981
    %v1983 = vmul.f32 %v1978, %v1978
    %v1984 = vmul.f32 %v1979, %v1979
    %v1985 = vadd.f32 %v1983, %v1984
    %1986 = vadd.xlane.f32.xlu0 %v1985
    %v1987 = vpop.xlane.xlu0 %1986
    %1988 = vmatprep.subr.mxu0 0.0
    %1989 = vmatpush1.msra.mxu0 %v1982
    %1990 = vmatprep.subr.mxu0 0.0
    %1991 = vmatpush1.msra.mxu0 0.0
    %1992 = vmatprep.subr.mxu0 0.0
    %1993 = vmatpush1.msra.mxu0 0.0
    %1994 = vmatprep.subr.mxu0 0.0
    %1995 = vmatpush1.msra.mxu0 0.0
    %1996 = vmatprep.subr.mxu0 0.0
    %1997 = vmatpush1.msra.mxu0 0.0
    %1998 = vmatprep.subr.mxu0 0.0
    %1999 = vmatpush1.msra.mxu0 0.0
    %2000 = vmatprep.subr.mxu0 0.0
    %2001 = vmatpush1.msra.mxu0 0.0
    %2002 = vmatprep.subr.mxu0 0.0
    %2003 = vmatpush1.msra.mxu0 0.0
    %2004 = vmatprep.subr.mxu0 0.0
    %2005 = vmatpush1.msra.mxu0 0.0
    %2006 = vmatprep.subr.mxu0 0.0
    %2007 = vmatpush1.msra.mxu0 0.0
    %2008 = vmatprep.subr.mxu0 0.0
    %2009 = vmatpush1.msra.mxu0 0.0
    %2010 = vmatprep.subr.mxu0 0.0
    %2011 = vmatpush1.msra.mxu0 0.0
    %2012 = vmatprep.subr.mxu0 0.0
    %2013 = vmatpush1.msra.mxu0 0.0
    %2014 = vmatprep.subr.mxu0 0.0
    %2015 = vmatpush1.msra.mxu0 0.0
    %2016 = vmatprep.subr.mxu0 0.0
    %2017 = vmatpush1.msra.mxu0 0.0
    %2018 = vmatprep.subr.mxu0 0.0
    %2019 = vmatpush1.msra.mxu0 0.0
    %2020 = vmatprep.subr.mxu0 0.0
    %2021 = vmatpush1.msra.mxu0 0.0
    %2022 = vmatprep.subr.mxu0 0.0
    %2023 = vmatpush1.msra.mxu0 0.0
    %2024 = vmatprep.subr.mxu0 0.0
    %2025 = vmatpush1.msra.mxu0 0.0
    %2026 = vmatprep.subr.mxu0 0.0
    %2027 = vmatpush1.msra.mxu0 0.0
    %2028 = vmatprep.subr.mxu0 0.0
    %2029 = vmatpush1.msra.mxu0 0.0
    %2030 = vmatprep.subr.mxu0 0.0
    %2031 = vmatpush1.msra.mxu0 0.0
    %2032 = vmatprep.subr.mxu0 0.0
    %2033 = vmatpush1.msra.mxu0 0.0
    %2034 = vmatprep.subr.mxu0 0.0
    %2035 = vmatpush1.msra.mxu0 0.0
    %2036 = vmatprep.subr.mxu0 0.0
    %2037 = vmatpush1.msra.mxu0 0.0
    %2038 = vmatprep.subr.mxu0 0.0
    %2039 = vmatpush1.msra.mxu0 0.0
    %2040 = vmatprep.subr.mxu0 0.0
    %2041 = vmatpush1.msra.mxu0 0.0
    %2042 = vmatprep.subr.mxu0 0.0
    %2043 = vmatpush1.msra.mxu0 0.0
    %2044 = vmatprep.subr.mxu0 0.0
    %2045 = vmatpush1.msra.mxu0 0.0
    %2046 = vmatprep.subr.mxu0 0.0
    %2047 = vmatpush1.msra.mxu0 0.0
    %2048 = vmatprep.subr.mxu0 0.0
    %2049 = vmatpush1.msra.mxu0 0.0
    %2050 = vmatprep.subr.mxu0 0.0
    %2051 = vmatpush1.msra.mxu0 0.0
    %2052 = vmatprep.mubr.f32.mxu0 0.0
    %2053 = vmatmul.mubr.f32.gmra.mrb[0].mxu0 %v896
    %v2054 = vpop.f32.mrb[0].mxu0
    %v2055 = vadd.f32 0.0, %v2054
    %v2056 = vpop.f32.mrb[0].mxu0
    %2057 = vdwg.mxu0
    %v2058 = vmul.f32 %v2055, 0.0009765625
    %2059 = vmatprep.subr.mxu0 0.0
    %2060 = vmatpush1.msra.mxu0 %v1987
    %2061 = vmatprep.subr.mxu0 0.0
    %2062 = vmatpush1.msra.mxu0 0.0
    %2063 = vmatprep.subr.mxu0 0.0
    %2064 = vmatpush1.msra.mxu0 0.0
    %2065 = vmatprep.subr.mxu0 0.0
    %2066 = vmatpush1.msra.mxu0 0.0
    %2067 = vmatprep.subr.mxu0 0.0
    %2068 = vmatpush1.msra.mxu0 0.0
    %2069 = vmatprep.subr.mxu0 0.0
    %2070 = vmatpush1.msra.mxu0 0.0
    %2071 = vmatprep.subr.mxu0 0.0
    %2072 = vmatpush1.msra.mxu0 0.0
    %2073 = vmatprep.subr.mxu0 0.0
    %2074 = vmatpush1.msra.mxu0 0.0
    %2075 = vmatprep.subr.mxu0 0.0
    %2076 = vmatpush1.msra.mxu0 0.0
    %2077 = vmatprep.subr.mxu0 0.0
    %2078 = vmatpush1.msra.mxu0 0.0
    %2079 = vmatprep.subr.mxu0 0.0
    %2080 = vmatpush1.msra.mxu0 0.0
    %2081 = vmatprep.subr.mxu0 0.0
    %2082 = vmatpush1.msra.mxu0 0.0
    %2083 = vmatprep.subr.mxu0 0.0
    %2084 = vmatpush1.msra.mxu0 0.0
    %2085 = vmatprep.subr.mxu0 0.0
    %2086 = vmatpush1.msra.mxu0 0.0
    %2087 = vmatprep.subr.mxu0 0.0
    %2088 = vmatpush1.msra.mxu0 0.0
    %2089 = vmatprep.subr.mxu0 0.0
    %2090 = vmatpush1.msra.mxu0 0.0
    %2091 = vmatprep.subr.mxu0 0.0
    %2092 = vmatpush1.msra.mxu0 0.0
    %2093 = vmatprep.subr.mxu0 0.0
    %2094 = vmatpush1.msra.mxu0 0.0
    %2095 = vmatprep.subr.mxu0 0.0
    %2096 = vmatpush1.msra.mxu0 0.0
    %2097 = vmatprep.subr.mxu0 0.0
    %2098 = vmatpush1.msra.mxu0 0.0
    %2099 = vmatprep.subr.mxu0 0.0
    %2100 = vmatpush1.msra.mxu0 0.0
    %2101 = vmatprep.subr.mxu0 0.0
    %2102 = vmatpush1.msra.mxu0 0.0
    %2103 = vmatprep.subr.mxu0 0.0
    %2104 = vmatpush1.msra.mxu0 0.0
    %2105 = vmatprep.subr.mxu0 0.0
    %2106 = vmatpush1.msra.mxu0 0.0
    %2107 = vmatprep.subr.mxu0 0.0
    %2108 = vmatpush1.msra.mxu0 0.0
    %2109 = vmatprep.subr.mxu0 0.0
    %2110 = vmatpush1.msra.mxu0 0.0
    %2111 = vmatprep.subr.mxu0 0.0
    %2112 = vmatpush1.msra.mxu0 0.0
    %2113 = vmatprep.subr.mxu0 0.0
    %2114 = vmatpush1.msra.mxu0 0.0
    %2115 = vmatprep.subr.mxu0 0.0
    %2116 = vmatpush1.msra.mxu0 0.0
    %2117 = vmatprep.subr.mxu0 0.0
    %2118 = vmatpush1.msra.mxu0 0.0
    %2119 = vmatprep.subr.mxu0 0.0
    %2120 = vmatpush1.msra.mxu0 0.0
    %2121 = vmatprep.subr.mxu0 0.0
    %2122 = vmatpush1.msra.mxu0 0.0
    %2123 = vmatprep.mubr.f32.mxu0 0.0
    %2124 = vmatmul.mubr.f32.gmra.mrb[0].mxu0 %v896
    %v2125 = vpop.f32.mrb[0].mxu0
    %v2126 = vadd.f32 0.0, %v2125
    %v2127 = vpop.f32.mrb[0].mxu0
    %2128 = vdwg.mxu0
    %v2129 = vmul.f32 %v2126, 0.0009765625
    %v2130 = vmul.f32 %v2058, %v2058
    %v2131 = vsub.f32 %v2129, %v2130
    %v2132 = vadd.f32 %v2131, 1e-05
    %v2133 = vrsqrt.pop %v2132
    %2135 = vset.pattern.permute.xlu0 0
    %2136 = vperm.xlu0 %2135, %v2058
    %v2137 = vpop.permute.xlu0 %2136
    %v2139 = vsub.f32 %v1978, %v2137
    %v2140 = vsub.f32 %v1979, %v2137
    %v2141 = vmul.f32 %v2133, %v197
    %2143 = vset.pattern.permute.xlu0 0
    %2144 = vperm.xlu0 %2143, %v2141
    %v2145 = vpop.permute.xlu0 %2144
    %v2147 = vmul.f32 %v2139, %v2145
    %v2148 = vmul.f32 %v2140, %v2145
    %v2149 = vadd.f32 %v2147, %v1960
    %v2150 = vadd.f32 %v2148, %v1960
    %v2151 = vxor.u32 %v2149, 2147483648
    %v2152 = vxor.u32 %v2150, 2147483648
    %v2153 = vmul.f32 %v2151, 1.442695
    %v2154 = vpow.pop %v2153
    %v2155 = vmul.f32 %v2152, 1.442695
    %v2156 = vpow.pop %v2155
    %v2157 = vadd.f32 %v2154, 1.0
    %v2158 = vadd.f32 %v2156, 1.0
    %v2159 = vrcp.pop %v2157
    %v2160 = vmul.f32 1.0, %v2159
    %v2161 = vrcp.pop %v2158
    %v2162 = vmul.f32 1.0, %v2161
    %s2163 = scalar_lea.vmem [#allocation26], 16
    %2164 = vst [vmem:[%s2163] sm:$0xff] %v2160
    %2165 = vst [vmem:[%s2163 + $0x8] sm:$0xff] %v2162
    // Predicated region
    $region98: #{tpu_custom_call.1} parent=1 // pred_check
      _
    $region99: #{tpu_custom_call.1} parent=1 // pred_check_branch
      %2167 = sbr.rel (0) target = $region101
    $region100: #{tpu_custom_call.1} parent=1 // pred_region
      %s2169 = ssub.s32 512, 512
      %2170 = vsyncadd [#allocation8], %s2169
      %s2171 = sshll.u32 [#allocation26], 4
      %s2172 = int_to_ptr.vmem [resolvable:$true] %s2171
      %2177 = dma.vmem_to_hbm [thread:$0]  %s2172, 512, %s12, [#allocation8], 256, 256, 16
    $region101: #{tpu_custom_call.1} parent=1 // pred_fallthru
      _
    // Predicated region
    $region102: #{tpu_custom_call.1} parent=1 // pred_check
      _
    $region103: #{tpu_custom_call.1} parent=1 // pred_check_branch
      %2179 = sbr.rel (0) target = $region105
    $region104: #{tpu_custom_call.1} parent=1 // pred_region
      %2180 = dma.done [#allocation8], 512
    $region105: #{tpu_custom_call.1} parent=1 // pred_fallthru
      _
    %2181 = vsyncpa [#allocation7], 1
    %2182 = vsyncpa [#allocation10], 1
    %2183 = vsyncpa [#allocation13], 1
    %2184 = vsyncpa [#allocation16], 1
    %2185 = vsyncpa [#allocation19], 1
    %2186 = vsyncpa [#allocation22], 1
    %2187 = vsyncpa [#allocation25], 1
    %2188 = vsyncpa [#allocation8], 1

</llo_original>
